<compile_context>
chip_gen: v7x
topology: tpu7x:2x2x1
jax: 0.10.0
libtpu: 0.0.40
codegen_flags: <defaults>
</compile_context>

<pallas_src>
import functools
import math

import jax
import jax.numpy as jnp
import numpy as np
from jax.experimental import pallas as pl
from jax.experimental.pallas import tpu as pltpu

LN_EPS = 1e-5  # GPT2 layer_norm_epsilon and nn.LayerNorm default


# ----------------------------- kernel helpers ------------------------------ #
def _layernorm(x, w, b):
    mu = jnp.mean(x, axis=-1, keepdims=True)
    var = jnp.mean(jnp.square(x - mu), axis=-1, keepdims=True)
    return (x - mu) * jax.lax.rsqrt(var + LN_EPS) * w + b


def _gelu_new(x):
    # HF "gelu_new": 0.5*x*(1+tanh(sqrt(2/pi)*(x+0.044715*x^3)))
    return 0.5 * x * (1.0 + jnp.tanh(math.sqrt(2.0 / math.pi) * (x + 0.044715 * x * x * x)))


# ------------------------------ Pallas kernel ------------------------------ #
def gpt_layer_kernel(emb_ref, bias_ref, small_ref, wqkv_ref, wo_ref, wfc_ref, wp_ref,
                     finals_ref, out_ref, h_ref, attn_ref,
                     *, heads, head_dim, model_dim, batch, seq):
    l = pl.program_id(0)
    D = model_dim
    B, S = batch, seq

    @pl.when(l == 0)
    def _init():
        h_ref[...] = emb_ref[...].astype(jnp.float32)

    h = h_ref[...]

    # Packed per-layer small params: ln1_w|ln1_b|ln2_w|ln2_b|bo|bp|b_attn|bfc
    ln1_w = small_ref[:, 0:D]
    ln1_b = small_ref[:, D:2 * D]
    ln2_w = small_ref[:, 2 * D:3 * D]
    ln2_b = small_ref[:, 3 * D:4 * D]
    bo = small_ref[:, 4 * D:5 * D]
    bp = small_ref[:, 5 * D:6 * D]
    b_attn = small_ref[:, 6 * D:9 * D]
    bfc = small_ref[:, 9 * D:13 * D]

    # ---- causal self-attention (fused QKV; bf16 MXU operands, f32 accumulate) ----
    x = _layernorm(h, ln1_w, ln1_b)
    qkv = jnp.dot(x.astype(jnp.bfloat16), wqkv_ref[...],
                  preferred_element_type=jnp.float32) + b_attn
    qkv = qkv.astype(jnp.bfloat16)                 # single cast for all heads
    bias = bias_ref[...]                           # (S, S) additive causal bias

    for b in range(B):                             # static unroll over batch
        r0 = b * S
        for hh in range(heads):                    # static unroll over heads
            o0 = hh * head_dim
            q = qkv[r0:r0 + S, o0:o0 + head_dim]               # scale pre-folded
            k = qkv[r0:r0 + S, D + o0:D + o0 + head_dim]
            v = qkv[r0:r0 + S, 2 * D + o0:2 * D + o0 + head_dim]
            s = jax.lax.dot_general(q, k, (((1,), (1,)), ((), ())),
                                    preferred_element_type=jnp.float32) + bias
            s = s - jnp.max(s, axis=-1, keepdims=True)
            p = jnp.exp(s)
            p = p * pl.reciprocal(jnp.sum(p, axis=-1, keepdims=True), approx=True)
            pv = jnp.dot(p.astype(jnp.bfloat16), v, preferred_element_type=jnp.float32)
            attn_ref[r0:r0 + S, o0:o0 + head_dim] = pv.astype(jnp.bfloat16)

    h = h + jnp.dot(attn_ref[...], wo_ref[...],
                    preferred_element_type=jnp.float32) + bo

    # ---- MLP (elementwise in f32, matmuls in bf16) ----
    x = _layernorm(h, ln2_w, ln2_b)
    f = jnp.dot(x.astype(jnp.bfloat16), wfc_ref[...],
                preferred_element_type=jnp.float32) + bfc
    f = _gelu_new(f)
    h = h + jnp.dot(f.astype(jnp.bfloat16), wp_ref[...],
                    preferred_element_type=jnp.float32) + bp

    h_ref[...] = h

    # GPT2 ln_f then UnifiedVoice.final_norm, written once on the last layer.
    @pl.when(l == pl.num_programs(0) - 1)
    def _final():
        hf = _layernorm(h, finals_ref[0:1], finals_ref[1:2])
        hf = _layernorm(hf, finals_ref[2:3], finals_ref[3:4])
        out_ref[...] = hf.astype(out_ref.dtype)


def run_gpt_pallas(emb, params, cfg):
    B, S0, D = emb.shape
    L, H = cfg["layers"], cfg["heads"]
    hd = D // H
    scale = 1.0 / math.sqrt(hd)

    # Pad sequence to a multiple of 16 (bf16 sublane pack).  The causal mask
    # guarantees zero-padded tail positions never affect valid rows.
    S = ((S0 + 15) // 16) * 16
    if S != S0:
        emb = jnp.pad(emb, ((0, 0), (0, S - S0), (0, 0)))
    emb2 = emb.reshape(B * S, D).astype(jnp.float32)

    # Fold 1/sqrt(head_dim) into the q columns of c_attn (power-of-two scale at
    # typical head dims -> bf16-exact), removing the per-head S^2 scale multiply.
    w_attn = params["w_attn"]
    b_attn = params["b_attn"]
    w_attn = jnp.concatenate(
        [w_attn[:, :, :D] * jnp.asarray(scale, w_attn.dtype), w_attn[:, :, D:]], axis=-1)
    b_attn = jnp.concatenate([b_attn[:, :, :D] * scale, b_attn[:, :, D:]], axis=-1)

    # Pack the eight small f32 per-layer params into one (L, 1, 13*D) array so
    # the kernel does one DMA per grid step instead of eight KB-scale ones.
    small = jnp.concatenate(
        [params["ln1_w"], params["ln1_b"], params["ln2_w"], params["ln2_b"],
         params["bo"], params["bp"], b_attn, params["bfc"]], axis=-1)

    # Additive causal bias computed once; constant index_map -> single DMA.
    row = jax.lax.broadcasted_iota(jnp.int32, (S, S), 0)
    col = jax.lax.broadcasted_iota(jnp.int32, (S, S), 1)
    bias = jnp.where(col <= row, 0.0, -1e30).astype(jnp.float32)

    kernel = functools.partial(gpt_layer_kernel, heads=H, head_dim=hd,
                               model_dim=D, batch=B, seq=S)

    in_specs = [
        pl.BlockSpec((B * S, D), lambda l: (0, 0)),            # flattened embeddings
        pl.BlockSpec((S, S), lambda l: (0, 0)),                # causal bias
        pl.BlockSpec((None, 1, 13 * D), lambda l: (l, 0, 0)),  # packed small params
        pl.BlockSpec((None, D, 3 * D), lambda l: (l, 0, 0)),   # c_attn weight
        pl.BlockSpec((None, D, D), lambda l: (l, 0, 0)),       # c_proj weight
        pl.BlockSpec((None, D, 4 * D), lambda l: (l, 0, 0)),   # mlp c_fc weight
        pl.BlockSpec((None, 4 * D, D), lambda l: (l, 0, 0)),   # mlp c_proj weight
        pl.BlockSpec((4, D), lambda l: (0, 0)),                # ln_f + final_norm
    ]
    out_spec = pl.BlockSpec((B * S, D), lambda l: (0, 0))

    # Generation-aware VMEM budget: one layer of bf16 weights (double-buffered),
    # the resident activation blocks, scratch, and the real in-kernel temporaries.
    w_bytes = (D * 3 * D + D * D + D * 4 * D + 4 * D * D) * 2   # bf16 per-layer weights
    small_bytes = 13 * D * 4
    act_block = B * S * D * 4                                   # emb block == out block
    bias_bytes = S * S * 4
    scratch_bytes = B * S * D * (4 + 2)                         # h (f32) + attn (bf16)
    tmp_bytes = (B * S * 3 * D * (4 + 2)                        # qkv f32 + bf16 copy
                 + B * S * 4 * D * 4                            # MLP intermediate (f32)
                 + B * S * D * 4 * 3                            # layernorm/residual temps
                 + 4 * S * S * 4)                               # per-head scores/probs
    vmem_need = (2 * (w_bytes + small_bytes) + 2 * 2 * act_block + bias_bytes
                 + scratch_bytes + tmp_bytes + (8 << 20))
    try:
        vmem_cap = int(getattr(pltpu.get_tpu_info(), "vmem_capacity_bytes", 64 << 20))
    except Exception:  # pragma: no cover - interpret / older runtimes
        vmem_cap = 64 << 20
    vmem_limit = int(min(max(vmem_need, 32 << 20), int(vmem_cap * 0.9)))

    out2 = pl.pallas_call(
        kernel,
        out_shape=jax.ShapeDtypeStruct((B * S, D), jnp.float32),
        grid=(L,),
        in_specs=in_specs,
        out_specs=out_spec,
        scratch_shapes=[pltpu.VMEM((B * S, D), jnp.float32),    # hidden state carry
                        pltpu.VMEM((B * S, D), jnp.bfloat16)],  # per-head attn assembly
        compiler_params=pltpu.CompilerParams(
            dimension_semantics=("arbitrary",),
            vmem_limit_bytes=vmem_limit),
    )(emb2, bias, small, w_attn, params["wo"], params["wfc"], params["wp"],
      params["finals"])
    return out2.reshape(B, S, D)[:, :S0]


# --------------------------- plain-JAX reference --------------------------- #
def ref_gpt(emb, params, cfg):
    L, H = cfg["layers"], cfg["heads"]
    B, S, D = emb.shape
    hd = D // H
    mask = jnp.tril(jnp.ones((S, S), bool))
    h = emb.astype(jnp.float32)
    for l in range(L):
        x = _layernorm(h, params["ln1_w"][l], params["ln1_b"][l])
        qkv = x @ params["w_attn"][l].astype(jnp.float32) + params["b_attn"][l]
        q, k, v = jnp.split(qkv, 3, axis=-1)
        q = q.reshape(B, S, H, hd)
        k = k.reshape(B, S, H, hd)
        v = v.reshape(B, S, H, hd)
        s = jnp.einsum("bqhe,bkhe->bhqk", q, k) / math.sqrt(hd)
        s = jnp.where(mask, s, -1e30)
        p = jax.nn.softmax(s, axis=-1)
        o = jnp.einsum("bhqk,bkhe->bqhe", p, v).reshape(B, S, D)
        h = h + o @ params["wo"][l].astype(jnp.float32) + params["bo"][l]
        x = _layernorm(h, params["ln2_w"][l], params["ln2_b"][l])
        f = _gelu_new(x @ params["wfc"][l].astype(jnp.float32) + params["bfc"][l])
        h = h + f @ params["wp"][l].astype(jnp.float32) + params["bp"][l]
    h = _layernorm(h, params["finals"][0], params["finals"][1])
    h = _layernorm(h, params["finals"][2], params["finals"][3])
    return h


# -------------------------- UnifiedVoice.forward --------------------------- #
def unified_voice_forward(params, speech_conditioning_latent, text_inputs, text_lengths,
                          mel_codes, wav_lengths, cfg, gpt_fn=run_gpt_pallas):
    # set_mel_padding: positions >= ceil(wav_len/compression)+1 -> stop_mel_token
    mel_lens = jnp.ceil(wav_lengths.astype(jnp.float32)
                        / cfg["mel_length_compression"]).astype(jnp.int32) + 1
    Tm = mel_codes.shape[1]
    mel_codes = jnp.where(jnp.arange(Tm)[None, :] >= mel_lens[:, None],
                          cfg["stop_mel_token"], mel_codes)
    # set_text_padding
    Tt = text_inputs.shape[1]
    text_inputs = jnp.where(jnp.arange(Tt)[None, :] >= text_lengths[:, None],
                            cfg["stop_text_token"], text_inputs)
    # F.pad(..., (0,1), stop)
    text_inputs = jnp.pad(text_inputs, ((0, 0), (0, 1)), constant_values=cfg["stop_text_token"])
    mel_codes = jnp.pad(mel_codes, ((0, 0), (0, 1)), constant_values=cfg["stop_mel_token"])
    # build_aligned_inputs_and_targets: prepend start token (targets unused in forward)
    text_inp = jnp.pad(text_inputs, ((0, 0), (1, 0)), constant_values=cfg["start_text_token"])
    mel_inp = jnp.pad(mel_codes, ((0, 0), (1, 0)), constant_values=cfg["start_mel_token"])

    text_emb = params["text_emb"][text_inp] + params["text_pos"][: text_inp.shape[1]][None]
    mel_emb = params["mel_emb"][mel_inp] + params["mel_pos"][: mel_inp.shape[1]][None]
    conds = speech_conditioning_latent.astype(jnp.float32)
    emb = jnp.concatenate([conds, text_emb, mel_emb], axis=1).astype(jnp.float32)

    hidden = gpt_fn(emb, params, cfg)            # GPT2 stack + ln_f + final_norm
    offset = conds.shape[1]
    enc = hidden[:, offset:]
    return enc[:, -mel_inp.shape[1]:][:, :-2]


# ----------------------------- parameter init ------------------------------ #
def init_params(key, cfg):
    D = cfg["model_dim"]; L = cfg["layers"]
    n_text = cfg["number_text_tokens"] * cfg["types"] + 1
    n_mel = cfg["number_mel_codes"]
    max_mel_seq = cfg["max_mel_tokens"] + 2 + cfg["max_conditioning_inputs"]
    max_text_seq = cfg["max_text_tokens"] + 2
    ks = jax.random.split(key, 20)
    std = 0.02
    p = {}
    p["text_emb"] = std * jax.random.normal(ks[0], (n_text, D), jnp.float32)
    p["mel_emb"] = std * jax.random.normal(ks[1], (n_mel, D), jnp.float32)
    p["text_pos"] = std * jax.random.normal(ks[2], (max_text_seq, D), jnp.float32)
    p["mel_pos"] = std * jax.random.normal(ks[3], (max_mel_seq, D), jnp.float32)

    # LayerNorm params / biases: f32 (VPU path), stored (L, 1, dim).
    p["ln1_w"] = 1.0 + 0.1 * jax.random.normal(ks[4], (L, 1, D), jnp.float32)
    p["ln1_b"] = 0.1 * jax.random.normal(ks[5], (L, 1, D), jnp.float32)
    p["ln2_w"] = 1.0 + 0.1 * jax.random.normal(ks[6], (L, 1, D), jnp.float32)
    p["ln2_b"] = 0.1 * jax.random.normal(ks[7], (L, 1, D), jnp.float32)

    # Matmul weights stored bf16 (MXU operands, halves HBM/VMEM traffic).
    # GPT2 c_attn: (D, 3D) in [q|k|v] order.
    p["w_attn"] = (std * jax.random.normal(ks[8], (L, D, 3 * D), jnp.float32)).astype(jnp.bfloat16)
    p["b_attn"] = std * jax.random.normal(ks[9], (L, 1, 3 * D), jnp.float32)
    p["wo"] = (std * jax.random.normal(ks[10], (L, D, D), jnp.float32)).astype(jnp.bfloat16)
    p["bo"] = std * jax.random.normal(ks[11], (L, 1, D), jnp.float32)
    p["wfc"] = (std * jax.random.normal(ks[12], (L, D, 4 * D), jnp.float32)).astype(jnp.bfloat16)
    p["bfc"] = std * jax.random.normal(ks[13], (L, 1, 4 * D), jnp.float32)
    p["wp"] = (std * jax.random.normal(ks[14], (L, 4 * D, D), jnp.float32)).astype(jnp.bfloat16)
    p["bp"] = std * jax.random.normal(ks[15], (L, 1, D), jnp.float32)
    # [ln_f.w, ln_f.b, final_norm.w, final_norm.b]
    p["finals"] = jnp.stack([
        1.0 + 0.1 * jax.random.normal(ks[16], (D,), jnp.float32),
        0.1 * jax.random.normal(ks[17], (D,), jnp.float32),
        1.0 + 0.1 * jax.random.normal(ks[18], (D,), jnp.float32),
        0.1 * jax.random.normal(ks[19], (D,), jnp.float32),
    ])
    return p


# ---------------------------------- main ----------------------------------- #
if __name__ == "__main__":
    # Small, forward-consistent config (real model: layers=8, model_dim=512, ...)
    CFG = dict(
        layers=2, model_dim=64, heads=4,
        max_text_tokens=6, max_mel_tokens=10, max_conditioning_inputs=1,
        mel_length_compression=1024,
        number_text_tokens=48, start_text_token=0, stop_text_token=1,
        number_mel_codes=98, start_mel_token=96, stop_mel_token=97,
        types=1, condition_num_latent=4,
    )
    # TODO(synk): ConformerEncoder / PerceiverResampler / vLLM engine are only used by
    # get_conditioning()/inference_speech(), not by forward(); not implemented here.

    key = jax.random.PRNGKey(0)
    kp, kc, kt, km = jax.random.split(key, 4)
    params = init_params(kp, CFG)

    B = 2
    speech_conditioning_latent = 0.02 * jax.random.normal(
        kc, (B, CFG["condition_num_latent"], CFG["model_dim"]), jnp.float32)
    text_inputs = jax.random.randint(kt, (B, 6), 0, CFG["number_text_tokens"], jnp.int32)
    text_lengths = jnp.array([4, 6], jnp.int32)
    mel_codes = jax.random.randint(km, (B, 10), 0, CFG["start_mel_token"], jnp.int32)
    wav_lengths = jnp.array([5000, 9000], jnp.int32)

    out = unified_voice_forward(params, speech_conditioning_latent, text_inputs,
                                text_lengths, mel_codes, wav_lengths, CFG,
                                gpt_fn=run_gpt_pallas)
    out = jax.block_until_ready(out)

    # Pure-JAX reference check (same preprocessing, reference transformer math, f32)
    ref = unified_voice_forward(params, speech_conditioning_latent, text_inputs,
                                text_lengths, mel_codes, wav_lengths, CFG,
                                gpt_fn=ref_gpt)
    ref = jax.block_until_ready(ref)

    assert out.shape == (B, mel_codes.shape[1] + 2 - 2, CFG["model_dim"]), out.shape
    assert bool(jnp.all(jnp.isfinite(out)))
    np.testing.assert_allclose(np.asarray(out), np.asarray(ref), rtol=5e-2, atol=5e-2)
    print("KERNEL_OK")
</pallas_src>

<mosaic_0001>
module attributes {stable_mosaic.version = 11 : i64} {
  func.func @gpt_layer_kernel(%arg0: i32, %arg1: memref<64x64xf32, #tpu.memory_space<vmem>>, %arg2: memref<32x32xf32, #tpu.memory_space<vmem>>, %arg3: memref<1x1x832xf32, #tpu.memory_space<vmem>>, %arg4: memref<1x64x192xbf16, #tpu.memory_space<vmem>>, %arg5: memref<1x64x64xbf16, #tpu.memory_space<vmem>>, %arg6: memref<1x64x256xbf16, #tpu.memory_space<vmem>>, %arg7: memref<1x256x64xbf16, #tpu.memory_space<vmem>>, %arg8: memref<4x64xf32, #tpu.memory_space<vmem>>, %arg9: memref<64x64xf32, #tpu.memory_space<vmem>>, %arg10: memref<64x64xf32, #tpu.memory_space<vmem>>, %arg11: memref<64x64xbf16, #tpu.memory_space<vmem>>) attributes {dimension_semantics = [#tpu.dimension_semantics<arbitrary>], iteration_bounds = array<i64: 2>, scalar_prefetch = 0 : i64, scratch_operands = 2 : i64, tpu.core_type = #tpu.core_type<tc>, window_params = [{pipeline_mode = #tpu.pipeline_mode<synchronous>, transform_indices = @transform_0, window_bounds = array<i64: 64, 64>}, {pipeline_mode = #tpu.pipeline_mode<synchronous>, transform_indices = @transform_1, window_bounds = array<i64: 32, 32>}, {transform_indices = @transform_2, window_bounds = array<i64: 1, 1, 832>}, {transform_indices = @transform_3, window_bounds = array<i64: 1, 64, 192>}, {transform_indices = @transform_4, window_bounds = array<i64: 1, 64, 64>}, {transform_indices = @transform_5, window_bounds = array<i64: 1, 64, 256>}, {transform_indices = @transform_6, window_bounds = array<i64: 1, 256, 64>}, {pipeline_mode = #tpu.pipeline_mode<synchronous>, transform_indices = @transform_7, window_bounds = array<i64: 4, 64>}, {pipeline_mode = #tpu.pipeline_mode<synchronous>, transform_indices = @transform_8, window_bounds = array<i64: 64, 64>}]} {
    %c0_i32 = arith.constant 0 : i32
    %0 = arith.cmpi eq, %arg0, %c0_i32 : i32
    %1 = arith.extui %0 : i1 to i32
    %c0_i32_0 = arith.constant 0 : i32
    %2 = arith.cmpi ne, %1, %c0_i32_0 : i32
    scf.if %2 {
      %c0_100 = arith.constant 0 : index
      %c0_101 = arith.constant 0 : index
      %261 = vector.load %arg1[%c0_100, %c0_101] : memref<64x64xf32, #tpu.memory_space<vmem>>, vector<64x64xf32>
      %c0_102 = arith.constant 0 : index
      %c0_103 = arith.constant 0 : index
      %262 = vector.load %arg10[%c0_102, %c0_103] : memref<64x64xf32, #tpu.memory_space<vmem>>, vector<64x64xf32>
      tpu.vector_store %arg10[%c0_102, %c0_103], %261 {strides = array<i32>} : memref<64x64xf32, #tpu.memory_space<vmem>>, vector<64x64xf32>,
    } else {
    }
    %c0 = arith.constant 0 : index
    %c0_1 = arith.constant 0 : index
    %3 = vector.load %arg10[%c0, %c0_1] : memref<64x64xf32, #tpu.memory_space<vmem>>, vector<64x64xf32>
    %c0_2 = arith.constant 0 : index
    %c0_3 = arith.constant 0 : index
    %c0_4 = arith.constant 0 : index
    %4 = vector.load %arg3[%c0_2, %c0_3, %c0_4] : memref<1x1x832xf32, #tpu.memory_space<vmem>>, vector<1x1x64xf32>
    %5 = vector.shape_cast %4 : vector<1x1x64xf32> to vector<1x64xf32>
    %c0_5 = arith.constant 0 : index
    %c0_6 = arith.constant 0 : index
    %c64 = arith.constant 64 : index
    %6 = vector.load %arg3[%c0_5, %c0_6, %c64] : memref<1x1x832xf32, #tpu.memory_space<vmem>>, vector<1x1x64xf32>
    %7 = vector.shape_cast %6 : vector<1x1x64xf32> to vector<1x64xf32>
    %c0_7 = arith.constant 0 : index
    %c0_8 = arith.constant 0 : index
    %c128 = arith.constant 128 : index
    %8 = vector.load %arg3[%c0_7, %c0_8, %c128] : memref<1x1x832xf32, #tpu.memory_space<vmem>>, vector<1x1x64xf32>
    %9 = vector.shape_cast %8 : vector<1x1x64xf32> to vector<1x64xf32>
    %c0_9 = arith.constant 0 : index
    %c0_10 = arith.constant 0 : index
    %c192 = arith.constant 192 : index
    %10 = vector.load %arg3[%c0_9, %c0_10, %c192] : memref<1x1x832xf32, #tpu.memory_space<vmem>>, vector<1x1x64xf32>
    %11 = vector.shape_cast %10 : vector<1x1x64xf32> to vector<1x64xf32>
    %c0_11 = arith.constant 0 : index
    %c0_12 = arith.constant 0 : index
    %c256 = arith.constant 256 : index
    %12 = vector.load %arg3[%c0_11, %c0_12, %c256] : memref<1x1x832xf32, #tpu.memory_space<vmem>>, vector<1x1x64xf32>
    %13 = vector.shape_cast %12 : vector<1x1x64xf32> to vector<1x64xf32>
    %c0_13 = arith.constant 0 : index
    %c0_14 = arith.constant 0 : index
    %c320 = arith.constant 320 : index
    %14 = vector.load %arg3[%c0_13, %c0_14, %c320] : memref<1x1x832xf32, #tpu.memory_space<vmem>>, vector<1x1x64xf32>
    %15 = vector.shape_cast %14 : vector<1x1x64xf32> to vector<1x64xf32>
    %c0_15 = arith.constant 0 : index
    %c0_16 = arith.constant 0 : index
    %c384 = arith.constant 384 : index
    %16 = vector.load %arg3[%c0_15, %c0_16, %c384] : memref<1x1x832xf32, #tpu.memory_space<vmem>>, vector<1x1x192xf32>
    %17 = vector.shape_cast %16 : vector<1x1x192xf32> to vector<1x192xf32>
    %c0_17 = arith.constant 0 : index
    %c0_18 = arith.constant 0 : index
    %c576 = arith.constant 576 : index
    %18 = vector.load %arg3[%c0_17, %c0_18, %c576] : memref<1x1x832xf32, #tpu.memory_space<vmem>>, vector<1x1x256xf32>
    %19 = vector.shape_cast %18 : vector<1x1x256xf32> to vector<1x256xf32>
    %cst = arith.constant dense<0.000000e+00> : vector<64xf32>
    %20 = vector.multi_reduction <add>, %3, %cst [1] : vector<64x64xf32> to vector<64xf32>
    %21 = vector.shape_cast %20 : vector<64xf32> to vector<64x1xf32>
    %cst_19 = arith.constant 6.400000e+01 : f32
    %22 = vector.broadcast %cst_19 : f32 to vector<64x1xf32>
    %23 = arith.divf %21, %22 : vector<64x1xf32>
    %24 = vector.broadcast %23 : vector<64x1xf32> to vector<64x64xf32>
    %25 = arith.subf %3, %24 : vector<64x64xf32>
    %26 = arith.mulf %25, %25 : vector<64x64xf32>
    %cst_20 = arith.constant dense<0.000000e+00> : vector<64xf32>
    %27 = vector.multi_reduction <add>, %26, %cst_20 [1] : vector<64x64xf32> to vector<64xf32>
    %28 = vector.shape_cast %27 : vector<64xf32> to vector<64x1xf32>
    %cst_21 = arith.constant 6.400000e+01 : f32
    %29 = vector.broadcast %cst_21 : f32 to vector<64x1xf32>
    %30 = arith.divf %28, %29 : vector<64x1xf32>
    %31 = vector.broadcast %23 : vector<64x1xf32> to vector<64x64xf32>
    %32 = arith.subf %3, %31 : vector<64x64xf32>
    %cst_22 = arith.constant 9.99999974E-6 : f32
    %33 = vector.broadcast %cst_22 : f32 to vector<64x1xf32>
    %34 = arith.addf %30, %33 : vector<64x1xf32>
    %35 = math.rsqrt %34 : vector<64x1xf32>
    %36 = vector.broadcast %35 : vector<64x1xf32> to vector<64x64xf32>
    %37 = arith.mulf %32, %36 : vector<64x64xf32>
    %38 = vector.broadcast %5 : vector<1x64xf32> to vector<64x64xf32>
    %39 = arith.mulf %37, %38 : vector<64x64xf32>
    %40 = vector.broadcast %7 : vector<1x64xf32> to vector<64x64xf32>
    %41 = arith.addf %39, %40 : vector<64x64xf32>
    %42 = arith.truncf %41 : vector<64x64xf32> to vector<64x64xbf16>
    %c0_23 = arith.constant 0 : index
    %c0_24 = arith.constant 0 : index
    %c0_25 = arith.constant 0 : index
    %43 = vector.load %arg4[%c0_23, %c0_24, %c0_25] : memref<1x64x192xbf16, #tpu.memory_space<vmem>>, vector<1x64x192xbf16>
    %44 = vector.shape_cast %43 : vector<1x64x192xbf16> to vector<64x192xbf16>
    %cst_26 = arith.constant dense<0.000000e+00> : vector<64x192xf32>
    %45 = tpu.matmul %42, %44, %cst_26 {dimension_numbers = #tpu.dot_dimension_numbers<[1], [0], [0], [1], [0, 0, 1, 1], [], []>} : vector<64x64xbf16>, vector<64x192xbf16>, vector<64x192xf32> -> vector<64x192xf32>
    %46 = vector.broadcast %17 : vector<1x192xf32> to vector<64x192xf32>
    %47 = arith.addf %45, %46 : vector<64x192xf32>
    %48 = arith.truncf %47 : vector<64x192xf32> to vector<64x192xbf16>
    %c0_27 = arith.constant 0 : index
    %c0_28 = arith.constant 0 : index
    %49 = vector.load %arg2[%c0_27, %c0_28] : memref<32x32xf32, #tpu.memory_space<vmem>>, vector<32x32xf32>
    %50 = vector.extract_strided_slice %48 {offsets = [0, 0], sizes = [32, 16], strides = [1, 1]} : vector<64x192xbf16> to vector<32x16xbf16>
    %51 = vector.extract_strided_slice %48 {offsets = [0, 64], sizes = [32, 16], strides = [1, 1]} : vector<64x192xbf16> to vector<32x16xbf16>
    %52 = vector.extract_strided_slice %48 {offsets = [0, 128], sizes = [32, 16], strides = [1, 1]} : vector<64x192xbf16> to vector<32x16xbf16>
    %cst_29 = arith.constant dense<0.000000e+00> : vector<32x32xf32>
    %53 = tpu.matmul %50, %51, %cst_29 {dimension_numbers = #tpu.dot_dimension_numbers<[1], [1], [0], [0], [0, 0, 1, 0], [], []>} : vector<32x16xbf16>, vector<32x16xbf16>, vector<32x32xf32> -> vector<32x32xf32>
    %54 = arith.addf %53, %49 : vector<32x32xf32>
    %cst_30 = arith.constant dense<0xFF800000> : vector<32xf32>
    %55 = vector.multi_reduction <maximumf>, %54, %cst_30 [1] : vector<32x32xf32> to vector<32xf32>
    %56 = vector.shape_cast %55 : vector<32xf32> to vector<32x1xf32>
    %57 = vector.broadcast %56 : vector<32x1xf32> to vector<32x32xf32>
    %58 = arith.subf %54, %57 : vector<32x32xf32>
    %59 = math.exp %58 : vector<32x32xf32>
    %cst_31 = arith.constant dense<0.000000e+00> : vector<32xf32>
    %60 = vector.multi_reduction <add>, %59, %cst_31 [1] : vector<32x32xf32> to vector<32xf32>
    %61 = vector.shape_cast %60 : vector<32xf32> to vector<32x1xf32>
    %62 = tpu.reciprocal %61 {approx = true} : vector<32x1xf32> -> vector<32x1xf32>
    %63 = vector.broadcast %62 : vector<32x1xf32> to vector<32x32xf32>
    %64 = arith.mulf %59, %63 : vector<32x32xf32>
    %65 = arith.truncf %64 : vector<32x32xf32> to vector<32x32xbf16>
    %cst_32 = arith.constant dense<0.000000e+00> : vector<32x16xf32>
    %66 = tpu.matmul %65, %52, %cst_32 {dimension_numbers = #tpu.dot_dimension_numbers<[1], [0], [0], [1], [0, 0, 1, 1], [], []>} : vector<32x32xbf16>, vector<32x16xbf16>, vector<32x16xf32> -> vector<32x16xf32>
    %67 = arith.truncf %66 : vector<32x16xf32> to vector<32x16xbf16>
    %c0_33 = arith.constant 0 : index
    %c0_34 = arith.constant 0 : index
    %68 = vector.load %arg11[%c0_33, %c0_34] : memref<64x64xbf16, #tpu.memory_space<vmem>>, vector<32x16xbf16>
    tpu.vector_store %arg11[%c0_33, %c0_34], %67 {strides = array<i32>} : memref<64x64xbf16, #tpu.memory_space<vmem>>, vector<32x16xbf16>,
    %69 = vector.extract_strided_slice %48 {offsets = [0, 16], sizes = [32, 16], strides = [1, 1]} : vector<64x192xbf16> to vector<32x16xbf16>
    %70 = vector.extract_strided_slice %48 {offsets = [0, 80], sizes = [32, 16], strides = [1, 1]} : vector<64x192xbf16> to vector<32x16xbf16>
    %71 = vector.extract_strided_slice %48 {offsets = [0, 144], sizes = [32, 16], strides = [1, 1]} : vector<64x192xbf16> to vector<32x16xbf16>
    %cst_35 = arith.constant dense<0.000000e+00> : vector<32x32xf32>
    %72 = tpu.matmul %69, %70, %cst_35 {dimension_numbers = #tpu.dot_dimension_numbers<[1], [1], [0], [0], [0, 0, 1, 0], [], []>} : vector<32x16xbf16>, vector<32x16xbf16>, vector<32x32xf32> -> vector<32x32xf32>
    %73 = arith.addf %72, %49 : vector<32x32xf32>
    %cst_36 = arith.constant dense<0xFF800000> : vector<32xf32>
    %74 = vector.multi_reduction <maximumf>, %73, %cst_36 [1] : vector<32x32xf32> to vector<32xf32>
    %75 = vector.shape_cast %74 : vector<32xf32> to vector<32x1xf32>
    %76 = vector.broadcast %75 : vector<32x1xf32> to vector<32x32xf32>
    %77 = arith.subf %73, %76 : vector<32x32xf32>
    %78 = math.exp %77 : vector<32x32xf32>
    %cst_37 = arith.constant dense<0.000000e+00> : vector<32xf32>
    %79 = vector.multi_reduction <add>, %78, %cst_37 [1] : vector<32x32xf32> to vector<32xf32>
    %80 = vector.shape_cast %79 : vector<32xf32> to vector<32x1xf32>
    %81 = tpu.reciprocal %80 {approx = true} : vector<32x1xf32> -> vector<32x1xf32>
    %82 = vector.broadcast %81 : vector<32x1xf32> to vector<32x32xf32>
    %83 = arith.mulf %78, %82 : vector<32x32xf32>
    %84 = arith.truncf %83 : vector<32x32xf32> to vector<32x32xbf16>
    %cst_38 = arith.constant dense<0.000000e+00> : vector<32x16xf32>
    %85 = tpu.matmul %84, %71, %cst_38 {dimension_numbers = #tpu.dot_dimension_numbers<[1], [0], [0], [1], [0, 0, 1, 1], [], []>} : vector<32x32xbf16>, vector<32x16xbf16>, vector<32x16xf32> -> vector<32x16xf32>
    %86 = arith.truncf %85 : vector<32x16xf32> to vector<32x16xbf16>
    %c0_39 = arith.constant 0 : index
    %c16 = arith.constant 16 : index
    %87 = vector.load %arg11[%c0_39, %c16] : memref<64x64xbf16, #tpu.memory_space<vmem>>, vector<32x16xbf16>
    tpu.vector_store %arg11[%c0_39, %c16], %86 {strides = array<i32>} : memref<64x64xbf16, #tpu.memory_space<vmem>>, vector<32x16xbf16>,
    %88 = vector.extract_strided_slice %48 {offsets = [0, 32], sizes = [32, 16], strides = [1, 1]} : vector<64x192xbf16> to vector<32x16xbf16>
    %89 = vector.extract_strided_slice %48 {offsets = [0, 96], sizes = [32, 16], strides = [1, 1]} : vector<64x192xbf16> to vector<32x16xbf16>
    %90 = vector.extract_strided_slice %48 {offsets = [0, 160], sizes = [32, 16], strides = [1, 1]} : vector<64x192xbf16> to vector<32x16xbf16>
    %cst_40 = arith.constant dense<0.000000e+00> : vector<32x32xf32>
    %91 = tpu.matmul %88, %89, %cst_40 {dimension_numbers = #tpu.dot_dimension_numbers<[1], [1], [0], [0], [0, 0, 1, 0], [], []>} : vector<32x16xbf16>, vector<32x16xbf16>, vector<32x32xf32> -> vector<32x32xf32>
    %92 = arith.addf %91, %49 : vector<32x32xf32>
    %cst_41 = arith.constant dense<0xFF800000> : vector<32xf32>
    %93 = vector.multi_reduction <maximumf>, %92, %cst_41 [1] : vector<32x32xf32> to vector<32xf32>
    %94 = vector.shape_cast %93 : vector<32xf32> to vector<32x1xf32>
    %95 = vector.broadcast %94 : vector<32x1xf32> to vector<32x32xf32>
    %96 = arith.subf %92, %95 : vector<32x32xf32>
    %97 = math.exp %96 : vector<32x32xf32>
    %cst_42 = arith.constant dense<0.000000e+00> : vector<32xf32>
    %98 = vector.multi_reduction <add>, %97, %cst_42 [1] : vector<32x32xf32> to vector<32xf32>
    %99 = vector.shape_cast %98 : vector<32xf32> to vector<32x1xf32>
    %100 = tpu.reciprocal %99 {approx = true} : vector<32x1xf32> -> vector<32x1xf32>
    %101 = vector.broadcast %100 : vector<32x1xf32> to vector<32x32xf32>
    %102 = arith.mulf %97, %101 : vector<32x32xf32>
    %103 = arith.truncf %102 : vector<32x32xf32> to vector<32x32xbf16>
    %cst_43 = arith.constant dense<0.000000e+00> : vector<32x16xf32>
    %104 = tpu.matmul %103, %90, %cst_43 {dimension_numbers = #tpu.dot_dimension_numbers<[1], [0], [0], [1], [0, 0, 1, 1], [], []>} : vector<32x32xbf16>, vector<32x16xbf16>, vector<32x16xf32> -> vector<32x16xf32>
    %105 = arith.truncf %104 : vector<32x16xf32> to vector<32x16xbf16>
    %c0_44 = arith.constant 0 : index
    %c32 = arith.constant 32 : index
    %106 = vector.load %arg11[%c0_44, %c32] : memref<64x64xbf16, #tpu.memory_space<vmem>>, vector<32x16xbf16>
    tpu.vector_store %arg11[%c0_44, %c32], %105 {strides = array<i32>} : memref<64x64xbf16, #tpu.memory_space<vmem>>, vector<32x16xbf16>,
    %107 = vector.extract_strided_slice %48 {offsets = [0, 48], sizes = [32, 16], strides = [1, 1]} : vector<64x192xbf16> to vector<32x16xbf16>
    %108 = vector.extract_strided_slice %48 {offsets = [0, 112], sizes = [32, 16], strides = [1, 1]} : vector<64x192xbf16> to vector<32x16xbf16>
    %109 = vector.extract_strided_slice %48 {offsets = [0, 176], sizes = [32, 16], strides = [1, 1]} : vector<64x192xbf16> to vector<32x16xbf16>
    %cst_45 = arith.constant dense<0.000000e+00> : vector<32x32xf32>
    %110 = tpu.matmul %107, %108, %cst_45 {dimension_numbers = #tpu.dot_dimension_numbers<[1], [1], [0], [0], [0, 0, 1, 0], [], []>} : vector<32x16xbf16>, vector<32x16xbf16>, vector<32x32xf32> -> vector<32x32xf32>
    %111 = arith.addf %110, %49 : vector<32x32xf32>
    %cst_46 = arith.constant dense<0xFF800000> : vector<32xf32>
    %112 = vector.multi_reduction <maximumf>, %111, %cst_46 [1] : vector<32x32xf32> to vector<32xf32>
    %113 = vector.shape_cast %112 : vector<32xf32> to vector<32x1xf32>
    %114 = vector.broadcast %113 : vector<32x1xf32> to vector<32x32xf32>
    %115 = arith.subf %111, %114 : vector<32x32xf32>
    %116 = math.exp %115 : vector<32x32xf32>
    %cst_47 = arith.constant dense<0.000000e+00> : vector<32xf32>
    %117 = vector.multi_reduction <add>, %116, %cst_47 [1] : vector<32x32xf32> to vector<32xf32>
    %118 = vector.shape_cast %117 : vector<32xf32> to vector<32x1xf32>
    %119 = tpu.reciprocal %118 {approx = true} : vector<32x1xf32> -> vector<32x1xf32>
    %120 = vector.broadcast %119 : vector<32x1xf32> to vector<32x32xf32>
    %121 = arith.mulf %116, %120 : vector<32x32xf32>
    %122 = arith.truncf %121 : vector<32x32xf32> to vector<32x32xbf16>
    %cst_48 = arith.constant dense<0.000000e+00> : vector<32x16xf32>
    %123 = tpu.matmul %122, %109, %cst_48 {dimension_numbers = #tpu.dot_dimension_numbers<[1], [0], [0], [1], [0, 0, 1, 1], [], []>} : vector<32x32xbf16>, vector<32x16xbf16>, vector<32x16xf32> -> vector<32x16xf32>
    %124 = arith.truncf %123 : vector<32x16xf32> to vector<32x16xbf16>
    %c0_49 = arith.constant 0 : index
    %c48 = arith.constant 48 : index
    %125 = vector.load %arg11[%c0_49, %c48] : memref<64x64xbf16, #tpu.memory_space<vmem>>, vector<32x16xbf16>
    tpu.vector_store %arg11[%c0_49, %c48], %124 {strides = array<i32>} : memref<64x64xbf16, #tpu.memory_space<vmem>>, vector<32x16xbf16>,
    %126 = vector.extract_strided_slice %48 {offsets = [32, 0], sizes = [32, 16], strides = [1, 1]} : vector<64x192xbf16> to vector<32x16xbf16>
    %127 = vector.extract_strided_slice %48 {offsets = [32, 64], sizes = [32, 16], strides = [1, 1]} : vector<64x192xbf16> to vector<32x16xbf16>
    %128 = vector.extract_strided_slice %48 {offsets = [32, 128], sizes = [32, 16], strides = [1, 1]} : vector<64x192xbf16> to vector<32x16xbf16>
    %cst_50 = arith.constant dense<0.000000e+00> : vector<32x32xf32>
    %129 = tpu.matmul %126, %127, %cst_50 {dimension_numbers = #tpu.dot_dimension_numbers<[1], [1], [0], [0], [0, 0, 1, 0], [], []>} : vector<32x16xbf16>, vector<32x16xbf16>, vector<32x32xf32> -> vector<32x32xf32>
    %130 = arith.addf %129, %49 : vector<32x32xf32>
    %cst_51 = arith.constant dense<0xFF800000> : vector<32xf32>
    %131 = vector.multi_reduction <maximumf>, %130, %cst_51 [1] : vector<32x32xf32> to vector<32xf32>
    %132 = vector.shape_cast %131 : vector<32xf32> to vector<32x1xf32>
    %133 = vector.broadcast %132 : vector<32x1xf32> to vector<32x32xf32>
    %134 = arith.subf %130, %133 : vector<32x32xf32>
    %135 = math.exp %134 : vector<32x32xf32>
    %cst_52 = arith.constant dense<0.000000e+00> : vector<32xf32>
    %136 = vector.multi_reduction <add>, %135, %cst_52 [1] : vector<32x32xf32> to vector<32xf32>
    %137 = vector.shape_cast %136 : vector<32xf32> to vector<32x1xf32>
    %138 = tpu.reciprocal %137 {approx = true} : vector<32x1xf32> -> vector<32x1xf32>
    %139 = vector.broadcast %138 : vector<32x1xf32> to vector<32x32xf32>
    %140 = arith.mulf %135, %139 : vector<32x32xf32>
    %141 = arith.truncf %140 : vector<32x32xf32> to vector<32x32xbf16>
    %cst_53 = arith.constant dense<0.000000e+00> : vector<32x16xf32>
    %142 = tpu.matmul %141, %128, %cst_53 {dimension_numbers = #tpu.dot_dimension_numbers<[1], [0], [0], [1], [0, 0, 1, 1], [], []>} : vector<32x32xbf16>, vector<32x16xbf16>, vector<32x16xf32> -> vector<32x16xf32>
    %143 = arith.truncf %142 : vector<32x16xf32> to vector<32x16xbf16>
    %c32_54 = arith.constant 32 : index
    %c0_55 = arith.constant 0 : index
    %144 = vector.load %arg11[%c32_54, %c0_55] : memref<64x64xbf16, #tpu.memory_space<vmem>>, vector<32x16xbf16>
    tpu.vector_store %arg11[%c32_54, %c0_55], %143 {strides = array<i32>} : memref<64x64xbf16, #tpu.memory_space<vmem>>, vector<32x16xbf16>,
    %145 = vector.extract_strided_slice %48 {offsets = [32, 16], sizes = [32, 16], strides = [1, 1]} : vector<64x192xbf16> to vector<32x16xbf16>
    %146 = vector.extract_strided_slice %48 {offsets = [32, 80], sizes = [32, 16], strides = [1, 1]} : vector<64x192xbf16> to vector<32x16xbf16>
    %147 = vector.extract_strided_slice %48 {offsets = [32, 144], sizes = [32, 16], strides = [1, 1]} : vector<64x192xbf16> to vector<32x16xbf16>
    %cst_56 = arith.constant dense<0.000000e+00> : vector<32x32xf32>
    %148 = tpu.matmul %145, %146, %cst_56 {dimension_numbers = #tpu.dot_dimension_numbers<[1], [1], [0], [0], [0, 0, 1, 0], [], []>} : vector<32x16xbf16>, vector<32x16xbf16>, vector<32x32xf32> -> vector<32x32xf32>
    %149 = arith.addf %148, %49 : vector<32x32xf32>
    %cst_57 = arith.constant dense<0xFF800000> : vector<32xf32>
    %150 = vector.multi_reduction <maximumf>, %149, %cst_57 [1] : vector<32x32xf32> to vector<32xf32>
    %151 = vector.shape_cast %150 : vector<32xf32> to vector<32x1xf32>
    %152 = vector.broadcast %151 : vector<32x1xf32> to vector<32x32xf32>
    %153 = arith.subf %149, %152 : vector<32x32xf32>
    %154 = math.exp %153 : vector<32x32xf32>
    %cst_58 = arith.constant dense<0.000000e+00> : vector<32xf32>
    %155 = vector.multi_reduction <add>, %154, %cst_58 [1] : vector<32x32xf32> to vector<32xf32>
    %156 = vector.shape_cast %155 : vector<32xf32> to vector<32x1xf32>
    %157 = tpu.reciprocal %156 {approx = true} : vector<32x1xf32> -> vector<32x1xf32>
    %158 = vector.broadcast %157 : vector<32x1xf32> to vector<32x32xf32>
    %159 = arith.mulf %154, %158 : vector<32x32xf32>
    %160 = arith.truncf %159 : vector<32x32xf32> to vector<32x32xbf16>
    %cst_59 = arith.constant dense<0.000000e+00> : vector<32x16xf32>
    %161 = tpu.matmul %160, %147, %cst_59 {dimension_numbers = #tpu.dot_dimension_numbers<[1], [0], [0], [1], [0, 0, 1, 1], [], []>} : vector<32x32xbf16>, vector<32x16xbf16>, vector<32x16xf32> -> vector<32x16xf32>
    %162 = arith.truncf %161 : vector<32x16xf32> to vector<32x16xbf16>
    %c32_60 = arith.constant 32 : index
    %c16_61 = arith.constant 16 : index
    %163 = vector.load %arg11[%c32_60, %c16_61] : memref<64x64xbf16, #tpu.memory_space<vmem>>, vector<32x16xbf16>
    tpu.vector_store %arg11[%c32_60, %c16_61], %162 {strides = array<i32>} : memref<64x64xbf16, #tpu.memory_space<vmem>>, vector<32x16xbf16>,
    %164 = vector.extract_strided_slice %48 {offsets = [32, 32], sizes = [32, 16], strides = [1, 1]} : vector<64x192xbf16> to vector<32x16xbf16>
    %165 = vector.extract_strided_slice %48 {offsets = [32, 96], sizes = [32, 16], strides = [1, 1]} : vector<64x192xbf16> to vector<32x16xbf16>
    %166 = vector.extract_strided_slice %48 {offsets = [32, 160], sizes = [32, 16], strides = [1, 1]} : vector<64x192xbf16> to vector<32x16xbf16>
    %cst_62 = arith.constant dense<0.000000e+00> : vector<32x32xf32>
    %167 = tpu.matmul %164, %165, %cst_62 {dimension_numbers = #tpu.dot_dimension_numbers<[1], [1], [0], [0], [0, 0, 1, 0], [], []>} : vector<32x16xbf16>, vector<32x16xbf16>, vector<32x32xf32> -> vector<32x32xf32>
    %168 = arith.addf %167, %49 : vector<32x32xf32>
    %cst_63 = arith.constant dense<0xFF800000> : vector<32xf32>
    %169 = vector.multi_reduction <maximumf>, %168, %cst_63 [1] : vector<32x32xf32> to vector<32xf32>
    %170 = vector.shape_cast %169 : vector<32xf32> to vector<32x1xf32>
    %171 = vector.broadcast %170 : vector<32x1xf32> to vector<32x32xf32>
    %172 = arith.subf %168, %171 : vector<32x32xf32>
    %173 = math.exp %172 : vector<32x32xf32>
    %cst_64 = arith.constant dense<0.000000e+00> : vector<32xf32>
    %174 = vector.multi_reduction <add>, %173, %cst_64 [1] : vector<32x32xf32> to vector<32xf32>
    %175 = vector.shape_cast %174 : vector<32xf32> to vector<32x1xf32>
    %176 = tpu.reciprocal %175 {approx = true} : vector<32x1xf32> -> vector<32x1xf32>
    %177 = vector.broadcast %176 : vector<32x1xf32> to vector<32x32xf32>
    %178 = arith.mulf %173, %177 : vector<32x32xf32>
    %179 = arith.truncf %178 : vector<32x32xf32> to vector<32x32xbf16>
    %cst_65 = arith.constant dense<0.000000e+00> : vector<32x16xf32>
    %180 = tpu.matmul %179, %166, %cst_65 {dimension_numbers = #tpu.dot_dimension_numbers<[1], [0], [0], [1], [0, 0, 1, 1], [], []>} : vector<32x32xbf16>, vector<32x16xbf16>, vector<32x16xf32> -> vector<32x16xf32>
    %181 = arith.truncf %180 : vector<32x16xf32> to vector<32x16xbf16>
    %c32_66 = arith.constant 32 : index
    %c32_67 = arith.constant 32 : index
    %182 = vector.load %arg11[%c32_66, %c32_67] : memref<64x64xbf16, #tpu.memory_space<vmem>>, vector<32x16xbf16>
    tpu.vector_store %arg11[%c32_66, %c32_67], %181 {strides = array<i32>} : memref<64x64xbf16, #tpu.memory_space<vmem>>, vector<32x16xbf16>,
    %183 = vector.extract_strided_slice %48 {offsets = [32, 48], sizes = [32, 16], strides = [1, 1]} : vector<64x192xbf16> to vector<32x16xbf16>
    %184 = vector.extract_strided_slice %48 {offsets = [32, 112], sizes = [32, 16], strides = [1, 1]} : vector<64x192xbf16> to vector<32x16xbf16>
    %185 = vector.extract_strided_slice %48 {offsets = [32, 176], sizes = [32, 16], strides = [1, 1]} : vector<64x192xbf16> to vector<32x16xbf16>
    %cst_68 = arith.constant dense<0.000000e+00> : vector<32x32xf32>
    %186 = tpu.matmul %183, %184, %cst_68 {dimension_numbers = #tpu.dot_dimension_numbers<[1], [1], [0], [0], [0, 0, 1, 0], [], []>} : vector<32x16xbf16>, vector<32x16xbf16>, vector<32x32xf32> -> vector<32x32xf32>
    %187 = arith.addf %186, %49 : vector<32x32xf32>
    %cst_69 = arith.constant dense<0xFF800000> : vector<32xf32>
    %188 = vector.multi_reduction <maximumf>, %187, %cst_69 [1] : vector<32x32xf32> to vector<32xf32>
    %189 = vector.shape_cast %188 : vector<32xf32> to vector<32x1xf32>
    %190 = vector.broadcast %189 : vector<32x1xf32> to vector<32x32xf32>
    %191 = arith.subf %187, %190 : vector<32x32xf32>
    %192 = math.exp %191 : vector<32x32xf32>
    %cst_70 = arith.constant dense<0.000000e+00> : vector<32xf32>
    %193 = vector.multi_reduction <add>, %192, %cst_70 [1] : vector<32x32xf32> to vector<32xf32>
    %194 = vector.shape_cast %193 : vector<32xf32> to vector<32x1xf32>
    %195 = tpu.reciprocal %194 {approx = true} : vector<32x1xf32> -> vector<32x1xf32>
    %196 = vector.broadcast %195 : vector<32x1xf32> to vector<32x32xf32>
    %197 = arith.mulf %192, %196 : vector<32x32xf32>
    %198 = arith.truncf %197 : vector<32x32xf32> to vector<32x32xbf16>
    %cst_71 = arith.constant dense<0.000000e+00> : vector<32x16xf32>
    %199 = tpu.matmul %198, %185, %cst_71 {dimension_numbers = #tpu.dot_dimension_numbers<[1], [0], [0], [1], [0, 0, 1, 1], [], []>} : vector<32x32xbf16>, vector<32x16xbf16>, vector<32x16xf32> -> vector<32x16xf32>
    %200 = arith.truncf %199 : vector<32x16xf32> to vector<32x16xbf16>
    %c32_72 = arith.constant 32 : index
    %c48_73 = arith.constant 48 : index
    %201 = vector.load %arg11[%c32_72, %c48_73] : memref<64x64xbf16, #tpu.memory_space<vmem>>, vector<32x16xbf16>
    tpu.vector_store %arg11[%c32_72, %c48_73], %200 {strides = array<i32>} : memref<64x64xbf16, #tpu.memory_space<vmem>>, vector<32x16xbf16>,
    %c0_74 = arith.constant 0 : index
    %c0_75 = arith.constant 0 : index
    %202 = vector.load %arg11[%c0_74, %c0_75] : memref<64x64xbf16, #tpu.memory_space<vmem>>, vector<64x64xbf16>
    %c0_76 = arith.constant 0 : index
    %c0_77 = arith.constant 0 : index
    %c0_78 = arith.constant 0 : index
    %203 = vector.load %arg5[%c0_76, %c0_77, %c0_78] : memref<1x64x64xbf16, #tpu.memory_space<vmem>>, vector<1x64x64xbf16>
    %204 = vector.shape_cast %203 : vector<1x64x64xbf16> to vector<64x64xbf16>
    %cst_79 = arith.constant dense<0.000000e+00> : vector<64x64xf32>
    %205 = tpu.matmul %202, %204, %cst_79 {dimension_numbers = #tpu.dot_dimension_numbers<[1], [0], [0], [1], [0, 0, 1, 1], [], []>} : vector<64x64xbf16>, vector<64x64xbf16>, vector<64x64xf32> -> vector<64x64xf32>
    %206 = arith.addf %3, %205 : vector<64x64xf32>
    %207 = vector.broadcast %13 : vector<1x64xf32> to vector<64x64xf32>
    %208 = arith.addf %206, %207 : vector<64x64xf32>
    %cst_80 = arith.constant dense<0.000000e+00> : vector<64xf32>
    %209 = vector.multi_reduction <add>, %208, %cst_80 [1] : vector<64x64xf32> to vector<64xf32>
    %210 = vector.shape_cast %209 : vector<64xf32> to vector<64x1xf32>
    %cst_81 = arith.constant 6.400000e+01 : f32
    %211 = vector.broadcast %cst_81 : f32 to vector<64x1xf32>
    %212 = arith.divf %210, %211 : vector<64x1xf32>
    %213 = vector.broadcast %212 : vector<64x1xf32> to vector<64x64xf32>
    %214 = arith.subf %208, %213 : vector<64x64xf32>
    %215 = arith.mulf %214, %214 : vector<64x64xf32>
    %cst_82 = arith.constant dense<0.000000e+00> : vector<64xf32>
    %216 = vector.multi_reduction <add>, %215, %cst_82 [1] : vector<64x64xf32> to vector<64xf32>
    %217 = vector.shape_cast %216 : vector<64xf32> to vector<64x1xf32>
    %cst_83 = arith.constant 6.400000e+01 : f32
    %218 = vector.broadcast %cst_83 : f32 to vector<64x1xf32>
    %219 = arith.divf %217, %218 : vector<64x1xf32>
    %220 = vector.broadcast %212 : vector<64x1xf32> to vector<64x64xf32>
    %221 = arith.subf %208, %220 : vector<64x64xf32>
    %cst_84 = arith.constant 9.99999974E-6 : f32
    %222 = vector.broadcast %cst_84 : f32 to vector<64x1xf32>
    %223 = arith.addf %219, %222 : vector<64x1xf32>
    %224 = math.rsqrt %223 : vector<64x1xf32>
    %225 = vector.broadcast %224 : vector<64x1xf32> to vector<64x64xf32>
    %226 = arith.mulf %221, %225 : vector<64x64xf32>
    %227 = vector.broadcast %9 : vector<1x64xf32> to vector<64x64xf32>
    %228 = arith.mulf %226, %227 : vector<64x64xf32>
    %229 = vector.broadcast %11 : vector<1x64xf32> to vector<64x64xf32>
    %230 = arith.addf %228, %229 : vector<64x64xf32>
    %231 = arith.truncf %230 : vector<64x64xf32> to vector<64x64xbf16>
    %c0_85 = arith.constant 0 : index
    %c0_86 = arith.constant 0 : index
    %c0_87 = arith.constant 0 : index
    %232 = vector.load %arg6[%c0_85, %c0_86, %c0_87] : memref<1x64x256xbf16, #tpu.memory_space<vmem>>, vector<1x64x256xbf16>
    %233 = vector.shape_cast %232 : vector<1x64x256xbf16> to vector<64x256xbf16>
    %cst_88 = arith.constant dense<0.000000e+00> : vector<64x256xf32>
    %234 = tpu.matmul %231, %233, %cst_88 {dimension_numbers = #tpu.dot_dimension_numbers<[1], [0], [0], [1], [0, 0, 1, 1], [], []>} : vector<64x64xbf16>, vector<64x256xbf16>, vector<64x256xf32> -> vector<64x256xf32>
    %235 = vector.broadcast %19 : vector<1x256xf32> to vector<64x256xf32>
    %236 = arith.addf %234, %235 : vector<64x256xf32>
    %cst_89 = arith.constant 5.000000e-01 : f32
    %237 = vector.broadcast %cst_89 : f32 to vector<64x256xf32>
    %238 = arith.mulf %237, %236 : vector<64x256xf32>
    %cst_90 = arith.constant 4.471500e-02 : f32
    %239 = vector.broadcast %cst_90 : f32 to vector<64x256xf32>
    %240 = arith.mulf %239, %236 : vector<64x256xf32>
    %241 = arith.mulf %240, %236 : vector<64x256xf32>
    %242 = arith.mulf %241, %236 : vector<64x256xf32>
    %243 = arith.addf %236, %242 : vector<64x256xf32>
    %cst_91 = arith.constant 0.797884583 : f32
    %244 = vector.broadcast %cst_91 : f32 to vector<64x256xf32>
    %245 = arith.mulf %244, %243 : vector<64x256xf32>
    %246 = math.tanh %245 : vector<64x256xf32>
    %cst_92 = arith.constant 1.000000e+00 : f32
    %247 = vector.broadcast %cst_92 : f32 to vector<64x256xf32>
    %248 = arith.addf %247, %246 : vector<64x256xf32>
    %249 = arith.mulf %238, %248 : vector<64x256xf32>
    %250 = arith.truncf %249 : vector<64x256xf32> to vector<64x256xbf16>
    %c0_93 = arith.constant 0 : index
    %c0_94 = arith.constant 0 : index
    %c0_95 = arith.constant 0 : index
    %251 = vector.load %arg7[%c0_93, %c0_94, %c0_95] : memref<1x256x64xbf16, #tpu.memory_space<vmem>>, vector<1x256x64xbf16>
    %252 = vector.shape_cast %251 : vector<1x256x64xbf16> to vector<256x64xbf16>
    %cst_96 = arith.constant dense<0.000000e+00> : vector<64x64xf32>
    %253 = tpu.matmul %250, %252, %cst_96 {dimension_numbers = #tpu.dot_dimension_numbers<[1], [0], [0], [1], [0, 0, 1, 1], [], []>} : vector<64x256xbf16>, vector<256x64xbf16>, vector<64x64xf32> -> vector<64x64xf32>
    %254 = arith.addf %208, %253 : vector<64x64xf32>
    %255 = vector.broadcast %15 : vector<1x64xf32> to vector<64x64xf32>
    %256 = arith.addf %254, %255 : vector<64x64xf32>
    %c0_97 = arith.constant 0 : index
    %c0_98 = arith.constant 0 : index
    %257 = vector.load %arg10[%c0_97, %c0_98] : memref<64x64xf32, #tpu.memory_space<vmem>>, vector<64x64xf32>
    tpu.vector_store %arg10[%c0_97, %c0_98], %256 {strides = array<i32>} : memref<64x64xf32, #tpu.memory_space<vmem>>, vector<64x64xf32>,
    %c1_i32 = arith.constant 1 : i32
    %258 = arith.cmpi eq, %arg0, %c1_i32 : i32
    %259 = arith.extui %258 : i1 to i32
    %c0_i32_99 = arith.constant 0 : i32
    %260 = arith.cmpi ne, %259, %c0_i32_99 : i32
    scf.if %260 {
      %c0_100 = arith.constant 0 : index
      %c0_101 = arith.constant 0 : index
      %261 = vector.load %arg8[%c0_100, %c0_101] : memref<4x64xf32, #tpu.memory_space<vmem>>, vector<1x64xf32>
      %c1 = arith.constant 1 : index
      %c0_102 = arith.constant 0 : index
      %262 = vector.load %arg8[%c1, %c0_102] : memref<4x64xf32, #tpu.memory_space<vmem>>, vector<1x64xf32>
      %cst_103 = arith.constant dense<0.000000e+00> : vector<64xf32>
      %263 = vector.multi_reduction <add>, %256, %cst_103 [1] : vector<64x64xf32> to vector<64xf32>
      %264 = vector.shape_cast %263 : vector<64xf32> to vector<64x1xf32>
      %cst_104 = arith.constant 6.400000e+01 : f32
      %265 = vector.broadcast %cst_104 : f32 to vector<64x1xf32>
      %266 = arith.divf %264, %265 : vector<64x1xf32>
      %267 = vector.broadcast %266 : vector<64x1xf32> to vector<64x64xf32>
      %268 = arith.subf %256, %267 : vector<64x64xf32>
      %269 = arith.mulf %268, %268 : vector<64x64xf32>
      %cst_105 = arith.constant dense<0.000000e+00> : vector<64xf32>
      %270 = vector.multi_reduction <add>, %269, %cst_105 [1] : vector<64x64xf32> to vector<64xf32>
      %271 = vector.shape_cast %270 : vector<64xf32> to vector<64x1xf32>
      %cst_106 = arith.constant 6.400000e+01 : f32
      %272 = vector.broadcast %cst_106 : f32 to vector<64x1xf32>
      %273 = arith.divf %271, %272 : vector<64x1xf32>
      %274 = vector.broadcast %266 : vector<64x1xf32> to vector<64x64xf32>
      %275 = arith.subf %256, %274 : vector<64x64xf32>
      %cst_107 = arith.constant 9.99999974E-6 : f32
      %276 = vector.broadcast %cst_107 : f32 to vector<64x1xf32>
      %277 = arith.addf %273, %276 : vector<64x1xf32>
      %278 = math.rsqrt %277 : vector<64x1xf32>
      %279 = vector.broadcast %278 : vector<64x1xf32> to vector<64x64xf32>
      %280 = arith.mulf %275, %279 : vector<64x64xf32>
      %281 = vector.broadcast %261 : vector<1x64xf32> to vector<64x64xf32>
      %282 = arith.mulf %280, %281 : vector<64x64xf32>
      %283 = vector.broadcast %262 : vector<1x64xf32> to vector<64x64xf32>
      %284 = arith.addf %282, %283 : vector<64x64xf32>
      %c2 = arith.constant 2 : index
      %c0_108 = arith.constant 0 : index
      %285 = vector.load %arg8[%c2, %c0_108] : memref<4x64xf32, #tpu.memory_space<vmem>>, vector<1x64xf32>
      %c3 = arith.constant 3 : index
      %c0_109 = arith.constant 0 : index
      %286 = vector.load %arg8[%c3, %c0_109] : memref<4x64xf32, #tpu.memory_space<vmem>>, vector<1x64xf32>
      %cst_110 = arith.constant dense<0.000000e+00> : vector<64xf32>
      %287 = vector.multi_reduction <add>, %284, %cst_110 [1] : vector<64x64xf32> to vector<64xf32>
      %288 = vector.shape_cast %287 : vector<64xf32> to vector<64x1xf32>
      %cst_111 = arith.constant 6.400000e+01 : f32
      %289 = vector.broadcast %cst_111 : f32 to vector<64x1xf32>
      %290 = arith.divf %288, %289 : vector<64x1xf32>
      %291 = vector.broadcast %290 : vector<64x1xf32> to vector<64x64xf32>
      %292 = arith.subf %284, %291 : vector<64x64xf32>
      %293 = arith.mulf %292, %292 : vector<64x64xf32>
      %cst_112 = arith.constant dense<0.000000e+00> : vector<64xf32>
      %294 = vector.multi_reduction <add>, %293, %cst_112 [1] : vector<64x64xf32> to vector<64xf32>
      %295 = vector.shape_cast %294 : vector<64xf32> to vector<64x1xf32>
      %cst_113 = arith.constant 6.400000e+01 : f32
      %296 = vector.broadcast %cst_113 : f32 to vector<64x1xf32>
      %297 = arith.divf %295, %296 : vector<64x1xf32>
      %298 = vector.broadcast %290 : vector<64x1xf32> to vector<64x64xf32>
      %299 = arith.subf %284, %298 : vector<64x64xf32>
      %cst_114 = arith.constant 9.99999974E-6 : f32
      %300 = vector.broadcast %cst_114 : f32 to vector<64x1xf32>
      %301 = arith.addf %297, %300 : vector<64x1xf32>
      %302 = math.rsqrt %301 : vector<64x1xf32>
      %303 = vector.broadcast %302 : vector<64x1xf32> to vector<64x64xf32>
      %304 = arith.mulf %299, %303 : vector<64x64xf32>
      %305 = vector.broadcast %285 : vector<1x64xf32> to vector<64x64xf32>
      %306 = arith.mulf %304, %305 : vector<64x64xf32>
      %307 = vector.broadcast %286 : vector<1x64xf32> to vector<64x64xf32>
      %308 = arith.addf %306, %307 : vector<64x64xf32>
      %c0_115 = arith.constant 0 : index
      %c0_116 = arith.constant 0 : index
      %309 = vector.load %arg9[%c0_115, %c0_116] : memref<64x64xf32, #tpu.memory_space<vmem>>, vector<64x64xf32>
      tpu.vector_store %arg9[%c0_115, %c0_116], %308 {strides = array<i32>} : memref<64x64xf32, #tpu.memory_space<vmem>>, vector<64x64xf32>,
    } else {
    }
    return
  }
  func.func @transform_0(%arg0: i32) -> (i32, i32) {
    %c0_i32 = arith.constant 0 : i32
    %c0_i32_0 = arith.constant 0 : i32
    %c0_i32_1 = arith.constant 0 : i32
    return %c0_i32, %c0_i32_0 : i32, i32
  }
  func.func @transform_1(%arg0: i32) -> (i32, i32) {
    %c0_i32 = arith.constant 0 : i32
    %c0_i32_0 = arith.constant 0 : i32
    %c0_i32_1 = arith.constant 0 : i32
    return %c0_i32, %c0_i32_0 : i32, i32
  }
  func.func @transform_2(%arg0: i32) -> (i32, i32, i32) {
    %c0_i32 = arith.constant 0 : i32
    %c0_i32_0 = arith.constant 0 : i32
    %c0_i32_1 = arith.constant 0 : i32
    return %arg0, %c0_i32, %c0_i32_0 : i32, i32, i32
  }
  func.func @transform_3(%arg0: i32) -> (i32, i32, i32) {
    %c0_i32 = arith.constant 0 : i32
    %c0_i32_0 = arith.constant 0 : i32
    %c0_i32_1 = arith.constant 0 : i32
    return %arg0, %c0_i32, %c0_i32_0 : i32, i32, i32
  }
  func.func @transform_4(%arg0: i32) -> (i32, i32, i32) {
    %c0_i32 = arith.constant 0 : i32
    %c0_i32_0 = arith.constant 0 : i32
    %c0_i32_1 = arith.constant 0 : i32
    return %arg0, %c0_i32, %c0_i32_0 : i32, i32, i32
  }
  func.func @transform_5(%arg0: i32) -> (i32, i32, i32) {
    %c0_i32 = arith.constant 0 : i32
    %c0_i32_0 = arith.constant 0 : i32
    %c0_i32_1 = arith.constant 0 : i32
    return %arg0, %c0_i32, %c0_i32_0 : i32, i32, i32
  }
  func.func @transform_6(%arg0: i32) -> (i32, i32, i32) {
    %c0_i32 = arith.constant 0 : i32
    %c0_i32_0 = arith.constant 0 : i32
    %c0_i32_1 = arith.constant 0 : i32
    return %arg0, %c0_i32, %c0_i32_0 : i32, i32, i32
  }
  func.func @transform_7(%arg0: i32) -> (i32, i32) {
    %c0_i32 = arith.constant 0 : i32
    %c0_i32_0 = arith.constant 0 : i32
    %c0_i32_1 = arith.constant 0 : i32
    return %c0_i32, %c0_i32_0 : i32, i32
  }
  func.func @transform_8(%arg0: i32) -> (i32, i32) {
    %c0_i32 = arith.constant 0 : i32
    %c0_i32_0 = arith.constant 0 : i32
    %c0_i32_1 = arith.constant 0 : i32
    return %c0_i32, %c0_i32_0 : i32, i32
  }
}

</mosaic_0001>

<llo_original>
// kernel: tpu_custom_call.1
$region0: #{tpu_custom_call.1}
  #allocation0 [shape = 'u32[]', space=smem, size = 0x4, offset = 0x4, fixed_abs, tag = 'smem constant byte address 0x4 - core index']
  #allocation1 [shape = 'u32[144,128]{1,0:T(1,128)}', space=vmem, size = 0x12000, scoped, tag = 'internal scratch']
  #allocation2 [shape = 'f32[64,64]{1,0:T(8,128)}', space=vmem, size = 0x8000, scoped, tag = 'scratch operand']
  #allocation3 [shape = 'bf16[64,64]{1,0:T(16,128)(2,1)}', space=vmem, size = 0x4000, scoped, tag = 'scratch operand']
  %s0 = inlined_call_operand.vmem [shape: f32[64,64], index: 0, kind: input, shape index: {}]
  %s1 = inlined_call_operand.hbm [shape: f32[32,32], index: 1, kind: input, shape index: {}]
  %s2 = inlined_call_operand.hbm [shape: f32[2,1,832], index: 2, kind: input, shape index: {}]
  %s3 = inlined_call_operand.vmem [shape: bf16[2,64,192], index: 3, kind: input, shape index: {}]
  %s4 = inlined_call_operand.vmem [shape: bf16[2,64,64], index: 4, kind: input, shape index: {}]
  %s5 = inlined_call_operand.vmem [shape: bf16[2,64,256], index: 5, kind: input, shape index: {}]
  %s6 = inlined_call_operand.vmem [shape: bf16[2,256,64], index: 6, kind: input, shape index: {}]
  %s7 = inlined_call_operand.vmem [shape: f32[4,64], index: 7, kind: input, shape index: {}]
  %s8 = inlined_call_operand.hbm [shape: f32[64,64], index: 8, kind: output, shape index: {}]
  %s9 = sld [smem:[#allocation0]]
  $region81: #{tpu_custom_call.1} parent=0
    _
  %s11 = ssub.s32 1, %s9
  %s12 = scalar_select 0, %s11, %s9
  $region1: #{tpu_custom_call.1} parent=0
    #allocation4 [shape = 'u8[16384]{0}', space=vmem, size = 0x4000, scoped, tag = 'input window, operand 1, single buffered']
    #allocation5 [shape = 's32[2]{0}', space=sflag, size = 0x8, scoped, tag = 'scoped memory for tpu_custom_call.1']
    #allocation6 [shape = 's32[2]{0}', space=sflag, size = 0x8, scoped, tag = 'scoped memory for tpu_custom_call.1']
    #allocation7 [shape = 'u8[7168]{0}', space=vmem, size = 0x1c00, scoped, tag = 'input window, operand 2']
    #allocation8 [shape = 's32[2]{0}', space=sflag, size = 0x8, scoped, tag = 'scoped memory for tpu_custom_call.1']
    #allocation9 [shape = 'u8[32768]{0}', space=vmem, size = 0x8000, scoped, tag = 'output window, operand 0, single buffered']
    %13 = vsyncpa [#allocation5], 0
    %14 = vsyncpa [#allocation8], 0
    %s15 = scalar_lea.sflag [#allocation8], 1
    %16 = vsyncpa %s15, 0
    %17 = vsyncpa [#allocation6], 0
    loop: start=0, step=1, limit=4
    $region2: #{tpu_custom_call.1} parent=1 // loop_pre_header
      _
    $region3: #{tpu_custom_call.1} parent=1 // loop_header
      %s19 = sphi 0, %s23
      %p20 = scmp.ge.s32.totalorder %s19, 4
      %s27 = sphi 0, %s27
      %s29 = sphi 0, %s27
      %s30 = sphi 0, %s29
      %s44 = sphi 0, %s30
      %s48 = sphi 0, %s48
      %s50 = sphi 0, %s48
      %s51 = sphi 0, %s50
      %s65 = sphi 0, %s51
      %s71 = sphi 0, %s73
      %s74 = sphi 0, %s71
      %s75 = sphi 0, %s74
      %s91 = sphi 0, %s75
      %s97 = sphi 0, %s99
      %s100 = sphi 0, %s97
      %s101 = sphi 0, %s100
      %s117 = sphi 0, %s101
      %s123 = sphi 0, %s125
      %s126 = sphi 0, %s123
      %s127 = sphi 0, %s126
      %s143 = sphi 0, %s127
      %s149 = sphi 0, %s151
      %s152 = sphi 0, %s149
      %s153 = sphi 0, %s152
      %s169 = sphi 0, %s153
      %s175 = sphi 0, %s177
      %s178 = sphi 0, %s175
      %s179 = sphi 0, %s178
      %s195 = sphi 0, %s179
      %s199 = sphi 0, %s199
      %s201 = sphi 0, %s199
      %s202 = sphi 0, %s201
      %s216 = sphi 0, %s202
      %s220 = sphi 0, %s220
      %s222 = sphi 0, %s220
      %s223 = sphi 0, %s222
      %s237 = sphi 0, %s223
    $region4: #{tpu_custom_call.1} parent=1 // loop_header_branch
      %22 = sbr.rel (%p20) target = $region8
    $region5: #{tpu_custom_call.1} parent=1 // loop_body
      %s24 = ssub.s32 %s19, 1
      %s25 = ssub.s32 %s19, 2
      %s26 = sadd.s32 %s19, 1
      %s28 = sadd.s32 %s27, 1
      %p31 = scmp.eq.s32.totalorder %s19, 1
      %p32 = scmp.ne.s32.totalorder %s27, %s29
      %p33 = scmp.eq.s32.totalorder %s19, 0
      %p34 = por %p32, %p33
      %p35 = scmp.ne.s32.totalorder %s27, %s29
      %p36 = scmp.eq.s32.totalorder %s24, 1
      %p37 = por %p35, %p36
      %p38 = scmp.ne.s32.totalorder %s29, %s30
      %p39 = scmp.eq.s32.totalorder %s24, 0
      %p40 = por %p38, %p39
      %p41 = scmp.ne.s32.totalorder %s29, %s30
      %p42 = scmp.eq.s32.totalorder %s25, 1
      %p43 = por %p41, %p42
      %p45 = scmp.ne.s32.totalorder %s30, %s44
      %p46 = scmp.eq.s32.totalorder %s25, 0
      %p47 = por %p45, %p46
      %s49 = sadd.s32 %s48, 1
      %p52 = scmp.eq.s32.totalorder %s19, 1
      %p53 = scmp.ne.s32.totalorder %s48, %s50
      %p54 = scmp.eq.s32.totalorder %s19, 0
      %p55 = por %p53, %p54
      %p56 = scmp.ne.s32.totalorder %s48, %s50
      %p57 = scmp.eq.s32.totalorder %s24, 1
      %p58 = por %p56, %p57
      %p59 = scmp.ne.s32.totalorder %s50, %s51
      %p60 = scmp.eq.s32.totalorder %s24, 0
      %p61 = por %p59, %p60
      %p62 = scmp.ne.s32.totalorder %s50, %s51
      %p63 = scmp.eq.s32.totalorder %s25, 1
      %p64 = por %p62, %p63
      %p66 = scmp.ne.s32.totalorder %s51, %s65
      %p67 = scmp.eq.s32.totalorder %s25, 0
      %p68 = por %p66, %p67
      %s69 = ssub.s32 %s19, %s26
      %p70 = scmp.eq.s32.totalorder %s69, 0
      %s72 = sadd.s32 %s71, 1
      %s73 = scalar_select %p70, %s71, %s72
      %p76 = pneg %p70
      %p77 = scmp.eq.s32.totalorder %s19, 1
      %p78 = por %p76, %p77
      %p79 = scmp.ne.s32.totalorder %s71, %s74
      %p80 = scmp.eq.s32.totalorder %s19, 0
      %p81 = por %p79, %p80
      %p82 = scmp.ne.s32.totalorder %s71, %s74
      %p83 = scmp.eq.s32.totalorder %s24, 1
      %p84 = por %p82, %p83
      %p85 = scmp.ne.s32.totalorder %s74, %s75
      %p86 = scmp.eq.s32.totalorder %s24, 0
      %p87 = por %p85, %p86
      %p88 = scmp.ne.s32.totalorder %s74, %s75
      %p89 = scmp.eq.s32.totalorder %s25, 1
      %p90 = por %p88, %p89
      %p92 = scmp.ne.s32.totalorder %s75, %s91
      %p93 = scmp.eq.s32.totalorder %s25, 0
      %p94 = por %p92, %p93
      %s95 = ssub.s32 %s19, %s26
      %p96 = scmp.eq.s32.totalorder %s95, 0
      %s98 = sadd.s32 %s97, 1
      %s99 = scalar_select %p96, %s97, %s98
      %p102 = pneg %p96
      %p103 = scmp.eq.s32.totalorder %s19, 1
      %p104 = por %p102, %p103
      %p105 = scmp.ne.s32.totalorder %s97, %s100
      %p106 = scmp.eq.s32.totalorder %s19, 0
      %p107 = por %p105, %p106
      %p108 = scmp.ne.s32.totalorder %s97, %s100
      %p109 = scmp.eq.s32.totalorder %s24, 1
      %p110 = por %p108, %p109
      %p111 = scmp.ne.s32.totalorder %s100, %s101
      %p112 = scmp.eq.s32.totalorder %s24, 0
      %p113 = por %p111, %p112
      %p114 = scmp.ne.s32.totalorder %s100, %s101
      %p115 = scmp.eq.s32.totalorder %s25, 1
      %p116 = por %p114, %p115
      %p118 = scmp.ne.s32.totalorder %s101, %s117
      %p119 = scmp.eq.s32.totalorder %s25, 0
      %p120 = por %p118, %p119
      %s121 = ssub.s32 %s19, %s26
      %p122 = scmp.eq.s32.totalorder %s121, 0
      %s124 = sadd.s32 %s123, 1
      %s125 = scalar_select %p122, %s123, %s124
      %p128 = pneg %p122
      %p129 = scmp.eq.s32.totalorder %s19, 1
      %p130 = por %p128, %p129
      %p131 = scmp.ne.s32.totalorder %s123, %s126
      %p132 = scmp.eq.s32.totalorder %s19, 0
      %p133 = por %p131, %p132
      %p134 = scmp.ne.s32.totalorder %s123, %s126
      %p135 = scmp.eq.s32.totalorder %s24, 1
      %p136 = por %p134, %p135
      %p137 = scmp.ne.s32.totalorder %s126, %s127
      %p138 = scmp.eq.s32.totalorder %s24, 0
      %p139 = por %p137, %p138
      %p140 = scmp.ne.s32.totalorder %s126, %s127
      %p141 = scmp.eq.s32.totalorder %s25, 1
      %p142 = por %p140, %p141
      %p144 = scmp.ne.s32.totalorder %s127, %s143
      %p145 = scmp.eq.s32.totalorder %s25, 0
      %p146 = por %p144, %p145
      %s147 = ssub.s32 %s19, %s26
      %p148 = scmp.eq.s32.totalorder %s147, 0
      %s150 = sadd.s32 %s149, 1
      %s151 = scalar_select %p148, %s149, %s150
      %p154 = pneg %p148
      %p155 = scmp.eq.s32.totalorder %s19, 1
      %p156 = por %p154, %p155
      %p157 = scmp.ne.s32.totalorder %s149, %s152
      %p158 = scmp.eq.s32.totalorder %s19, 0
      %p159 = por %p157, %p158
      %p160 = scmp.ne.s32.totalorder %s149, %s152
      %p161 = scmp.eq.s32.totalorder %s24, 1
      %p162 = por %p160, %p161
      %p163 = scmp.ne.s32.totalorder %s152, %s153
      %p164 = scmp.eq.s32.totalorder %s24, 0
      %p165 = por %p163, %p164
      %p166 = scmp.ne.s32.totalorder %s152, %s153
      %p167 = scmp.eq.s32.totalorder %s25, 1
      %p168 = por %p166, %p167
      %p170 = scmp.ne.s32.totalorder %s153, %s169
      %p171 = scmp.eq.s32.totalorder %s25, 0
      %p172 = por %p170, %p171
      %s173 = ssub.s32 %s19, %s26
      %p174 = scmp.eq.s32.totalorder %s173, 0
      %s176 = sadd.s32 %s175, 1
      %s177 = scalar_select %p174, %s175, %s176
      %p180 = pneg %p174
      %p181 = scmp.eq.s32.totalorder %s19, 1
      %p182 = por %p180, %p181
      %p183 = scmp.ne.s32.totalorder %s175, %s178
      %p184 = scmp.eq.s32.totalorder %s19, 0
      %p185 = por %p183, %p184
      %p186 = scmp.ne.s32.totalorder %s175, %s178
      %p187 = scmp.eq.s32.totalorder %s24, 1
      %p188 = por %p186, %p187
      %p189 = scmp.ne.s32.totalorder %s178, %s179
      %p190 = scmp.eq.s32.totalorder %s24, 0
      %p191 = por %p189, %p190
      %p192 = scmp.ne.s32.totalorder %s178, %s179
      %p193 = scmp.eq.s32.totalorder %s25, 1
      %p194 = por %p192, %p193
      %p196 = scmp.ne.s32.totalorder %s179, %s195
      %p197 = scmp.eq.s32.totalorder %s25, 0
      %p198 = por %p196, %p197
      %s200 = sadd.s32 %s199, 1
      %p203 = scmp.eq.s32.totalorder %s19, 1
      %p204 = scmp.ne.s32.totalorder %s199, %s201
      %p205 = scmp.eq.s32.totalorder %s19, 0
      %p206 = por %p204, %p205
      %p207 = scmp.ne.s32.totalorder %s199, %s201
      %p208 = scmp.eq.s32.totalorder %s24, 1
      %p209 = por %p207, %p208
      %p210 = scmp.ne.s32.totalorder %s201, %s202
      %p211 = scmp.eq.s32.totalorder %s24, 0
      %p212 = por %p210, %p211
      %p213 = scmp.ne.s32.totalorder %s201, %s202
      %p214 = scmp.eq.s32.totalorder %s25, 1
      %p215 = por %p213, %p214
      %p217 = scmp.ne.s32.totalorder %s202, %s216
      %p218 = scmp.eq.s32.totalorder %s25, 0
      %p219 = por %p217, %p218
      %s221 = sadd.s32 %s220, 1
      %p224 = scmp.eq.s32.totalorder %s19, 1
      %p225 = scmp.ne.s32.totalorder %s220, %s222
      %p226 = scmp.eq.s32.totalorder %s19, 0
      %p227 = por %p225, %p226
      %p228 = scmp.ne.s32.totalorder %s220, %s222
      %p229 = scmp.eq.s32.totalorder %s24, 1
      %p230 = por %p228, %p229
      %p231 = scmp.ne.s32.totalorder %s222, %s223
      %p232 = scmp.eq.s32.totalorder %s24, 0
      %p233 = por %p231, %p232
      %p234 = scmp.ne.s32.totalorder %s222, %s223
      %p235 = scmp.eq.s32.totalorder %s25, 1
      %p236 = por %p234, %p235
      %p238 = scmp.ne.s32.totalorder %s223, %s237
      %p239 = scmp.eq.s32.totalorder %s25, 0
      %p240 = por %p238, %p239
      %p241 = scmp.le.s32.totalorder 1, %s19
      %p242 = scmp.lt.s32.totalorder %s19, 3
      %p243 = pnand %p241, %p242
      %p244 = pneg %p243
      // Predicated region
      $region9: #{tpu_custom_call.1} parent=5 // pred_check
        _
      $region10: #{tpu_custom_call.1} parent=5 // pred_check_branch
        %246 = sbr.rel (%p243) target = $region12
      $region11: #{tpu_custom_call.1} parent=5 // pred_region
        %s247 = ssub.s32 %s19, 1
        // Predicated region
        $region13: #{tpu_custom_call.1} parent=11 // pred_check
          %p248 = pneg %p40
        $region14: #{tpu_custom_call.1} parent=11 // pred_check_branch
          %250 = sbr.rel (%p248) target = $region16
        $region15: #{tpu_custom_call.1} parent=11 // pred_region
          _
        $region16: #{tpu_custom_call.1} parent=11 // pred_fallthru
          _
        // Predicated region
        $region17: #{tpu_custom_call.1} parent=11 // pred_check
          %p251 = pneg %p61
        $region18: #{tpu_custom_call.1} parent=11 // pred_check_branch
          %253 = sbr.rel (%p251) target = $region20
        $region19: #{tpu_custom_call.1} parent=11 // pred_region
          %s255 = ssub.s32 512, 512
          %256 = vsyncadd [#allocation5], %s255
          %s257 = sshll.u32 [#allocation4], 4
          %s258 = int_to_ptr.vmem [resolvable:$true] %s257
          %263 = dma.hbm_to_vmem [thread:$0]  %s1, 512, %s258, [#allocation5], 128, 128, 8
        $region20: #{tpu_custom_call.1} parent=11 // pred_fallthru
          _
        // Predicated region
        $region21: #{tpu_custom_call.1} parent=11 // pred_check
          %p264 = pneg %p212
        $region22: #{tpu_custom_call.1} parent=11 // pred_check_branch
          %266 = sbr.rel (%p264) target = $region24
        $region23: #{tpu_custom_call.1} parent=11 // pred_region
          _
        $region24: #{tpu_custom_call.1} parent=11 // pred_fallthru
          _
      $region12: #{tpu_custom_call.1} parent=5 // pred_fallthru
        _
      %p267 = scmp.lt.s32.totalorder %s19, 2
      // Predicated region
      $region25: #{tpu_custom_call.1} parent=5 // pred_check
        %p268 = pneg %p267
      $region26: #{tpu_custom_call.1} parent=5 // pred_check_branch
        %270 = sbr.rel (%p268) target = $region28
      $region27: #{tpu_custom_call.1} parent=5 // pred_region
        // Predicated region
        $region29: #{tpu_custom_call.1} parent=27 // pred_check
          %p271 = pneg %p81
        $region30: #{tpu_custom_call.1} parent=27 // pred_check_branch
          %273 = sbr.rel (%p271) target = $region32
        $region31: #{tpu_custom_call.1} parent=27 // pred_region
          %s274 = sand.u32 %s71, 1
          %s275 = scalar_lea.sflag [#allocation8], %s274
          %s276 = sand.u32 %s71, 1
          %s277 = smul.addr %s276, 7
          %s278 = scalar_lea.vmem [#allocation7], %s277
          %s280 = ssub.s32 112, 112
          %281 = vsyncadd %s275, %s280
          %s282 = smul.addr %s19, 7
          %s283 = smul.addr %s282, 16
          %s284 = scalar_lea.hbm %s2, %s283
          %s286 = sshll.u32 %s278, 4
          %s287 = int_to_ptr.vmem [resolvable:$true] %s286
          %289 = dma.hbm_to_vmem [thread:$0]  %s284, 112, %s287, %s275
        $region32: #{tpu_custom_call.1} parent=27 // pred_fallthru
          _
        // Predicated region
        $region33: #{tpu_custom_call.1} parent=27 // pred_check
          %p290 = pneg %p107
        $region34: #{tpu_custom_call.1} parent=27 // pred_check_branch
          %292 = sbr.rel (%p290) target = $region36
        $region35: #{tpu_custom_call.1} parent=27 // pred_region
          %p293 = scmp.lt.s32.totalorder %s19, 1
          %s294 = scalar_select %p293, %s19, 1
          %s295 = smul.addr %s294, 16
          %s296 = smul.addr %s295, 4
          %s297 = scalar_lea.vmem %s3, %s296
        $region36: #{tpu_custom_call.1} parent=27 // pred_fallthru
          _
        // Predicated region
        $region37: #{tpu_custom_call.1} parent=27 // pred_check
          %p298 = pneg %p133
        $region38: #{tpu_custom_call.1} parent=27 // pred_check_branch
          %300 = sbr.rel (%p298) target = $region40
        $region39: #{tpu_custom_call.1} parent=27 // pred_region
          %p301 = scmp.lt.s32.totalorder %s19, 1
          %s302 = scalar_select %p301, %s19, 1
          %s303 = smul.addr %s302, 8
          %s304 = smul.addr %s303, 4
          %s305 = scalar_lea.vmem %s4, %s304
        $region40: #{tpu_custom_call.1} parent=27 // pred_fallthru
          _
        // Predicated region
        $region41: #{tpu_custom_call.1} parent=27 // pred_check
          %p306 = pneg %p159
        $region42: #{tpu_custom_call.1} parent=27 // pred_check_branch
          %308 = sbr.rel (%p306) target = $region44
        $region43: #{tpu_custom_call.1} parent=27 // pred_region
          %p309 = scmp.lt.s32.totalorder %s19, 1
          %s310 = scalar_select %p309, %s19, 1
          %s311 = smul.addr %s310, 16
          %s312 = smul.addr %s311, 4
          %s313 = scalar_lea.vmem %s5, %s312
        $region44: #{tpu_custom_call.1} parent=27 // pred_fallthru
          _
        // Predicated region
        $region45: #{tpu_custom_call.1} parent=27 // pred_check
          %p314 = pneg %p185
        $region46: #{tpu_custom_call.1} parent=27 // pred_check_branch
          %316 = sbr.rel (%p314) target = $region48
        $region47: #{tpu_custom_call.1} parent=27 // pred_region
          %p317 = scmp.lt.s32.totalorder %s19, 1
          %s318 = scalar_select %p317, %s19, 1
          %s319 = smul.addr %s318, 32
          %s320 = smul.addr %s319, 4
          %s321 = scalar_lea.vmem %s6, %s320
        $region48: #{tpu_custom_call.1} parent=27 // pred_fallthru
          _
      $region28: #{tpu_custom_call.1} parent=5 // pred_fallthru
        _
      %p322 = scmp.le.s32.totalorder 1, %s19
      %p323 = scmp.lt.s32.totalorder %s19, 3
      %p324 = pnand %p322, %p323
      %p325 = pneg %p324
      // Predicated region
      $region49: #{tpu_custom_call.1} parent=5 // pred_check
        _
      $region50: #{tpu_custom_call.1} parent=5 // pred_check_branch
        %327 = sbr.rel (%p324) target = $region52
      $region51: #{tpu_custom_call.1} parent=5 // pred_region
        %s328 = ssub.s32 %s19, 1
        // Predicated region
        $region53: #{tpu_custom_call.1} parent=51 // pred_check
          %p329 = pneg %p61
        $region54: #{tpu_custom_call.1} parent=51 // pred_check_branch
          %331 = sbr.rel (%p329) target = $region56
        $region55: #{tpu_custom_call.1} parent=51 // pred_region
          %332 = dma.done [#allocation5], 512
        $region56: #{tpu_custom_call.1} parent=51 // pred_fallthru
          _
        %s333 = sand.u32 %s74, 1
        %s334 = scalar_lea.sflag [#allocation8], %s333
        %s335 = sand.u32 %s74, 1
        %s336 = smul.addr %s335, 7
        %s337 = scalar_lea.vmem [#allocation7], %s336
        // Predicated region
        $region57: #{tpu_custom_call.1} parent=51 // pred_check
          %p338 = pneg %p87
        $region58: #{tpu_custom_call.1} parent=51 // pred_check_branch
          %340 = sbr.rel (%p338) target = $region60
        $region59: #{tpu_custom_call.1} parent=51 // pred_region
          %341 = dma.done %s334, 112
        $region60: #{tpu_custom_call.1} parent=51 // pred_fallthru
          _
        %p342 = pneg %p40
        %p343 = pneg %p37
        %p344 = pneg %p61
        %p345 = pneg %p58
        %s346 = sand.u32 %s74, 1
        %s347 = scalar_lea.sflag [#allocation8], %s346
        %s348 = sand.u32 %s74, 1
        %s349 = smul.addr %s348, 7
        %s350 = scalar_lea.vmem [#allocation7], %s349
        %p351 = pneg %p87
        %p352 = pneg %p84
        %p353 = scmp.lt.s32.totalorder %s24, 1
        %s354 = scalar_select %p353, %s24, 1
        %s355 = smul.addr %s354, 16
        %s356 = smul.addr %s355, 4
        %s357 = scalar_lea.vmem %s3, %s356
        %p358 = pneg %p113
        %p359 = pneg %p110
        %p360 = scmp.lt.s32.totalorder %s24, 1
        %s361 = scalar_select %p360, %s24, 1
        %s362 = smul.addr %s361, 8
        %s363 = smul.addr %s362, 4
        %s364 = scalar_lea.vmem %s4, %s363
        %p365 = pneg %p139
        %p366 = pneg %p136
        %p367 = scmp.lt.s32.totalorder %s24, 1
        %s368 = scalar_select %p367, %s24, 1
        %s369 = smul.addr %s368, 16
        %s370 = smul.addr %s369, 4
        %s371 = scalar_lea.vmem %s5, %s370
        %p372 = pneg %p165
        %p373 = pneg %p162
        %p374 = scmp.lt.s32.totalorder %s24, 1
        %s375 = scalar_select %p374, %s24, 1
        %s376 = smul.addr %s375, 32
        %s377 = smul.addr %s376, 4
        %s378 = scalar_lea.vmem %s6, %s377
        %p379 = pneg %p191
        %p380 = pneg %p188
        %p381 = pneg %p212
        %p382 = pneg %p209
        %p383 = pneg %p233
        %p384 = pneg %p230
        %p385 = scmp.lt.s32.totalorder %s24, 1
        %s386 = scalar_select %p385, %s24, 1
        %s387 = smul.addr %s386, 16
        %s388 = smul.addr %s387, 4
        %s389 = scalar_lea.vmem %s3, %s388
        %p390 = scmp.lt.s32.totalorder %s24, 1
        %s391 = scalar_select %p390, %s24, 1
        %s392 = smul.addr %s391, 8
        %s393 = smul.addr %s392, 4
        %s394 = scalar_lea.vmem %s4, %s393
        %p395 = scmp.lt.s32.totalorder %s24, 1
        %s396 = scalar_select %p395, %s24, 1
        %s397 = smul.addr %s396, 16
        %s398 = smul.addr %s397, 4
        %s399 = scalar_lea.vmem %s5, %s398
        %p400 = scmp.lt.s32.totalorder %s24, 1
        %s401 = scalar_select %p400, %s24, 1
        %s402 = smul.addr %s401, 32
        %s403 = smul.addr %s402, 4
        %s404 = scalar_lea.vmem %s6, %s403
        %p406 = scmp.eq.s32.totalorder %s24, 0
        // Predicated region
        $region61: #{tpu_custom_call.1} parent=51 // pred_check
          %p407 = pneg %p406
        $region62: #{tpu_custom_call.1} parent=51 // pred_check_branch
          %409 = sbr.rel (%p407) target = $region64
        $region63: #{tpu_custom_call.1} parent=51 // pred_region
          %v410 = vld [vmem:[%s0] sm:$0xff]
          %v411 = vld [vmem:[%s0 + $0x8] sm:$0xff]
          %v412 = vld [vmem:[%s0 + $0x10] sm:$0xff]
          %v413 = vld [vmem:[%s0 + $0x18] sm:$0xff]
          %v414 = vld [vmem:[%s0 + $0x20] sm:$0xff]
          %v415 = vld [vmem:[%s0 + $0x28] sm:$0xff]
          %v416 = vld [vmem:[%s0 + $0x30] sm:$0xff]
          %v417 = vld [vmem:[%s0 + $0x38] sm:$0xff]
          %vm418 = vcmask 523264
          %419 = vst.msk [vmem:[#allocation2] sm:$0xff] %vm418, %v410
          %420 = vst.msk [vmem:[#allocation2 + $0x8] sm:$0xff] %vm418, %v411
          %421 = vst.msk [vmem:[#allocation2 + $0x10] sm:$0xff] %vm418, %v412
          %422 = vst.msk [vmem:[#allocation2 + $0x18] sm:$0xff] %vm418, %v413
          %423 = vst.msk [vmem:[#allocation2 + $0x20] sm:$0xff] %vm418, %v414
          %424 = vst.msk [vmem:[#allocation2 + $0x28] sm:$0xff] %vm418, %v415
          %425 = vst.msk [vmem:[#allocation2 + $0x30] sm:$0xff] %vm418, %v416
          %426 = vst.msk [vmem:[#allocation2 + $0x38] sm:$0xff] %vm418, %v417
        $region64: #{tpu_custom_call.1} parent=51 // pred_fallthru
          _
        %v427 = vld [vmem:[#allocation2] sm:$0xff]
        %v428 = vld [vmem:[#allocation2 + $0x8] sm:$0xff]
        %v429 = vld [vmem:[#allocation2 + $0x10] sm:$0xff]
        %v430 = vld [vmem:[#allocation2 + $0x18] sm:$0xff]
        %v431 = vld [vmem:[#allocation2 + $0x20] sm:$0xff]
        %v432 = vld [vmem:[#allocation2 + $0x28] sm:$0xff]
        %v433 = vld [vmem:[#allocation2 + $0x30] sm:$0xff]
        %v434 = vld [vmem:[#allocation2 + $0x38] sm:$0xff]
        %v435 = vld [vmem:[%s337] sm:$0x1]
        %v436 = vld [vmem:[%s337 + $0x1] sm:$0x1]
        %v437 = vld [vmem:[%s337 + $0x2] sm:$0x1]
        %v438 = vld [vmem:[%s337 + $0x3] sm:$0x3]
        %v439 = vld [vmem:[%s337 + $0x4] sm:$0x7]
        %vm440 = vcmask 523264
        %v441 = vsel %vm440, %v427, 0.0
        %442 = vadd.xlane.f32.xlu0 %v441
        %v443 = vpop.xlane.xlu0 %442
        %v444 = vsel %vm440, %v428, 0.0
        %445 = vadd.xlane.f32.xlu0 %v444
        %v446 = vpop.xlane.xlu0 %445
        %v447 = vsel %vm440, %v429, 0.0
        %448 = vadd.xlane.f32.xlu0 %v447
        %v449 = vpop.xlane.xlu0 %448
        %v450 = vsel %vm440, %v430, 0.0
        %451 = vadd.xlane.f32.xlu0 %v450
        %v452 = vpop.xlane.xlu0 %451
        %v453 = vsel %vm440, %v431, 0.0
        %454 = vadd.xlane.f32.xlu0 %v453
        %v455 = vpop.xlane.xlu0 %454
        %v456 = vsel %vm440, %v432, 0.0
        %457 = vadd.xlane.f32.xlu0 %v456
        %v458 = vpop.xlane.xlu0 %457
        %v459 = vsel %vm440, %v433, 0.0
        %460 = vadd.xlane.f32.xlu0 %v459
        %v461 = vpop.xlane.xlu0 %460
        %v462 = vsel %vm440, %v434, 0.0
        %463 = vadd.xlane.f32.xlu0 %v462
        %v464 = vpop.xlane.xlu0 %463
        %v465 = vrcp.pop 64.0
        %v466 = vmul.f32 %v443, %v465
        %v467 = vmul.f32 %v446, %v465
        %v468 = vmul.f32 %v449, %v465
        %v469 = vmul.f32 %v452, %v465
        %v470 = vmul.f32 %v455, %v465
        %v471 = vmul.f32 %v458, %v465
        %v472 = vmul.f32 %v461, %v465
        %v473 = vmul.f32 %v464, %v465
        %v474 = vsub.f32 %v427, %v466
        %v475 = vsub.f32 %v428, %v467
        %v476 = vsub.f32 %v429, %v468
        %v477 = vsub.f32 %v430, %v469
        %v478 = vsub.f32 %v431, %v470
        %v479 = vsub.f32 %v432, %v471
        %v480 = vsub.f32 %v433, %v472
        %v481 = vsub.f32 %v434, %v473
        %v482 = vmul.f32 %v474, %v474
        %v483 = vmul.f32 %v475, %v475
        %v484 = vmul.f32 %v476, %v476
        %v485 = vmul.f32 %v477, %v477
        %v486 = vmul.f32 %v478, %v478
        %v487 = vmul.f32 %v479, %v479
        %v488 = vmul.f32 %v480, %v480
        %v489 = vmul.f32 %v481, %v481
        %v490 = vsel %vm440, %v482, 0.0
        %491 = vadd.xlane.f32.xlu0 %v490
        %v492 = vpop.xlane.xlu0 %491
        %v493 = vsel %vm440, %v483, 0.0
        %494 = vadd.xlane.f32.xlu0 %v493
        %v495 = vpop.xlane.xlu0 %494
        %v496 = vsel %vm440, %v484, 0.0
        %497 = vadd.xlane.f32.xlu0 %v496
        %v498 = vpop.xlane.xlu0 %497
        %v499 = vsel %vm440, %v485, 0.0
        %500 = vadd.xlane.f32.xlu0 %v499
        %v501 = vpop.xlane.xlu0 %500
        %v502 = vsel %vm440, %v486, 0.0
        %503 = vadd.xlane.f32.xlu0 %v502
        %v504 = vpop.xlane.xlu0 %503
        %v505 = vsel %vm440, %v487, 0.0
        %506 = vadd.xlane.f32.xlu0 %v505
        %v507 = vpop.xlane.xlu0 %506
        %v508 = vsel %vm440, %v488, 0.0
        %509 = vadd.xlane.f32.xlu0 %v508
        %v510 = vpop.xlane.xlu0 %509
        %v511 = vsel %vm440, %v489, 0.0
        %512 = vadd.xlane.f32.xlu0 %v511
        %v513 = vpop.xlane.xlu0 %512
        %v514 = vmul.f32 %v492, %v465
        %v515 = vmul.f32 %v495, %v465
        %v516 = vmul.f32 %v498, %v465
        %v517 = vmul.f32 %v501, %v465
        %v518 = vmul.f32 %v504, %v465
        %v519 = vmul.f32 %v507, %v465
        %v520 = vmul.f32 %v510, %v465
        %v521 = vmul.f32 %v513, %v465
        %v522 = vadd.f32 %v514, 1e-05
        %v523 = vadd.f32 %v515, 1e-05
        %v524 = vadd.f32 %v516, 1e-05
        %v525 = vadd.f32 %v517, 1e-05
        %v526 = vadd.f32 %v518, 1e-05
        %v527 = vadd.f32 %v519, 1e-05
        %v528 = vadd.f32 %v520, 1e-05
        %v529 = vadd.f32 %v521, 1e-05
        %v530 = vrsqrt.pop %v522
        %v531 = vrsqrt.pop %v523
        %v532 = vrsqrt.pop %v524
        %v533 = vrsqrt.pop %v525
        %v534 = vrsqrt.pop %v526
        %v535 = vrsqrt.pop %v527
        %v536 = vrsqrt.pop %v528
        %v537 = vrsqrt.pop %v529
        %v538 = vmul.f32 %v474, %v530
        %v539 = vmul.f32 %v475, %v531
        %v540 = vmul.f32 %v476, %v532
        %v541 = vmul.f32 %v477, %v533
        %v542 = vmul.f32 %v478, %v534
        %v543 = vmul.f32 %v479, %v535
        %v544 = vmul.f32 %v480, %v536
        %v545 = vmul.f32 %v481, %v537
        %v547 = vlaneseq
        %v548 = vshrl.u32 %v547, 7
        %v549 = vsub.s32 0, %v548
        %v550 = vrot.slane %v435, %v549
        %v552 = vmul.f32 %v538, %v550
        %v553 = vmul.f32 %v539, %v550
        %v554 = vmul.f32 %v540, %v550
        %v555 = vmul.f32 %v541, %v550
        %v556 = vmul.f32 %v542, %v550
        %v557 = vmul.f32 %v543, %v550
        %v558 = vmul.f32 %v544, %v550
        %v559 = vmul.f32 %v545, %v550
        %560 = vrot.lane.b32.xlu0 %v550, 64
        %v561 = vpop.permute.xlu0 %560
        %v563 = vadd.f32 %v552, %v561
        %v564 = vadd.f32 %v553, %v561
        %v565 = vadd.f32 %v554, %v561
        %v566 = vadd.f32 %v555, %v561
        %v567 = vadd.f32 %v556, %v561
        %v568 = vadd.f32 %v557, %v561
        %v569 = vadd.f32 %v558, %v561
        %v570 = vadd.f32 %v559, %v561
        %v571 = vpack.c.bf16 %v564, %v563
        %v572 = vpack.c.bf16 %v566, %v565
        %v573 = vpack.c.bf16 %v568, %v567
        %v574 = vpack.c.bf16 %v570, %v569
        %v575 = vld [vmem:[%s389] sm:$0xff]
        %v576 = vld [vmem:[%s389 + $0x8] sm:$0xff]
        %v577 = vld [vmem:[%s389 + $0x10] sm:$0xff]
        %v578 = vld [vmem:[%s389 + $0x18] sm:$0xff]
        %v579 = vld [vmem:[%s389 + $0x20] sm:$0xff]
        %v580 = vld [vmem:[%s389 + $0x28] sm:$0xff]
        %v581 = vld [vmem:[%s389 + $0x30] sm:$0xff]
        %v582 = vld [vmem:[%s389 + $0x38] sm:$0xff]
        %v584 = vlaneseq
        %v585 = vshrl.u32 %v584, 7
        %v586 = vsub.s32 0, %v585
        %v587 = vrot.slane %v438, %v586
        %v588 = vlaneseq
        %v589 = vshrl.u32 %v588, 7
        %v590 = vsub.s32 1, %v589
        %v591 = vrot.slane %v438, %v590
        %v602 = vunpack.c.l.b16 %v575
        %v603 = vunpack.c.h.b16 %v575
        %v604 = vunpack.c.l.b16 %v576
        %v605 = vunpack.c.h.b16 %v576
        %v606 = vunpack.c.l.b16 %v577
        %v607 = vunpack.c.h.b16 %v577
        %v608 = vunpack.c.l.b16 %v578
        %v609 = vunpack.c.h.b16 %v578
        %v610 = vunpack.c.l.b16 %v579
        %v611 = vunpack.c.h.b16 %v579
        %v612 = vunpack.c.l.b16 %v580
        %v613 = vunpack.c.h.b16 %v580
        %v614 = vunpack.c.l.b16 %v581
        %v615 = vunpack.c.h.b16 %v581
        %v616 = vunpack.c.l.b16 %v582
        %v617 = vunpack.c.h.b16 %v582
        %v618 = vpack.c.b16 %v604, %v602
        %v619 = vpack.c.b16 %v605, %v603
        %v620 = vpack.c.b16 %v608, %v606
        %v621 = vpack.c.b16 %v609, %v607
        %v622 = vpack.c.b16 %v612, %v610
        %v623 = vpack.c.b16 %v613, %v611
        %v624 = vpack.c.b16 %v616, %v614
        %v625 = vpack.c.b16 %v617, %v615
        %v635 = vsel %vm440, %v571, 0
        %v638 = vsel %vm440, %v572, 0
        %v641 = vsel %vm440, %v573, 0
        %v644 = vsel %vm440, %v574, 0
        %646 = vmatprep.subr.bf16.mxu0 %v619
        %647 = vmatpush1.bf16.msra.mxu0 %v618
        %648 = vmatprep.subr.bf16.mxu0 %v621
        %649 = vmatpush1.bf16.msra.mxu0 %v620
        %650 = vmatprep.subr.bf16.mxu0 %v623
        %651 = vmatpush1.bf16.msra.mxu0 %v622
        %652 = vmatprep.subr.bf16.mxu0 %v625
        %653 = vmatpush1.bf16.msra.mxu0 %v624
        %654 = vmatprep.subr.bf16.mxu0 0
        %655 = vmatpush1.bf16.msra.mxu0 0
        %656 = vmatprep.subr.bf16.mxu0 0
        %657 = vmatpush1.bf16.msra.mxu0 0
        %658 = vmatprep.subr.bf16.mxu0 0
        %659 = vmatpush1.bf16.msra.mxu0 0
        %660 = vmatprep.subr.bf16.mxu0 0
        %661 = vmatpush1.bf16.msra.mxu0 0
        %662 = vmatprep.subr.bf16.mxu0 0
        %663 = vmatpush1.bf16.msra.mxu0 0
        %664 = vmatprep.subr.bf16.mxu0 0
        %665 = vmatpush1.bf16.msra.mxu0 0
        %666 = vmatprep.subr.bf16.mxu0 0
        %667 = vmatpush1.bf16.msra.mxu0 0
        %668 = vmatprep.subr.bf16.mxu0 0
        %669 = vmatpush1.bf16.msra.mxu0 0
        %670 = vmatprep.subr.bf16.mxu0 0
        %671 = vmatpush1.bf16.msra.mxu0 0
        %672 = vmatprep.subr.bf16.mxu0 0
        %673 = vmatpush1.bf16.msra.mxu0 0
        %674 = vmatprep.subr.bf16.mxu0 0
        %675 = vmatpush1.bf16.msra.mxu0 0
        %676 = vmatprep.subr.bf16.mxu0 0
        %677 = vmatpush1.bf16.msra.mxu0 0
        %678 = vmatprep.mubr.bf16.mxu0 0
        %679 = vmatmul.mubr.bf16.gmra.mrb[0].mxu0 %v635
        %v680 = vpop.f32.mrb[0].mxu0
        %v681 = vadd.f32 %v587, %v680
        %v682 = vpop.f32.mrb[0].mxu0
        %v683 = vadd.f32 %v591, %v682
        %v684 = vpop.f32.mrb[0].mxu0
        %v685 = vadd.f32 %v587, %v684
        %v686 = vpop.f32.mrb[0].mxu0
        %v687 = vadd.f32 %v591, %v686
        %688 = vmatprep.mubr.bf16.mxu0 0
        %689 = vmatmul.mubr.bf16.gmra.mrb[0].mxu0 %v638
        %v690 = vpop.f32.mrb[0].mxu0
        %v691 = vadd.f32 %v587, %v690
        %v692 = vpop.f32.mrb[0].mxu0
        %v693 = vadd.f32 %v591, %v692
        %v694 = vpop.f32.mrb[0].mxu0
        %v695 = vadd.f32 %v587, %v694
        %v696 = vpop.f32.mrb[0].mxu0
        %v697 = vadd.f32 %v591, %v696
        %698 = vmatprep.mubr.bf16.mxu0 0
        %699 = vmatmul.mubr.bf16.gmra.mrb[0].mxu0 %v641
        %v700 = vpop.f32.mrb[0].mxu0
        %v701 = vadd.f32 %v587, %v700
        %v702 = vpop.f32.mrb[0].mxu0
        %v703 = vadd.f32 %v591, %v702
        %v704 = vpop.f32.mrb[0].mxu0
        %v705 = vadd.f32 %v587, %v704
        %v706 = vpop.f32.mrb[0].mxu0
        %v707 = vadd.f32 %v591, %v706
        %708 = vmatprep.mubr.bf16.mxu0 0
        %709 = vmatmul.mubr.bf16.gmra.mrb[0].mxu0 %v644
        %v710 = vpop.f32.mrb[0].mxu0
        %v711 = vadd.f32 %v587, %v710
        %v712 = vpop.f32.mrb[0].mxu0
        %v713 = vadd.f32 %v591, %v712
        %v714 = vpop.f32.mrb[0].mxu0
        %v715 = vadd.f32 %v587, %v714
        %v716 = vpop.f32.mrb[0].mxu0
        %v717 = vadd.f32 %v591, %v716
        %718 = vdwg.mxu0
        %v719 = vpack.c.bf16 %v685, %v681
        %v720 = vpack.c.bf16 %v687, %v683
        %v721 = vpack.c.bf16 %v695, %v691
        %v722 = vpack.c.bf16 %v697, %v693
        %v723 = vpack.c.bf16 %v705, %v701
        %v724 = vpack.c.bf16 %v707, %v703
        %v725 = vpack.c.bf16 %v715, %v711
        %v726 = vpack.c.bf16 %v717, %v713
        %v727 = vld [vmem:[#allocation4] sm:$0xff]
        %v728 = vld [vmem:[#allocation4 + $0x8] sm:$0xff]
        %v729 = vld [vmem:[#allocation4 + $0x10] sm:$0xff]
        %v730 = vld [vmem:[#allocation4 + $0x18] sm:$0xff]
        %733 = vrot.lane.b32.xlu0 %v719, 64
        %v734 = vpop.permute.xlu0 %733
        %735 = vrot.lane.b32.xlu0 %v721, 64
        %v736 = vpop.permute.xlu0 %735
        %vm737 = vcmask 130048
        %v739 = vsel %vm737, %v719, 0
        %v742 = vsel %vm737, %v721, 0
        %v745 = vsel %vm737, %v734, 0
        %v748 = vsel %vm737, %v736, 0
        %750 = vmatprep.subr.bf16.mxu0 0
        %751 = vmatpush1.bf16.xpose.msra.mxu0 %v745
        %752 = vmatprep.subr.bf16.mxu0 0
        %753 = vmatpush1.bf16.xpose.msra.mxu0 %v748
        %754 = vmatprep.subr.bf16.mxu0 0
        %755 = vmatpush1.bf16.xpose.msra.mxu0 0
        %756 = vmatprep.subr.bf16.mxu0 0
        %757 = vmatpush1.bf16.xpose.msra.mxu0 0
        %758 = vmatprep.subr.bf16.mxu0 0
        %759 = vmatpush1.bf16.xpose.msra.mxu0 0
        %760 = vmatprep.subr.bf16.mxu0 0
        %761 = vmatpush1.bf16.xpose.msra.mxu0 0
        %762 = vmatprep.subr.bf16.mxu0 0
        %763 = vmatpush1.bf16.xpose.msra.mxu0 0
        %764 = vmatprep.subr.bf16.mxu0 0
        %765 = vmatpush1.bf16.xpose.msra.mxu0 0
        %766 = vmatprep.subr.bf16.mxu0 0
        %767 = vmatpush1.bf16.xpose.msra.mxu0 0
        %768 = vmatprep.subr.bf16.mxu0 0
        %769 = vmatpush1.bf16.xpose.msra.mxu0 0
        %770 = vmatprep.subr.bf16.mxu0 0
        %771 = vmatpush1.bf16.xpose.msra.mxu0 0
        %772 = vmatprep.subr.bf16.mxu0 0
        %773 = vmatpush1.bf16.xpose.msra.mxu0 0
        %774 = vmatprep.subr.bf16.mxu0 0
        %775 = vmatpush1.bf16.xpose.msra.mxu0 0
        %776 = vmatprep.subr.bf16.mxu0 0
        %777 = vmatpush1.bf16.xpose.msra.mxu0 0
        %778 = vmatprep.subr.bf16.mxu0 0
        %779 = vmatpush1.bf16.xpose.msra.mxu0 0
        %780 = vmatprep.subr.bf16.mxu0 0
        %781 = vmatpush1.bf16.xpose.msra.mxu0 0
        %782 = vmatprep.mubr.bf16.mxu0 0
        %783 = vmatmul.mubr.bf16.gmra.mrb[0].mxu0 %v739
        %v784 = vpop.f32.mrb[0].mxu0
        %v785 = vadd.f32 %v727, %v784
        %v786 = vpop.f32.mrb[0].mxu0
        %v787 = vpop.f32.mrb[0].mxu0
        %v788 = vadd.f32 %v728, %v787
        %v789 = vpop.f32.mrb[0].mxu0
        %790 = vmatprep.mubr.bf16.mxu0 0
        %791 = vmatmul.mubr.bf16.gmra.mrb[0].mxu0 %v742
        %v792 = vpop.f32.mrb[0].mxu0
        %v793 = vadd.f32 %v729, %v792
        %v794 = vpop.f32.mrb[0].mxu0
        %v795 = vpop.f32.mrb[0].mxu0
        %v796 = vadd.f32 %v730, %v795
        %v797 = vpop.f32.mrb[0].mxu0
        %798 = vdwg.mxu0
        %vm799 = vcmask 261120
        %v800 = vsel %vm799, %v785, -inf
        %801 = vmax.xlane.f32.xlu0 %v800
        %v802 = vpop.xlane.xlu0 %801
        %v803 = vsel %vm799, %v788, -inf
        %804 = vmax.xlane.f32.xlu0 %v803
        %v805 = vpop.xlane.xlu0 %804
        %v806 = vsel %vm799, %v793, -inf
        %807 = vmax.xlane.f32.xlu0 %v806
        %v808 = vpop.xlane.xlu0 %807
        %v809 = vsel %vm799, %v796, -inf
        %810 = vmax.xlane.f32.xlu0 %v809
        %v811 = vpop.xlane.xlu0 %810
        %v812 = vsub.f32 %v785, %v802
        %v813 = vsub.f32 %v788, %v805
        %v814 = vsub.f32 %v793, %v808
        %v815 = vsub.f32 %v796, %v811
        %v816 = vmul.f32 %v812, 1.442695
        %v817 = vpow.pop %v816
        %v818 = vmul.f32 %v813, 1.442695
        %v819 = vpow.pop %v818
        %v820 = vmul.f32 %v814, 1.442695
        %v821 = vpow.pop %v820
        %v822 = vmul.f32 %v815, 1.442695
        %v823 = vpow.pop %v822
        %v824 = vsel %vm799, %v817, 0.0
        %825 = vadd.xlane.f32.xlu0 %v824
        %v826 = vpop.xlane.xlu0 %825
        %v827 = vsel %vm799, %v819, 0.0
        %828 = vadd.xlane.f32.xlu0 %v827
        %v829 = vpop.xlane.xlu0 %828
        %v830 = vsel %vm799, %v821, 0.0
        %831 = vadd.xlane.f32.xlu0 %v830
        %v832 = vpop.xlane.xlu0 %831
        %v833 = vsel %vm799, %v823, 0.0
        %834 = vadd.xlane.f32.xlu0 %v833
        %v835 = vpop.xlane.xlu0 %834
        %v836 = vrcp.pop %v826
        %v837 = vrcp.pop %v829
        %v838 = vrcp.pop %v832
        %v839 = vrcp.pop %v835
        %v840 = vmul.f32 %v817, %v836
        %v841 = vmul.f32 %v819, %v837
        %v842 = vmul.f32 %v821, %v838
        %v843 = vmul.f32 %v823, %v839
        %v844 = vpack.c.bf16 %v841, %v840
        %v845 = vpack.c.bf16 %v843, %v842
        %v847 = vsel %vm799, %v844, 0
        %v850 = vsel %vm799, %v845, 0
        %852 = vmatprep.subr.bf16.mxu0 0
        %853 = vmatpush1.bf16.msra.mxu0 %v720
        %854 = vmatprep.subr.bf16.mxu0 0
        %855 = vmatpush1.bf16.msra.mxu0 %v722
        %856 = vmatprep.subr.bf16.mxu0 0
        %857 = vmatpush1.bf16.msra.mxu0 0
        %858 = vmatprep.subr.bf16.mxu0 0
        %859 = vmatpush1.bf16.msra.mxu0 0
        %860 = vmatprep.subr.bf16.mxu0 0
        %861 = vmatpush1.bf16.msra.mxu0 0
        %862 = vmatprep.subr.bf16.mxu0 0
        %863 = vmatpush1.bf16.msra.mxu0 0
        %864 = vmatprep.subr.bf16.mxu0 0
        %865 = vmatpush1.bf16.msra.mxu0 0
        %866 = vmatprep.subr.bf16.mxu0 0
        %867 = vmatpush1.bf16.msra.mxu0 0
        %868 = vmatprep.subr.bf16.mxu0 0
        %869 = vmatpush1.bf16.msra.mxu0 0
        %870 = vmatprep.subr.bf16.mxu0 0
        %871 = vmatpush1.bf16.msra.mxu0 0
        %872 = vmatprep.subr.bf16.mxu0 0
        %873 = vmatpush1.bf16.msra.mxu0 0
        %874 = vmatprep.subr.bf16.mxu0 0
        %875 = vmatpush1.bf16.msra.mxu0 0
        %876 = vmatprep.subr.bf16.mxu0 0
        %877 = vmatpush1.bf16.msra.mxu0 0
        %878 = vmatprep.subr.bf16.mxu0 0
        %879 = vmatpush1.bf16.msra.mxu0 0
        %880 = vmatprep.subr.bf16.mxu0 0
        %881 = vmatpush1.bf16.msra.mxu0 0
        %882 = vmatprep.subr.bf16.mxu0 0
        %883 = vmatpush1.bf16.msra.mxu0 0
        %884 = vmatprep.mubr.bf16.mxu0 0
        %885 = vmatmul.mubr.bf16.gmra.mrb[0].mxu0 %v847
        %v886 = vpop.f32.mrb[0].mxu0
        %v887 = vadd.f32 0.0, %v886
        %v888 = vpop.f32.mrb[0].mxu0
        %v889 = vpop.f32.mrb[0].mxu0
        %v890 = vadd.f32 0.0, %v889
        %v891 = vpop.f32.mrb[0].mxu0
        %892 = vmatprep.mubr.bf16.mxu0 0
        %893 = vmatmul.mubr.bf16.gmra.mrb[0].mxu0 %v850
        %v894 = vpop.f32.mrb[0].mxu0
        %v895 = vadd.f32 0.0, %v894
        %v896 = vpop.f32.mrb[0].mxu0
        %v897 = vpop.f32.mrb[0].mxu0
        %v898 = vadd.f32 0.0, %v897
        %v899 = vpop.f32.mrb[0].mxu0
        %900 = vdwg.mxu0
        %v901 = vpack.c.bf16 %v890, %v887
        %v902 = vpack.c.bf16 %v898, %v895
        %903 = vst.msk [vmem:[#allocation3] sm:$0xff] %vm737, %v901
        %904 = vst.msk [vmem:[#allocation3 + $0x8] sm:$0xff] %vm737, %v902
        %905 = vrot.lane.b32.xlu0 %v719, 112
        %v906 = vpop.permute.xlu0 %905
        %907 = vrot.lane.b32.xlu0 %v721, 112
        %v908 = vpop.permute.xlu0 %907
        %909 = vrot.lane.b32.xlu0 %v719, 48
        %v910 = vpop.permute.xlu0 %909
        %911 = vrot.lane.b32.xlu0 %v721, 48
        %v912 = vpop.permute.xlu0 %911
        %v914 = vsel %vm737, %v906, 0
        %v917 = vsel %vm737, %v908, 0
        %v920 = vsel %vm737, %v910, 0
        %v923 = vsel %vm737, %v912, 0
        %925 = vmatprep.subr.bf16.mxu0 0
        %926 = vmatpush1.bf16.xpose.msra.mxu0 %v920
        %927 = vmatprep.subr.bf16.mxu0 0
        %928 = vmatpush1.bf16.xpose.msra.mxu0 %v923
        %929 = vmatprep.subr.bf16.mxu0 0
        %930 = vmatpush1.bf16.xpose.msra.mxu0 0
        %931 = vmatprep.subr.bf16.mxu0 0
        %932 = vmatpush1.bf16.xpose.msra.mxu0 0
        %933 = vmatprep.subr.bf16.mxu0 0
        %934 = vmatpush1.bf16.xpose.msra.mxu0 0
        %935 = vmatprep.subr.bf16.mxu0 0
        %936 = vmatpush1.bf16.xpose.msra.mxu0 0
        %937 = vmatprep.subr.bf16.mxu0 0
        %938 = vmatpush1.bf16.xpose.msra.mxu0 0
        %939 = vmatprep.subr.bf16.mxu0 0
        %940 = vmatpush1.bf16.xpose.msra.mxu0 0
        %941 = vmatprep.subr.bf16.mxu0 0
        %942 = vmatpush1.bf16.xpose.msra.mxu0 0
        %943 = vmatprep.subr.bf16.mxu0 0
        %944 = vmatpush1.bf16.xpose.msra.mxu0 0
        %945 = vmatprep.subr.bf16.mxu0 0
        %946 = vmatpush1.bf16.xpose.msra.mxu0 0
        %947 = vmatprep.subr.bf16.mxu0 0
        %948 = vmatpush1.bf16.xpose.msra.mxu0 0
        %949 = vmatprep.subr.bf16.mxu0 0
        %950 = vmatpush1.bf16.xpose.msra.mxu0 0
        %951 = vmatprep.subr.bf16.mxu0 0
        %952 = vmatpush1.bf16.xpose.msra.mxu0 0
        %953 = vmatprep.subr.bf16.mxu0 0
        %954 = vmatpush1.bf16.xpose.msra.mxu0 0
        %955 = vmatprep.subr.bf16.mxu0 0
        %956 = vmatpush1.bf16.xpose.msra.mxu0 0
        %957 = vmatprep.mubr.bf16.mxu0 0
        %958 = vmatmul.mubr.bf16.gmra.mrb[0].mxu0 %v914
        %v959 = vpop.f32.mrb[0].mxu0
        %v960 = vadd.f32 %v727, %v959
        %v961 = vpop.f32.mrb[0].mxu0
        %v962 = vpop.f32.mrb[0].mxu0
        %v963 = vadd.f32 %v728, %v962
        %v964 = vpop.f32.mrb[0].mxu0
        %965 = vmatprep.mubr.bf16.mxu0 0
        %966 = vmatmul.mubr.bf16.gmra.mrb[0].mxu0 %v917
        %v967 = vpop.f32.mrb[0].mxu0
        %v968 = vadd.f32 %v729, %v967
        %v969 = vpop.f32.mrb[0].mxu0
        %v970 = vpop.f32.mrb[0].mxu0
        %v971 = vadd.f32 %v730, %v970
        %v972 = vpop.f32.mrb[0].mxu0
        %973 = vdwg.mxu0
        %v974 = vsel %vm799, %v960, -inf
        %975 = vmax.xlane.f32.xlu0 %v974
        %v976 = vpop.xlane.xlu0 %975
        %v977 = vsel %vm799, %v963, -inf
        %978 = vmax.xlane.f32.xlu0 %v977
        %v979 = vpop.xlane.xlu0 %978
        %v980 = vsel %vm799, %v968, -inf
        %981 = vmax.xlane.f32.xlu0 %v980
        %v982 = vpop.xlane.xlu0 %981
        %v983 = vsel %vm799, %v971, -inf
        %984 = vmax.xlane.f32.xlu0 %v983
        %v985 = vpop.xlane.xlu0 %984
        %v986 = vsub.f32 %v960, %v976
        %v987 = vsub.f32 %v963, %v979
        %v988 = vsub.f32 %v968, %v982
        %v989 = vsub.f32 %v971, %v985
        %v990 = vmul.f32 %v986, 1.442695
        %v991 = vpow.pop %v990
        %v992 = vmul.f32 %v987, 1.442695
        %v993 = vpow.pop %v992
        %v994 = vmul.f32 %v988, 1.442695
        %v995 = vpow.pop %v994
        %v996 = vmul.f32 %v989, 1.442695
        %v997 = vpow.pop %v996
        %v998 = vsel %vm799, %v991, 0.0
        %999 = vadd.xlane.f32.xlu0 %v998
        %v1000 = vpop.xlane.xlu0 %999
        %v1001 = vsel %vm799, %v993, 0.0
        %1002 = vadd.xlane.f32.xlu0 %v1001
        %v1003 = vpop.xlane.xlu0 %1002
        %v1004 = vsel %vm799, %v995, 0.0
        %1005 = vadd.xlane.f32.xlu0 %v1004
        %v1006 = vpop.xlane.xlu0 %1005
        %v1007 = vsel %vm799, %v997, 0.0
        %1008 = vadd.xlane.f32.xlu0 %v1007
        %v1009 = vpop.xlane.xlu0 %1008
        %v1010 = vrcp.pop %v1000
        %v1011 = vrcp.pop %v1003
        %v1012 = vrcp.pop %v1006
        %v1013 = vrcp.pop %v1009
        %v1014 = vmul.f32 %v991, %v1010
        %v1015 = vmul.f32 %v993, %v1011
        %v1016 = vmul.f32 %v995, %v1012
        %v1017 = vmul.f32 %v997, %v1013
        %v1018 = vpack.c.bf16 %v1015, %v1014
        %v1019 = vpack.c.bf16 %v1017, %v1016
        %1022 = vrot.lane.b32.xlu0 %v720, 112
        %v1023 = vpop.permute.xlu0 %1022
        %1024 = vrot.lane.b32.xlu0 %v722, 112
        %v1025 = vpop.permute.xlu0 %1024
        %v1029 = vsel %vm799, %v1018, 0
        %v1032 = vsel %vm799, %v1019, 0
        %1034 = vmatprep.subr.bf16.mxu0 0
        %1035 = vmatpush1.bf16.msra.mxu0 %v1023
        %1036 = vmatprep.subr.bf16.mxu0 0
        %1037 = vmatpush1.bf16.msra.mxu0 %v1025
        %1038 = vmatprep.subr.bf16.mxu0 0
        %1039 = vmatpush1.bf16.msra.mxu0 0
        %1040 = vmatprep.subr.bf16.mxu0 0
        %1041 = vmatpush1.bf16.msra.mxu0 0
        %1042 = vmatprep.subr.bf16.mxu0 0
        %1043 = vmatpush1.bf16.msra.mxu0 0
        %1044 = vmatprep.subr.bf16.mxu0 0
        %1045 = vmatpush1.bf16.msra.mxu0 0
        %1046 = vmatprep.subr.bf16.mxu0 0
        %1047 = vmatpush1.bf16.msra.mxu0 0
        %1048 = vmatprep.subr.bf16.mxu0 0
        %1049 = vmatpush1.bf16.msra.mxu0 0
        %1050 = vmatprep.subr.bf16.mxu0 0
        %1051 = vmatpush1.bf16.msra.mxu0 0
        %1052 = vmatprep.subr.bf16.mxu0 0
        %1053 = vmatpush1.bf16.msra.mxu0 0
        %1054 = vmatprep.subr.bf16.mxu0 0
        %1055 = vmatpush1.bf16.msra.mxu0 0
        %1056 = vmatprep.subr.bf16.mxu0 0
        %1057 = vmatpush1.bf16.msra.mxu0 0
        %1058 = vmatprep.subr.bf16.mxu0 0
        %1059 = vmatpush1.bf16.msra.mxu0 0
        %1060 = vmatprep.subr.bf16.mxu0 0
        %1061 = vmatpush1.bf16.msra.mxu0 0
        %1062 = vmatprep.subr.bf16.mxu0 0
        %1063 = vmatpush1.bf16.msra.mxu0 0
        %1064 = vmatprep.subr.bf16.mxu0 0
        %1065 = vmatpush1.bf16.msra.mxu0 0
        %1066 = vmatprep.mubr.bf16.mxu0 0
        %1067 = vmatmul.mubr.bf16.gmra.mrb[0].mxu0 %v1029
        %v1068 = vpop.f32.mrb[0].mxu0
        %v1069 = vadd.f32 0.0, %v1068
        %v1070 = vpop.f32.mrb[0].mxu0
        %v1071 = vpop.f32.mrb[0].mxu0
        %v1072 = vadd.f32 0.0, %v1071
        %v1073 = vpop.f32.mrb[0].mxu0
        %1074 = vmatprep.mubr.bf16.mxu0 0
        %1075 = vmatmul.mubr.bf16.gmra.mrb[0].mxu0 %v1032
        %v1076 = vpop.f32.mrb[0].mxu0
        %v1077 = vadd.f32 0.0, %v1076
        %v1078 = vpop.f32.mrb[0].mxu0
        %v1079 = vpop.f32.mrb[0].mxu0
        %v1080 = vadd.f32 0.0, %v1079
        %v1081 = vpop.f32.mrb[0].mxu0
        %1082 = vdwg.mxu0
        %v1083 = vpack.c.bf16 %v1072, %v1069
        %v1084 = vpack.c.bf16 %v1080, %v1077
        %1087 = vrot.lane.b32.xlu0 %v1083, 16
        %v1088 = vpop.permute.xlu0 %1087
        %1089 = vrot.lane.b32.xlu0 %v1084, 16
        %v1090 = vpop.permute.xlu0 %1089
        %vm1093 = vcmask 261248
        %1094 = vst.msk [vmem:[#allocation3] sm:$0xff] %vm1093, %v1088
        %1095 = vst.msk [vmem:[#allocation3 + $0x8] sm:$0xff] %vm1093, %v1090
        %1096 = vrot.lane.b32.xlu0 %v719, 96
        %v1097 = vpop.permute.xlu0 %1096
        %1098 = vrot.lane.b32.xlu0 %v721, 96
        %v1099 = vpop.permute.xlu0 %1098
        %1100 = vrot.lane.b32.xlu0 %v719, 32
        %v1101 = vpop.permute.xlu0 %1100
        %1102 = vrot.lane.b32.xlu0 %v721, 32
        %v1103 = vpop.permute.xlu0 %1102
        %v1105 = vsel %vm737, %v1097, 0
        %v1108 = vsel %vm737, %v1099, 0
        %v1111 = vsel %vm737, %v1101, 0
        %v1114 = vsel %vm737, %v1103, 0
        %1116 = vmatprep.subr.bf16.mxu0 0
        %1117 = vmatpush1.bf16.xpose.msra.mxu0 %v1111
        %1118 = vmatprep.subr.bf16.mxu0 0
        %1119 = vmatpush1.bf16.xpose.msra.mxu0 %v1114
        %1120 = vmatprep.subr.bf16.mxu0 0
        %1121 = vmatpush1.bf16.xpose.msra.mxu0 0
        %1122 = vmatprep.subr.bf16.mxu0 0
        %1123 = vmatpush1.bf16.xpose.msra.mxu0 0
        %1124 = vmatprep.subr.bf16.mxu0 0
        %1125 = vmatpush1.bf16.xpose.msra.mxu0 0
        %1126 = vmatprep.subr.bf16.mxu0 0
        %1127 = vmatpush1.bf16.xpose.msra.mxu0 0
        %1128 = vmatprep.subr.bf16.mxu0 0
        %1129 = vmatpush1.bf16.xpose.msra.mxu0 0
        %1130 = vmatprep.subr.bf16.mxu0 0
        %1131 = vmatpush1.bf16.xpose.msra.mxu0 0
        %1132 = vmatprep.subr.bf16.mxu0 0
        %1133 = vmatpush1.bf16.xpose.msra.mxu0 0
        %1134 = vmatprep.subr.bf16.mxu0 0
        %1135 = vmatpush1.bf16.xpose.msra.mxu0 0
        %1136 = vmatprep.subr.bf16.mxu0 0
        %1137 = vmatpush1.bf16.xpose.msra.mxu0 0
        %1138 = vmatprep.subr.bf16.mxu0 0
        %1139 = vmatpush1.bf16.xpose.msra.mxu0 0
        %1140 = vmatprep.subr.bf16.mxu0 0
        %1141 = vmatpush1.bf16.xpose.msra.mxu0 0
        %1142 = vmatprep.subr.bf16.mxu0 0
        %1143 = vmatpush1.bf16.xpose.msra.mxu0 0
        %1144 = vmatprep.subr.bf16.mxu0 0
        %1145 = vmatpush1.bf16.xpose.msra.mxu0 0
        %1146 = vmatprep.subr.bf16.mxu0 0
        %1147 = vmatpush1.bf16.xpose.msra.mxu0 0
        %1148 = vmatprep.mubr.bf16.mxu0 0
        %1149 = vmatmul.mubr.bf16.gmra.mrb[0].mxu0 %v1105
        %v1150 = vpop.f32.mrb[0].mxu0
        %v1151 = vadd.f32 %v727, %v1150
        %v1152 = vpop.f32.mrb[0].mxu0
        %v1153 = vpop.f32.mrb[0].mxu0
        %v1154 = vadd.f32 %v728, %v1153
        %v1155 = vpop.f32.mrb[0].mxu0
        %1156 = vmatprep.mubr.bf16.mxu0 0
        %1157 = vmatmul.mubr.bf16.gmra.mrb[0].mxu0 %v1108
        %v1158 = vpop.f32.mrb[0].mxu0
        %v1159 = vadd.f32 %v729, %v1158
        %v1160 = vpop.f32.mrb[0].mxu0
        %v1161 = vpop.f32.mrb[0].mxu0
        %v1162 = vadd.f32 %v730, %v1161
        %v1163 = vpop.f32.mrb[0].mxu0
        %1164 = vdwg.mxu0
        %v1165 = vsel %vm799, %v1151, -inf
        %1166 = vmax.xlane.f32.xlu0 %v1165
        %v1167 = vpop.xlane.xlu0 %1166
        %v1168 = vsel %vm799, %v1154, -inf
        %1169 = vmax.xlane.f32.xlu0 %v1168
        %v1170 = vpop.xlane.xlu0 %1169
        %v1171 = vsel %vm799, %v1159, -inf
        %1172 = vmax.xlane.f32.xlu0 %v1171
        %v1173 = vpop.xlane.xlu0 %1172
        %v1174 = vsel %vm799, %v1162, -inf
        %1175 = vmax.xlane.f32.xlu0 %v1174
        %v1176 = vpop.xlane.xlu0 %1175
        %v1177 = vsub.f32 %v1151, %v1167
        %v1178 = vsub.f32 %v1154, %v1170
        %v1179 = vsub.f32 %v1159, %v1173
        %v1180 = vsub.f32 %v1162, %v1176
        %v1181 = vmul.f32 %v1177, 1.442695
        %v1182 = vpow.pop %v1181
        %v1183 = vmul.f32 %v1178, 1.442695
        %v1184 = vpow.pop %v1183
        %v1185 = vmul.f32 %v1179, 1.442695
        %v1186 = vpow.pop %v1185
        %v1187 = vmul.f32 %v1180, 1.442695
        %v1188 = vpow.pop %v1187
        %v1189 = vsel %vm799, %v1182, 0.0
        %1190 = vadd.xlane.f32.xlu0 %v1189
        %v1191 = vpop.xlane.xlu0 %1190
        %v1192 = vsel %vm799, %v1184, 0.0
        %1193 = vadd.xlane.f32.xlu0 %v1192
        %v1194 = vpop.xlane.xlu0 %1193
        %v1195 = vsel %vm799, %v1186, 0.0
        %1196 = vadd.xlane.f32.xlu0 %v1195
        %v1197 = vpop.xlane.xlu0 %1196
        %v1198 = vsel %vm799, %v1188, 0.0
        %1199 = vadd.xlane.f32.xlu0 %v1198
        %v1200 = vpop.xlane.xlu0 %1199
        %v1201 = vrcp.pop %v1191
        %v1202 = vrcp.pop %v1194
        %v1203 = vrcp.pop %v1197
        %v1204 = vrcp.pop %v1200
        %v1205 = vmul.f32 %v1182, %v1201
        %v1206 = vmul.f32 %v1184, %v1202
        %v1207 = vmul.f32 %v1186, %v1203
        %v1208 = vmul.f32 %v1188, %v1204
        %v1209 = vpack.c.bf16 %v1206, %v1205
        %v1210 = vpack.c.bf16 %v1208, %v1207
        %1211 = vrot.lane.b32.xlu0 %v720, 96
        %v1212 = vpop.permute.xlu0 %1211
        %1213 = vrot.lane.b32.xlu0 %v722, 96
        %v1214 = vpop.permute.xlu0 %1213
        %v1218 = vsel %vm799, %v1209, 0
        %v1221 = vsel %vm799, %v1210, 0
        %1223 = vmatprep.subr.bf16.mxu0 0
        %1224 = vmatpush1.bf16.msra.mxu0 %v1212
        %1225 = vmatprep.subr.bf16.mxu0 0
        %1226 = vmatpush1.bf16.msra.mxu0 %v1214
        %1227 = vmatprep.subr.bf16.mxu0 0
        %1228 = vmatpush1.bf16.msra.mxu0 0
        %1229 = vmatprep.subr.bf16.mxu0 0
        %1230 = vmatpush1.bf16.msra.mxu0 0
        %1231 = vmatprep.subr.bf16.mxu0 0
        %1232 = vmatpush1.bf16.msra.mxu0 0
        %1233 = vmatprep.subr.bf16.mxu0 0
        %1234 = vmatpush1.bf16.msra.mxu0 0
        %1235 = vmatprep.subr.bf16.mxu0 0
        %1236 = vmatpush1.bf16.msra.mxu0 0
        %1237 = vmatprep.subr.bf16.mxu0 0
        %1238 = vmatpush1.bf16.msra.mxu0 0
        %1239 = vmatprep.subr.bf16.mxu0 0
        %1240 = vmatpush1.bf16.msra.mxu0 0
        %1241 = vmatprep.subr.bf16.mxu0 0
        %1242 = vmatpush1.bf16.msra.mxu0 0
        %1243 = vmatprep.subr.bf16.mxu0 0
        %1244 = vmatpush1.bf16.msra.mxu0 0
        %1245 = vmatprep.subr.bf16.mxu0 0
        %1246 = vmatpush1.bf16.msra.mxu0 0
        %1247 = vmatprep.subr.bf16.mxu0 0
        %1248 = vmatpush1.bf16.msra.mxu0 0
        %1249 = vmatprep.subr.bf16.mxu0 0
        %1250 = vmatpush1.bf16.msra.mxu0 0
        %1251 = vmatprep.subr.bf16.mxu0 0
        %1252 = vmatpush1.bf16.msra.mxu0 0
        %1253 = vmatprep.subr.bf16.mxu0 0
        %1254 = vmatpush1.bf16.msra.mxu0 0
        %1255 = vmatprep.mubr.bf16.mxu0 0
        %1256 = vmatmul.mubr.bf16.gmra.mrb[0].mxu0 %v1218
        %v1257 = vpop.f32.mrb[0].mxu0
        %v1258 = vadd.f32 0.0, %v1257
        %v1259 = vpop.f32.mrb[0].mxu0
        %v1260 = vpop.f32.mrb[0].mxu0
        %v1261 = vadd.f32 0.0, %v1260
        %v1262 = vpop.f32.mrb[0].mxu0
        %1263 = vmatprep.mubr.bf16.mxu0 0
        %1264 = vmatmul.mubr.bf16.gmra.mrb[0].mxu0 %v1221
        %v1265 = vpop.f32.mrb[0].mxu0
        %v1266 = vadd.f32 0.0, %v1265
        %v1267 = vpop.f32.mrb[0].mxu0
        %v1268 = vpop.f32.mrb[0].mxu0
        %v1269 = vadd.f32 0.0, %v1268
        %v1270 = vpop.f32.mrb[0].mxu0
        %1271 = vdwg.mxu0
        %v1272 = vpack.c.bf16 %v1261, %v1258
        %v1273 = vpack.c.bf16 %v1269, %v1266
        %1276 = vrot.lane.b32.xlu0 %v1272, 32
        %v1277 = vpop.permute.xlu0 %1276
        %1278 = vrot.lane.b32.xlu0 %v1273, 32
        %v1279 = vpop.permute.xlu0 %1278
        %vm1282 = vcmask 392448
        %1283 = vst.msk [vmem:[#allocation3] sm:$0xff] %vm1282, %v1277
        %1284 = vst.msk [vmem:[#allocation3 + $0x8] sm:$0xff] %vm1282, %v1279
        %1285 = vrot.lane.b32.xlu0 %v719, 80
        %v1286 = vpop.permute.xlu0 %1285
        %1287 = vrot.lane.b32.xlu0 %v721, 80
        %v1288 = vpop.permute.xlu0 %1287
        %1289 = vrot.lane.b32.xlu0 %v719, 16
        %v1290 = vpop.permute.xlu0 %1289
        %1291 = vrot.lane.b32.xlu0 %v721, 16
        %v1292 = vpop.permute.xlu0 %1291
        %v1294 = vsel %vm737, %v1286, 0
        %v1297 = vsel %vm737, %v1288, 0
        %v1300 = vsel %vm737, %v1290, 0
        %v1303 = vsel %vm737, %v1292, 0
        %1305 = vmatprep.subr.bf16.mxu0 0
        %1306 = vmatpush1.bf16.xpose.msra.mxu0 %v1300
        %1307 = vmatprep.subr.bf16.mxu0 0
        %1308 = vmatpush1.bf16.xpose.msra.mxu0 %v1303
        %1309 = vmatprep.subr.bf16.mxu0 0
        %1310 = vmatpush1.bf16.xpose.msra.mxu0 0
        %1311 = vmatprep.subr.bf16.mxu0 0
        %1312 = vmatpush1.bf16.xpose.msra.mxu0 0
        %1313 = vmatprep.subr.bf16.mxu0 0
        %1314 = vmatpush1.bf16.xpose.msra.mxu0 0
        %1315 = vmatprep.subr.bf16.mxu0 0
        %1316 = vmatpush1.bf16.xpose.msra.mxu0 0
        %1317 = vmatprep.subr.bf16.mxu0 0
        %1318 = vmatpush1.bf16.xpose.msra.mxu0 0
        %1319 = vmatprep.subr.bf16.mxu0 0
        %1320 = vmatpush1.bf16.xpose.msra.mxu0 0
        %1321 = vmatprep.subr.bf16.mxu0 0
        %1322 = vmatpush1.bf16.xpose.msra.mxu0 0
        %1323 = vmatprep.subr.bf16.mxu0 0
        %1324 = vmatpush1.bf16.xpose.msra.mxu0 0
        %1325 = vmatprep.subr.bf16.mxu0 0
        %1326 = vmatpush1.bf16.xpose.msra.mxu0 0
        %1327 = vmatprep.subr.bf16.mxu0 0
        %1328 = vmatpush1.bf16.xpose.msra.mxu0 0
        %1329 = vmatprep.subr.bf16.mxu0 0
        %1330 = vmatpush1.bf16.xpose.msra.mxu0 0
        %1331 = vmatprep.subr.bf16.mxu0 0
        %1332 = vmatpush1.bf16.xpose.msra.mxu0 0
        %1333 = vmatprep.subr.bf16.mxu0 0
        %1334 = vmatpush1.bf16.xpose.msra.mxu0 0
        %1335 = vmatprep.subr.bf16.mxu0 0
        %1336 = vmatpush1.bf16.xpose.msra.mxu0 0
        %1337 = vmatprep.mubr.bf16.mxu0 0
        %1338 = vmatmul.mubr.bf16.gmra.mrb[0].mxu0 %v1294
        %v1339 = vpop.f32.mrb[0].mxu0
        %v1340 = vadd.f32 %v727, %v1339
        %v1341 = vpop.f32.mrb[0].mxu0
        %v1342 = vpop.f32.mrb[0].mxu0
        %v1343 = vadd.f32 %v728, %v1342
        %v1344 = vpop.f32.mrb[0].mxu0
        %1345 = vmatprep.mubr.bf16.mxu0 0
        %1346 = vmatmul.mubr.bf16.gmra.mrb[0].mxu0 %v1297
        %v1347 = vpop.f32.mrb[0].mxu0
        %v1348 = vadd.f32 %v729, %v1347
        %v1349 = vpop.f32.mrb[0].mxu0
        %v1350 = vpop.f32.mrb[0].mxu0
        %v1351 = vadd.f32 %v730, %v1350
        %v1352 = vpop.f32.mrb[0].mxu0
        %1353 = vdwg.mxu0
        %v1354 = vsel %vm799, %v1340, -inf
        %1355 = vmax.xlane.f32.xlu0 %v1354
        %v1356 = vpop.xlane.xlu0 %1355
        %v1357 = vsel %vm799, %v1343, -inf
        %1358 = vmax.xlane.f32.xlu0 %v1357
        %v1359 = vpop.xlane.xlu0 %1358
        %v1360 = vsel %vm799, %v1348, -inf
        %1361 = vmax.xlane.f32.xlu0 %v1360
        %v1362 = vpop.xlane.xlu0 %1361
        %v1363 = vsel %vm799, %v1351, -inf
        %1364 = vmax.xlane.f32.xlu0 %v1363
        %v1365 = vpop.xlane.xlu0 %1364
        %v1366 = vsub.f32 %v1340, %v1356
        %v1367 = vsub.f32 %v1343, %v1359
        %v1368 = vsub.f32 %v1348, %v1362
        %v1369 = vsub.f32 %v1351, %v1365
        %v1370 = vmul.f32 %v1366, 1.442695
        %v1371 = vpow.pop %v1370
        %v1372 = vmul.f32 %v1367, 1.442695
        %v1373 = vpow.pop %v1372
        %v1374 = vmul.f32 %v1368, 1.442695
        %v1375 = vpow.pop %v1374
        %v1376 = vmul.f32 %v1369, 1.442695
        %v1377 = vpow.pop %v1376
        %v1378 = vsel %vm799, %v1371, 0.0
        %1379 = vadd.xlane.f32.xlu0 %v1378
        %v1380 = vpop.xlane.xlu0 %1379
        %v1381 = vsel %vm799, %v1373, 0.0
        %1382 = vadd.xlane.f32.xlu0 %v1381
        %v1383 = vpop.xlane.xlu0 %1382
        %v1384 = vsel %vm799, %v1375, 0.0
        %1385 = vadd.xlane.f32.xlu0 %v1384
        %v1386 = vpop.xlane.xlu0 %1385
        %v1387 = vsel %vm799, %v1377, 0.0
        %1388 = vadd.xlane.f32.xlu0 %v1387
        %v1389 = vpop.xlane.xlu0 %1388
        %v1390 = vrcp.pop %v1380
        %v1391 = vrcp.pop %v1383
        %v1392 = vrcp.pop %v1386
        %v1393 = vrcp.pop %v1389
        %v1394 = vmul.f32 %v1371, %v1390
        %v1395 = vmul.f32 %v1373, %v1391
        %v1396 = vmul.f32 %v1375, %v1392
        %v1397 = vmul.f32 %v1377, %v1393
        %v1398 = vpack.c.bf16 %v1395, %v1394
        %v1399 = vpack.c.bf16 %v1397, %v1396
        %1400 = vrot.lane.b32.xlu0 %v720, 80
        %v1401 = vpop.permute.xlu0 %1400
        %1402 = vrot.lane.b32.xlu0 %v722, 80
        %v1403 = vpop.permute.xlu0 %1402
        %v1407 = vsel %vm799, %v1398, 0
        %v1410 = vsel %vm799, %v1399, 0
        %1412 = vmatprep.subr.bf16.mxu0 0
        %1413 = vmatpush1.bf16.msra.mxu0 %v1401
        %1414 = vmatprep.subr.bf16.mxu0 0
        %1415 = vmatpush1.bf16.msra.mxu0 %v1403
        %1416 = vmatprep.subr.bf16.mxu0 0
        %1417 = vmatpush1.bf16.msra.mxu0 0
        %1418 = vmatprep.subr.bf16.mxu0 0
        %1419 = vmatpush1.bf16.msra.mxu0 0
        %1420 = vmatprep.subr.bf16.mxu0 0
        %1421 = vmatpush1.bf16.msra.mxu0 0
        %1422 = vmatprep.subr.bf16.mxu0 0
        %1423 = vmatpush1.bf16.msra.mxu0 0
        %1424 = vmatprep.subr.bf16.mxu0 0
        %1425 = vmatpush1.bf16.msra.mxu0 0
        %1426 = vmatprep.subr.bf16.mxu0 0
        %1427 = vmatpush1.bf16.msra.mxu0 0
        %1428 = vmatprep.subr.bf16.mxu0 0
        %1429 = vmatpush1.bf16.msra.mxu0 0
        %1430 = vmatprep.subr.bf16.mxu0 0
        %1431 = vmatpush1.bf16.msra.mxu0 0
        %1432 = vmatprep.subr.bf16.mxu0 0
        %1433 = vmatpush1.bf16.msra.mxu0 0
        %1434 = vmatprep.subr.bf16.mxu0 0
        %1435 = vmatpush1.bf16.msra.mxu0 0
        %1436 = vmatprep.subr.bf16.mxu0 0
        %1437 = vmatpush1.bf16.msra.mxu0 0
        %1438 = vmatprep.subr.bf16.mxu0 0
        %1439 = vmatpush1.bf16.msra.mxu0 0
        %1440 = vmatprep.subr.bf16.mxu0 0
        %1441 = vmatpush1.bf16.msra.mxu0 0
        %1442 = vmatprep.subr.bf16.mxu0 0
        %1443 = vmatpush1.bf16.msra.mxu0 0
        %1444 = vmatprep.mubr.bf16.mxu0 0
        %1445 = vmatmul.mubr.bf16.gmra.mrb[0].mxu0 %v1407
        %v1446 = vpop.f32.mrb[0].mxu0
        %v1447 = vadd.f32 0.0, %v1446
        %v1448 = vpop.f32.mrb[0].mxu0
        %v1449 = vpop.f32.mrb[0].mxu0
        %v1450 = vadd.f32 0.0, %v1449
        %v1451 = vpop.f32.mrb[0].mxu0
        %1452 = vmatprep.mubr.bf16.mxu0 0
        %1453 = vmatmul.mubr.bf16.gmra.mrb[0].mxu0 %v1410
        %v1454 = vpop.f32.mrb[0].mxu0
        %v1455 = vadd.f32 0.0, %v1454
        %v1456 = vpop.f32.mrb[0].mxu0
        %v1457 = vpop.f32.mrb[0].mxu0
        %v1458 = vadd.f32 0.0, %v1457
        %v1459 = vpop.f32.mrb[0].mxu0
        %1460 = vdwg.mxu0
        %v1461 = vpack.c.bf16 %v1450, %v1447
        %v1462 = vpack.c.bf16 %v1458, %v1455
        %1465 = vrot.lane.b32.xlu0 %v1461, 48
        %v1466 = vpop.permute.xlu0 %1465
        %1467 = vrot.lane.b32.xlu0 %v1462, 48
        %v1468 = vpop.permute.xlu0 %1467
        %vm1471 = vcmask 523648
        %1472 = vst.msk [vmem:[#allocation3] sm:$0xff] %vm1471, %v1466
        %1473 = vst.msk [vmem:[#allocation3 + $0x8] sm:$0xff] %vm1471, %v1468
        %1476 = vrot.lane.b32.xlu0 %v723, 64
        %v1477 = vpop.permute.xlu0 %1476
        %1478 = vrot.lane.b32.xlu0 %v725, 64
        %v1479 = vpop.permute.xlu0 %1478
        %v1481 = vsel %vm737, %v723, 0
        %v1484 = vsel %vm737, %v725, 0
        %v1487 = vsel %vm737, %v1477, 0
        %v1490 = vsel %vm737, %v1479, 0
        %1492 = vmatprep.subr.bf16.mxu0 0
        %1493 = vmatpush1.bf16.xpose.msra.mxu0 %v1487
        %1494 = vmatprep.subr.bf16.mxu0 0
        %1495 = vmatpush1.bf16.xpose.msra.mxu0 %v1490
        %1496 = vmatprep.subr.bf16.mxu0 0
        %1497 = vmatpush1.bf16.xpose.msra.mxu0 0
        %1498 = vmatprep.subr.bf16.mxu0 0
        %1499 = vmatpush1.bf16.xpose.msra.mxu0 0
        %1500 = vmatprep.subr.bf16.mxu0 0
        %1501 = vmatpush1.bf16.xpose.msra.mxu0 0
        %1502 = vmatprep.subr.bf16.mxu0 0
        %1503 = vmatpush1.bf16.xpose.msra.mxu0 0
        %1504 = vmatprep.subr.bf16.mxu0 0
        %1505 = vmatpush1.bf16.xpose.msra.mxu0 0
        %1506 = vmatprep.subr.bf16.mxu0 0
        %1507 = vmatpush1.bf16.xpose.msra.mxu0 0
        %1508 = vmatprep.subr.bf16.mxu0 0
        %1509 = vmatpush1.bf16.xpose.msra.mxu0 0
        %1510 = vmatprep.subr.bf16.mxu0 0
        %1511 = vmatpush1.bf16.xpose.msra.mxu0 0
        %1512 = vmatprep.subr.bf16.mxu0 0
        %1513 = vmatpush1.bf16.xpose.msra.mxu0 0
        %1514 = vmatprep.subr.bf16.mxu0 0
        %1515 = vmatpush1.bf16.xpose.msra.mxu0 0
        %1516 = vmatprep.subr.bf16.mxu0 0
        %1517 = vmatpush1.bf16.xpose.msra.mxu0 0
        %1518 = vmatprep.subr.bf16.mxu0 0
        %1519 = vmatpush1.bf16.xpose.msra.mxu0 0
        %1520 = vmatprep.subr.bf16.mxu0 0
        %1521 = vmatpush1.bf16.xpose.msra.mxu0 0
        %1522 = vmatprep.subr.bf16.mxu0 0
        %1523 = vmatpush1.bf16.xpose.msra.mxu0 0
        %1524 = vmatprep.mubr.bf16.mxu0 0
        %1525 = vmatmul.mubr.bf16.gmra.mrb[0].mxu0 %v1481
        %v1526 = vpop.f32.mrb[0].mxu0
        %v1527 = vadd.f32 %v727, %v1526
        %v1528 = vpop.f32.mrb[0].mxu0
        %v1529 = vpop.f32.mrb[0].mxu0
        %v1530 = vadd.f32 %v728, %v1529
        %v1531 = vpop.f32.mrb[0].mxu0
        %1532 = vmatprep.mubr.bf16.mxu0 0
        %1533 = vmatmul.mubr.bf16.gmra.mrb[0].mxu0 %v1484
        %v1534 = vpop.f32.mrb[0].mxu0
        %v1535 = vadd.f32 %v729, %v1534
        %v1536 = vpop.f32.mrb[0].mxu0
        %v1537 = vpop.f32.mrb[0].mxu0
        %v1538 = vadd.f32 %v730, %v1537
        %v1539 = vpop.f32.mrb[0].mxu0
        %1540 = vdwg.mxu0
        %v1541 = vsel %vm799, %v1527, -inf
        %1542 = vmax.xlane.f32.xlu0 %v1541
        %v1543 = vpop.xlane.xlu0 %1542
        %v1544 = vsel %vm799, %v1530, -inf
        %1545 = vmax.xlane.f32.xlu0 %v1544
        %v1546 = vpop.xlane.xlu0 %1545
        %v1547 = vsel %vm799, %v1535, -inf
        %1548 = vmax.xlane.f32.xlu0 %v1547
        %v1549 = vpop.xlane.xlu0 %1548
        %v1550 = vsel %vm799, %v1538, -inf
        %1551 = vmax.xlane.f32.xlu0 %v1550
        %v1552 = vpop.xlane.xlu0 %1551
        %v1553 = vsub.f32 %v1527, %v1543
        %v1554 = vsub.f32 %v1530, %v1546
        %v1555 = vsub.f32 %v1535, %v1549
        %v1556 = vsub.f32 %v1538, %v1552
        %v1557 = vmul.f32 %v1553, 1.442695
        %v1558 = vpow.pop %v1557
        %v1559 = vmul.f32 %v1554, 1.442695
        %v1560 = vpow.pop %v1559
        %v1561 = vmul.f32 %v1555, 1.442695
        %v1562 = vpow.pop %v1561
        %v1563 = vmul.f32 %v1556, 1.442695
        %v1564 = vpow.pop %v1563
        %v1565 = vsel %vm799, %v1558, 0.0
        %1566 = vadd.xlane.f32.xlu0 %v1565
        %v1567 = vpop.xlane.xlu0 %1566
        %v1568 = vsel %vm799, %v1560, 0.0
        %1569 = vadd.xlane.f32.xlu0 %v1568
        %v1570 = vpop.xlane.xlu0 %1569
        %v1571 = vsel %vm799, %v1562, 0.0
        %1572 = vadd.xlane.f32.xlu0 %v1571
        %v1573 = vpop.xlane.xlu0 %1572
        %v1574 = vsel %vm799, %v1564, 0.0
        %1575 = vadd.xlane.f32.xlu0 %v1574
        %v1576 = vpop.xlane.xlu0 %1575
        %v1577 = vrcp.pop %v1567
        %v1578 = vrcp.pop %v1570
        %v1579 = vrcp.pop %v1573
        %v1580 = vrcp.pop %v1576
        %v1581 = vmul.f32 %v1558, %v1577
        %v1582 = vmul.f32 %v1560, %v1578
        %v1583 = vmul.f32 %v1562, %v1579
        %v1584 = vmul.f32 %v1564, %v1580
        %v1585 = vpack.c.bf16 %v1582, %v1581
        %v1586 = vpack.c.bf16 %v1584, %v1583
        %v1588 = vsel %vm799, %v1585, 0
        %v1591 = vsel %vm799, %v1586, 0
        %1593 = vmatprep.subr.bf16.mxu0 0
        %1594 = vmatpush1.bf16.msra.mxu0 %v724
        %1595 = vmatprep.subr.bf16.mxu0 0
        %1596 = vmatpush1.bf16.msra.mxu0 %v726
        %1597 = vmatprep.subr.bf16.mxu0 0
        %1598 = vmatpush1.bf16.msra.mxu0 0
        %1599 = vmatprep.subr.bf16.mxu0 0
        %1600 = vmatpush1.bf16.msra.mxu0 0
        %1601 = vmatprep.subr.bf16.mxu0 0
        %1602 = vmatpush1.bf16.msra.mxu0 0
        %1603 = vmatprep.subr.bf16.mxu0 0
        %1604 = vmatpush1.bf16.msra.mxu0 0
        %1605 = vmatprep.subr.bf16.mxu0 0
        %1606 = vmatpush1.bf16.msra.mxu0 0
        %1607 = vmatprep.subr.bf16.mxu0 0
        %1608 = vmatpush1.bf16.msra.mxu0 0
        %1609 = vmatprep.subr.bf16.mxu0 0
        %1610 = vmatpush1.bf16.msra.mxu0 0
        %1611 = vmatprep.subr.bf16.mxu0 0
        %1612 = vmatpush1.bf16.msra.mxu0 0
        %1613 = vmatprep.subr.bf16.mxu0 0
        %1614 = vmatpush1.bf16.msra.mxu0 0
        %1615 = vmatprep.subr.bf16.mxu0 0
        %1616 = vmatpush1.bf16.msra.mxu0 0
        %1617 = vmatprep.subr.bf16.mxu0 0
        %1618 = vmatpush1.bf16.msra.mxu0 0
        %1619 = vmatprep.subr.bf16.mxu0 0
        %1620 = vmatpush1.bf16.msra.mxu0 0
        %1621 = vmatprep.subr.bf16.mxu0 0
        %1622 = vmatpush1.bf16.msra.mxu0 0
        %1623 = vmatprep.subr.bf16.mxu0 0
        %1624 = vmatpush1.bf16.msra.mxu0 0
        %1625 = vmatprep.mubr.bf16.mxu0 0
        %1626 = vmatmul.mubr.bf16.gmra.mrb[0].mxu0 %v1588
        %v1627 = vpop.f32.mrb[0].mxu0
        %v1628 = vadd.f32 0.0, %v1627
        %v1629 = vpop.f32.mrb[0].mxu0
        %v1630 = vpop.f32.mrb[0].mxu0
        %v1631 = vadd.f32 0.0, %v1630
        %v1632 = vpop.f32.mrb[0].mxu0
        %1633 = vmatprep.mubr.bf16.mxu0 0
        %1634 = vmatmul.mubr.bf16.gmra.mrb[0].mxu0 %v1591
        %v1635 = vpop.f32.mrb[0].mxu0
        %v1636 = vadd.f32 0.0, %v1635
        %v1637 = vpop.f32.mrb[0].mxu0
        %v1638 = vpop.f32.mrb[0].mxu0
        %v1639 = vadd.f32 0.0, %v1638
        %v1640 = vpop.f32.mrb[0].mxu0
        %1641 = vdwg.mxu0
        %v1642 = vpack.c.bf16 %v1631, %v1628
        %v1643 = vpack.c.bf16 %v1639, %v1636
        %1644 = vst.msk [vmem:[#allocation3 + $0x10] sm:$0xff] %vm737, %v1642
        %1645 = vst.msk [vmem:[#allocation3 + $0x18] sm:$0xff] %vm737, %v1643
        %1646 = vrot.lane.b32.xlu0 %v723, 112
        %v1647 = vpop.permute.xlu0 %1646
        %1648 = vrot.lane.b32.xlu0 %v725, 112
        %v1649 = vpop.permute.xlu0 %1648
        %1650 = vrot.lane.b32.xlu0 %v723, 48
        %v1651 = vpop.permute.xlu0 %1650
        %1652 = vrot.lane.b32.xlu0 %v725, 48
        %v1653 = vpop.permute.xlu0 %1652
        %v1655 = vsel %vm737, %v1647, 0
        %v1658 = vsel %vm737, %v1649, 0
        %v1661 = vsel %vm737, %v1651, 0
        %v1664 = vsel %vm737, %v1653, 0
        %1666 = vmatprep.subr.bf16.mxu0 0
        %1667 = vmatpush1.bf16.xpose.msra.mxu0 %v1661
        %1668 = vmatprep.subr.bf16.mxu0 0
        %1669 = vmatpush1.bf16.xpose.msra.mxu0 %v1664
        %1670 = vmatprep.subr.bf16.mxu0 0
        %1671 = vmatpush1.bf16.xpose.msra.mxu0 0
        %1672 = vmatprep.subr.bf16.mxu0 0
        %1673 = vmatpush1.bf16.xpose.msra.mxu0 0
        %1674 = vmatprep.subr.bf16.mxu0 0
        %1675 = vmatpush1.bf16.xpose.msra.mxu0 0
        %1676 = vmatprep.subr.bf16.mxu0 0
        %1677 = vmatpush1.bf16.xpose.msra.mxu0 0
        %1678 = vmatprep.subr.bf16.mxu0 0
        %1679 = vmatpush1.bf16.xpose.msra.mxu0 0
        %1680 = vmatprep.subr.bf16.mxu0 0
        %1681 = vmatpush1.bf16.xpose.msra.mxu0 0
        %1682 = vmatprep.subr.bf16.mxu0 0
        %1683 = vmatpush1.bf16.xpose.msra.mxu0 0
        %1684 = vmatprep.subr.bf16.mxu0 0
        %1685 = vmatpush1.bf16.xpose.msra.mxu0 0
        %1686 = vmatprep.subr.bf16.mxu0 0
        %1687 = vmatpush1.bf16.xpose.msra.mxu0 0
        %1688 = vmatprep.subr.bf16.mxu0 0
        %1689 = vmatpush1.bf16.xpose.msra.mxu0 0
        %1690 = vmatprep.subr.bf16.mxu0 0
        %1691 = vmatpush1.bf16.xpose.msra.mxu0 0
        %1692 = vmatprep.subr.bf16.mxu0 0
        %1693 = vmatpush1.bf16.xpose.msra.mxu0 0
        %1694 = vmatprep.subr.bf16.mxu0 0
        %1695 = vmatpush1.bf16.xpose.msra.mxu0 0
        %1696 = vmatprep.subr.bf16.mxu0 0
        %1697 = vmatpush1.bf16.xpose.msra.mxu0 0
        %1698 = vmatprep.mubr.bf16.mxu0 0
        %1699 = vmatmul.mubr.bf16.gmra.mrb[0].mxu0 %v1655
        %v1700 = vpop.f32.mrb[0].mxu0
        %v1701 = vadd.f32 %v727, %v1700
        %v1702 = vpop.f32.mrb[0].mxu0
        %v1703 = vpop.f32.mrb[0].mxu0
        %v1704 = vadd.f32 %v728, %v1703
        %v1705 = vpop.f32.mrb[0].mxu0
        %1706 = vmatprep.mubr.bf16.mxu0 0
        %1707 = vmatmul.mubr.bf16.gmra.mrb[0].mxu0 %v1658
        %v1708 = vpop.f32.mrb[0].mxu0
        %v1709 = vadd.f32 %v729, %v1708
        %v1710 = vpop.f32.mrb[0].mxu0
        %v1711 = vpop.f32.mrb[0].mxu0
        %v1712 = vadd.f32 %v730, %v1711
        %v1713 = vpop.f32.mrb[0].mxu0
        %1714 = vdwg.mxu0
        %v1715 = vsel %vm799, %v1701, -inf
        %1716 = vmax.xlane.f32.xlu0 %v1715
        %v1717 = vpop.xlane.xlu0 %1716
        %v1718 = vsel %vm799, %v1704, -inf
        %1719 = vmax.xlane.f32.xlu0 %v1718
        %v1720 = vpop.xlane.xlu0 %1719
        %v1721 = vsel %vm799, %v1709, -inf
        %1722 = vmax.xlane.f32.xlu0 %v1721
        %v1723 = vpop.xlane.xlu0 %1722
        %v1724 = vsel %vm799, %v1712, -inf
        %1725 = vmax.xlane.f32.xlu0 %v1724
        %v1726 = vpop.xlane.xlu0 %1725
        %v1727 = vsub.f32 %v1701, %v1717
        %v1728 = vsub.f32 %v1704, %v1720
        %v1729 = vsub.f32 %v1709, %v1723
        %v1730 = vsub.f32 %v1712, %v1726
        %v1731 = vmul.f32 %v1727, 1.442695
        %v1732 = vpow.pop %v1731
        %v1733 = vmul.f32 %v1728, 1.442695
        %v1734 = vpow.pop %v1733
        %v1735 = vmul.f32 %v1729, 1.442695
        %v1736 = vpow.pop %v1735
        %v1737 = vmul.f32 %v1730, 1.442695
        %v1738 = vpow.pop %v1737
        %v1739 = vsel %vm799, %v1732, 0.0
        %1740 = vadd.xlane.f32.xlu0 %v1739
        %v1741 = vpop.xlane.xlu0 %1740
        %v1742 = vsel %vm799, %v1734, 0.0
        %1743 = vadd.xlane.f32.xlu0 %v1742
        %v1744 = vpop.xlane.xlu0 %1743
        %v1745 = vsel %vm799, %v1736, 0.0
        %1746 = vadd.xlane.f32.xlu0 %v1745
        %v1747 = vpop.xlane.xlu0 %1746
        %v1748 = vsel %vm799, %v1738, 0.0
        %1749 = vadd.xlane.f32.xlu0 %v1748
        %v1750 = vpop.xlane.xlu0 %1749
        %v1751 = vrcp.pop %v1741
        %v1752 = vrcp.pop %v1744
        %v1753 = vrcp.pop %v1747
        %v1754 = vrcp.pop %v1750
        %v1755 = vmul.f32 %v1732, %v1751
        %v1756 = vmul.f32 %v1734, %v1752
        %v1757 = vmul.f32 %v1736, %v1753
        %v1758 = vmul.f32 %v1738, %v1754
        %v1759 = vpack.c.bf16 %v1756, %v1755
        %v1760 = vpack.c.bf16 %v1758, %v1757
        %1763 = vrot.lane.b32.xlu0 %v724, 112
        %v1764 = vpop.permute.xlu0 %1763
        %1765 = vrot.lane.b32.xlu0 %v726, 112
        %v1766 = vpop.permute.xlu0 %1765
        %v1770 = vsel %vm799, %v1759, 0
        %v1773 = vsel %vm799, %v1760, 0
        %1775 = vmatprep.subr.bf16.mxu0 0
        %1776 = vmatpush1.bf16.msra.mxu0 %v1764
        %1777 = vmatprep.subr.bf16.mxu0 0
        %1778 = vmatpush1.bf16.msra.mxu0 %v1766
        %1779 = vmatprep.subr.bf16.mxu0 0
        %1780 = vmatpush1.bf16.msra.mxu0 0
        %1781 = vmatprep.subr.bf16.mxu0 0
        %1782 = vmatpush1.bf16.msra.mxu0 0
        %1783 = vmatprep.subr.bf16.mxu0 0
        %1784 = vmatpush1.bf16.msra.mxu0 0
        %1785 = vmatprep.subr.bf16.mxu0 0
        %1786 = vmatpush1.bf16.msra.mxu0 0
        %1787 = vmatprep.subr.bf16.mxu0 0
        %1788 = vmatpush1.bf16.msra.mxu0 0
        %1789 = vmatprep.subr.bf16.mxu0 0
        %1790 = vmatpush1.bf16.msra.mxu0 0
        %1791 = vmatprep.subr.bf16.mxu0 0
        %1792 = vmatpush1.bf16.msra.mxu0 0
        %1793 = vmatprep.subr.bf16.mxu0 0
        %1794 = vmatpush1.bf16.msra.mxu0 0
        %1795 = vmatprep.subr.bf16.mxu0 0
        %1796 = vmatpush1.bf16.msra.mxu0 0
        %1797 = vmatprep.subr.bf16.mxu0 0
        %1798 = vmatpush1.bf16.msra.mxu0 0
        %1799 = vmatprep.subr.bf16.mxu0 0
        %1800 = vmatpush1.bf16.msra.mxu0 0
        %1801 = vmatprep.subr.bf16.mxu0 0
        %1802 = vmatpush1.bf16.msra.mxu0 0
        %1803 = vmatprep.subr.bf16.mxu0 0
        %1804 = vmatpush1.bf16.msra.mxu0 0
        %1805 = vmatprep.subr.bf16.mxu0 0
        %1806 = vmatpush1.bf16.msra.mxu0 0
        %1807 = vmatprep.mubr.bf16.mxu0 0
        %1808 = vmatmul.mubr.bf16.gmra.mrb[0].mxu0 %v1770
        %v1809 = vpop.f32.mrb[0].mxu0
        %v1810 = vadd.f32 0.0, %v1809
        %v1811 = vpop.f32.mrb[0].mxu0
        %v1812 = vpop.f32.mrb[0].mxu0
        %v1813 = vadd.f32 0.0, %v1812
        %v1814 = vpop.f32.mrb[0].mxu0
        %1815 = vmatprep.mubr.bf16.mxu0 0
        %1816 = vmatmul.mubr.bf16.gmra.mrb[0].mxu0 %v1773
        %v1817 = vpop.f32.mrb[0].mxu0
        %v1818 = vadd.f32 0.0, %v1817
        %v1819 = vpop.f32.mrb[0].mxu0
        %v1820 = vpop.f32.mrb[0].mxu0
        %v1821 = vadd.f32 0.0, %v1820
        %v1822 = vpop.f32.mrb[0].mxu0
        %1823 = vdwg.mxu0
        %v1824 = vpack.c.bf16 %v1813, %v1810
        %v1825 = vpack.c.bf16 %v1821, %v1818
        %1828 = vrot.lane.b32.xlu0 %v1824, 16
        %v1829 = vpop.permute.xlu0 %1828
        %1830 = vrot.lane.b32.xlu0 %v1825, 16
        %v1831 = vpop.permute.xlu0 %1830
        %1834 = vst.msk [vmem:[#allocation3 + $0x10] sm:$0xff] %vm1093, %v1829
        %1835 = vst.msk [vmem:[#allocation3 + $0x18] sm:$0xff] %vm1093, %v1831
        %1836 = vrot.lane.b32.xlu0 %v723, 96
        %v1837 = vpop.permute.xlu0 %1836
        %1838 = vrot.lane.b32.xlu0 %v725, 96
        %v1839 = vpop.permute.xlu0 %1838
        %1840 = vrot.lane.b32.xlu0 %v723, 32
        %v1841 = vpop.permute.xlu0 %1840
        %1842 = vrot.lane.b32.xlu0 %v725, 32
        %v1843 = vpop.permute.xlu0 %1842
        %v1845 = vsel %vm737, %v1837, 0
        %v1848 = vsel %vm737, %v1839, 0
        %v1851 = vsel %vm737, %v1841, 0
        %v1854 = vsel %vm737, %v1843, 0
        %1856 = vmatprep.subr.bf16.mxu0 0
        %1857 = vmatpush1.bf16.xpose.msra.mxu0 %v1851
        %1858 = vmatprep.subr.bf16.mxu0 0
        %1859 = vmatpush1.bf16.xpose.msra.mxu0 %v1854
        %1860 = vmatprep.subr.bf16.mxu0 0
        %1861 = vmatpush1.bf16.xpose.msra.mxu0 0
        %1862 = vmatprep.subr.bf16.mxu0 0
        %1863 = vmatpush1.bf16.xpose.msra.mxu0 0
        %1864 = vmatprep.subr.bf16.mxu0 0
        %1865 = vmatpush1.bf16.xpose.msra.mxu0 0
        %1866 = vmatprep.subr.bf16.mxu0 0
        %1867 = vmatpush1.bf16.xpose.msra.mxu0 0
        %1868 = vmatprep.subr.bf16.mxu0 0
        %1869 = vmatpush1.bf16.xpose.msra.mxu0 0
        %1870 = vmatprep.subr.bf16.mxu0 0
        %1871 = vmatpush1.bf16.xpose.msra.mxu0 0
        %1872 = vmatprep.subr.bf16.mxu0 0
        %1873 = vmatpush1.bf16.xpose.msra.mxu0 0
        %1874 = vmatprep.subr.bf16.mxu0 0
        %1875 = vmatpush1.bf16.xpose.msra.mxu0 0
        %1876 = vmatprep.subr.bf16.mxu0 0
        %1877 = vmatpush1.bf16.xpose.msra.mxu0 0
        %1878 = vmatprep.subr.bf16.mxu0 0
        %1879 = vmatpush1.bf16.xpose.msra.mxu0 0
        %1880 = vmatprep.subr.bf16.mxu0 0
        %1881 = vmatpush1.bf16.xpose.msra.mxu0 0
        %1882 = vmatprep.subr.bf16.mxu0 0
        %1883 = vmatpush1.bf16.xpose.msra.mxu0 0
        %1884 = vmatprep.subr.bf16.mxu0 0
        %1885 = vmatpush1.bf16.xpose.msra.mxu0 0
        %1886 = vmatprep.subr.bf16.mxu0 0
        %1887 = vmatpush1.bf16.xpose.msra.mxu0 0
        %1888 = vmatprep.mubr.bf16.mxu0 0
        %1889 = vmatmul.mubr.bf16.gmra.mrb[0].mxu0 %v1845
        %v1890 = vpop.f32.mrb[0].mxu0
        %v1891 = vadd.f32 %v727, %v1890
        %v1892 = vpop.f32.mrb[0].mxu0
        %v1893 = vpop.f32.mrb[0].mxu0
        %v1894 = vadd.f32 %v728, %v1893
        %v1895 = vpop.f32.mrb[0].mxu0
        %1896 = vmatprep.mubr.bf16.mxu0 0
        %1897 = vmatmul.mubr.bf16.gmra.mrb[0].mxu0 %v1848
        %v1898 = vpop.f32.mrb[0].mxu0
        %v1899 = vadd.f32 %v729, %v1898
        %v1900 = vpop.f32.mrb[0].mxu0
        %v1901 = vpop.f32.mrb[0].mxu0
        %v1902 = vadd.f32 %v730, %v1901
        %v1903 = vpop.f32.mrb[0].mxu0
        %1904 = vdwg.mxu0
        %v1905 = vsel %vm799, %v1891, -inf
        %1906 = vmax.xlane.f32.xlu0 %v1905
        %v1907 = vpop.xlane.xlu0 %1906
        %v1908 = vsel %vm799, %v1894, -inf
        %1909 = vmax.xlane.f32.xlu0 %v1908
        %v1910 = vpop.xlane.xlu0 %1909
        %v1911 = vsel %vm799, %v1899, -inf
        %1912 = vmax.xlane.f32.xlu0 %v1911
        %v1913 = vpop.xlane.xlu0 %1912
        %v1914 = vsel %vm799, %v1902, -inf
        %1915 = vmax.xlane.f32.xlu0 %v1914
        %v1916 = vpop.xlane.xlu0 %1915
        %v1917 = vsub.f32 %v1891, %v1907
        %v1918 = vsub.f32 %v1894, %v1910
        %v1919 = vsub.f32 %v1899, %v1913
        %v1920 = vsub.f32 %v1902, %v1916
        %v1921 = vmul.f32 %v1917, 1.442695
        %v1922 = vpow.pop %v1921
        %v1923 = vmul.f32 %v1918, 1.442695
        %v1924 = vpow.pop %v1923
        %v1925 = vmul.f32 %v1919, 1.442695
        %v1926 = vpow.pop %v1925
        %v1927 = vmul.f32 %v1920, 1.442695
        %v1928 = vpow.pop %v1927
        %v1929 = vsel %vm799, %v1922, 0.0
        %1930 = vadd.xlane.f32.xlu0 %v1929
        %v1931 = vpop.xlane.xlu0 %1930
        %v1932 = vsel %vm799, %v1924, 0.0
        %1933 = vadd.xlane.f32.xlu0 %v1932
        %v1934 = vpop.xlane.xlu0 %1933
        %v1935 = vsel %vm799, %v1926, 0.0
        %1936 = vadd.xlane.f32.xlu0 %v1935
        %v1937 = vpop.xlane.xlu0 %1936
        %v1938 = vsel %vm799, %v1928, 0.0
        %1939 = vadd.xlane.f32.xlu0 %v1938
        %v1940 = vpop.xlane.xlu0 %1939
        %v1941 = vrcp.pop %v1931
        %v1942 = vrcp.pop %v1934
        %v1943 = vrcp.pop %v1937
        %v1944 = vrcp.pop %v1940
        %v1945 = vmul.f32 %v1922, %v1941
        %v1946 = vmul.f32 %v1924, %v1942
        %v1947 = vmul.f32 %v1926, %v1943
        %v1948 = vmul.f32 %v1928, %v1944
        %v1949 = vpack.c.bf16 %v1946, %v1945
        %v1950 = vpack.c.bf16 %v1948, %v1947
        %1951 = vrot.lane.b32.xlu0 %v724, 96
        %v1952 = vpop.permute.xlu0 %1951
        %1953 = vrot.lane.b32.xlu0 %v726, 96
        %v1954 = vpop.permute.xlu0 %1953
        %v1958 = vsel %vm799, %v1949, 0
        %v1961 = vsel %vm799, %v1950, 0
        %1963 = vmatprep.subr.bf16.mxu0 0
        %1964 = vmatpush1.bf16.msra.mxu0 %v1952
        %1965 = vmatprep.subr.bf16.mxu0 0
        %1966 = vmatpush1.bf16.msra.mxu0 %v1954
        %1967 = vmatprep.subr.bf16.mxu0 0
        %1968 = vmatpush1.bf16.msra.mxu0 0
        %1969 = vmatprep.subr.bf16.mxu0 0
        %1970 = vmatpush1.bf16.msra.mxu0 0
        %1971 = vmatprep.subr.bf16.mxu0 0
        %1972 = vmatpush1.bf16.msra.mxu0 0
        %1973 = vmatprep.subr.bf16.mxu0 0
        %1974 = vmatpush1.bf16.msra.mxu0 0
        %1975 = vmatprep.subr.bf16.mxu0 0
        %1976 = vmatpush1.bf16.msra.mxu0 0
        %1977 = vmatprep.subr.bf16.mxu0 0
        %1978 = vmatpush1.bf16.msra.mxu0 0
        %1979 = vmatprep.subr.bf16.mxu0 0
        %1980 = vmatpush1.bf16.msra.mxu0 0
        %1981 = vmatprep.subr.bf16.mxu0 0
        %1982 = vmatpush1.bf16.msra.mxu0 0
        %1983 = vmatprep.subr.bf16.mxu0 0
        %1984 = vmatpush1.bf16.msra.mxu0 0
        %1985 = vmatprep.subr.bf16.mxu0 0
        %1986 = vmatpush1.bf16.msra.mxu0 0
        %1987 = vmatprep.subr.bf16.mxu0 0
        %1988 = vmatpush1.bf16.msra.mxu0 0
        %1989 = vmatprep.subr.bf16.mxu0 0
        %1990 = vmatpush1.bf16.msra.mxu0 0
        %1991 = vmatprep.subr.bf16.mxu0 0
        %1992 = vmatpush1.bf16.msra.mxu0 0
        %1993 = vmatprep.subr.bf16.mxu0 0
        %1994 = vmatpush1.bf16.msra.mxu0 0
        %1995 = vmatprep.mubr.bf16.mxu0 0
        %1996 = vmatmul.mubr.bf16.gmra.mrb[0].mxu0 %v1958
        %v1997 = vpop.f32.mrb[0].mxu0
        %v1998 = vadd.f32 0.0, %v1997
        %v1999 = vpop.f32.mrb[0].mxu0
        %v2000 = vpop.f32.mrb[0].mxu0
        %v2001 = vadd.f32 0.0, %v2000
        %v2002 = vpop.f32.mrb[0].mxu0
        %2003 = vmatprep.mubr.bf16.mxu0 0
        %2004 = vmatmul.mubr.bf16.gmra.mrb[0].mxu0 %v1961
        %v2005 = vpop.f32.mrb[0].mxu0
        %v2006 = vadd.f32 0.0, %v2005
        %v2007 = vpop.f32.mrb[0].mxu0
        %v2008 = vpop.f32.mrb[0].mxu0
        %v2009 = vadd.f32 0.0, %v2008
        %v2010 = vpop.f32.mrb[0].mxu0
        %2011 = vdwg.mxu0
        %v2012 = vpack.c.bf16 %v2001, %v1998
        %v2013 = vpack.c.bf16 %v2009, %v2006
        %2016 = vrot.lane.b32.xlu0 %v2012, 32
        %v2017 = vpop.permute.xlu0 %2016
        %2018 = vrot.lane.b32.xlu0 %v2013, 32
        %v2019 = vpop.permute.xlu0 %2018
        %2022 = vst.msk [vmem:[#allocation3 + $0x10] sm:$0xff] %vm1282, %v2017
        %2023 = vst.msk [vmem:[#allocation3 + $0x18] sm:$0xff] %vm1282, %v2019
        %2024 = vrot.lane.b32.xlu0 %v723, 80
        %v2025 = vpop.permute.xlu0 %2024
        %2026 = vrot.lane.b32.xlu0 %v725, 80
        %v2027 = vpop.permute.xlu0 %2026
        %2028 = vrot.lane.b32.xlu0 %v723, 16
        %v2029 = vpop.permute.xlu0 %2028
        %2030 = vrot.lane.b32.xlu0 %v725, 16
        %v2031 = vpop.permute.xlu0 %2030
        %v2033 = vsel %vm737, %v2025, 0
        %v2036 = vsel %vm737, %v2027, 0
        %v2039 = vsel %vm737, %v2029, 0
        %v2042 = vsel %vm737, %v2031, 0
        %2044 = vmatprep.subr.bf16.mxu0 0
        %2045 = vmatpush1.bf16.xpose.msra.mxu0 %v2039
        %2046 = vmatprep.subr.bf16.mxu0 0
        %2047 = vmatpush1.bf16.xpose.msra.mxu0 %v2042
        %2048 = vmatprep.subr.bf16.mxu0 0
        %2049 = vmatpush1.bf16.xpose.msra.mxu0 0
        %2050 = vmatprep.subr.bf16.mxu0 0
        %2051 = vmatpush1.bf16.xpose.msra.mxu0 0
        %2052 = vmatprep.subr.bf16.mxu0 0
        %2053 = vmatpush1.bf16.xpose.msra.mxu0 0
        %2054 = vmatprep.subr.bf16.mxu0 0
        %2055 = vmatpush1.bf16.xpose.msra.mxu0 0
        %2056 = vmatprep.subr.bf16.mxu0 0
        %2057 = vmatpush1.bf16.xpose.msra.mxu0 0
        %2058 = vmatprep.subr.bf16.mxu0 0
        %2059 = vmatpush1.bf16.xpose.msra.mxu0 0
        %2060 = vmatprep.subr.bf16.mxu0 0
        %2061 = vmatpush1.bf16.xpose.msra.mxu0 0
        %2062 = vmatprep.subr.bf16.mxu0 0
        %2063 = vmatpush1.bf16.xpose.msra.mxu0 0
        %2064 = vmatprep.subr.bf16.mxu0 0
        %2065 = vmatpush1.bf16.xpose.msra.mxu0 0
        %2066 = vmatprep.subr.bf16.mxu0 0
        %2067 = vmatpush1.bf16.xpose.msra.mxu0 0
        %2068 = vmatprep.subr.bf16.mxu0 0
        %2069 = vmatpush1.bf16.xpose.msra.mxu0 0
        %2070 = vmatprep.subr.bf16.mxu0 0
        %2071 = vmatpush1.bf16.xpose.msra.mxu0 0
        %2072 = vmatprep.subr.bf16.mxu0 0
        %2073 = vmatpush1.bf16.xpose.msra.mxu0 0
        %2074 = vmatprep.subr.bf16.mxu0 0
        %2075 = vmatpush1.bf16.xpose.msra.mxu0 0
        %2076 = vmatprep.mubr.bf16.mxu0 0
        %2077 = vmatmul.mubr.bf16.gmra.mrb[0].mxu0 %v2033
        %v2078 = vpop.f32.mrb[0].mxu0
        %v2079 = vadd.f32 %v727, %v2078
        %v2080 = vpop.f32.mrb[0].mxu0
        %v2081 = vpop.f32.mrb[0].mxu0
        %v2082 = vadd.f32 %v728, %v2081
        %v2083 = vpop.f32.mrb[0].mxu0
        %2084 = vmatprep.mubr.bf16.mxu0 0
        %2085 = vmatmul.mubr.bf16.gmra.mrb[0].mxu0 %v2036
        %v2086 = vpop.f32.mrb[0].mxu0
        %v2087 = vadd.f32 %v729, %v2086
        %v2088 = vpop.f32.mrb[0].mxu0
        %v2089 = vpop.f32.mrb[0].mxu0
        %v2090 = vadd.f32 %v730, %v2089
        %v2091 = vpop.f32.mrb[0].mxu0
        %2092 = vdwg.mxu0
        %v2093 = vsel %vm799, %v2079, -inf
        %2094 = vmax.xlane.f32.xlu0 %v2093
        %v2095 = vpop.xlane.xlu0 %2094
        %v2096 = vsel %vm799, %v2082, -inf
        %2097 = vmax.xlane.f32.xlu0 %v2096
        %v2098 = vpop.xlane.xlu0 %2097
        %v2099 = vsel %vm799, %v2087, -inf
        %2100 = vmax.xlane.f32.xlu0 %v2099
        %v2101 = vpop.xlane.xlu0 %2100
        %v2102 = vsel %vm799, %v2090, -inf
        %2103 = vmax.xlane.f32.xlu0 %v2102
        %v2104 = vpop.xlane.xlu0 %2103
        %v2105 = vsub.f32 %v2079, %v2095
        %v2106 = vsub.f32 %v2082, %v2098
        %v2107 = vsub.f32 %v2087, %v2101
        %v2108 = vsub.f32 %v2090, %v2104
        %v2109 = vmul.f32 %v2105, 1.442695
        %v2110 = vpow.pop %v2109
        %v2111 = vmul.f32 %v2106, 1.442695
        %v2112 = vpow.pop %v2111
        %v2113 = vmul.f32 %v2107, 1.442695
        %v2114 = vpow.pop %v2113
        %v2115 = vmul.f32 %v2108, 1.442695
        %v2116 = vpow.pop %v2115
        %v2117 = vsel %vm799, %v2110, 0.0
        %2118 = vadd.xlane.f32.xlu0 %v2117
        %v2119 = vpop.xlane.xlu0 %2118
        %v2120 = vsel %vm799, %v2112, 0.0
        %2121 = vadd.xlane.f32.xlu0 %v2120
        %v2122 = vpop.xlane.xlu0 %2121
        %v2123 = vsel %vm799, %v2114, 0.0
        %2124 = vadd.xlane.f32.xlu0 %v2123
        %v2125 = vpop.xlane.xlu0 %2124
        %v2126 = vsel %vm799, %v2116, 0.0
        %2127 = vadd.xlane.f32.xlu0 %v2126
        %v2128 = vpop.xlane.xlu0 %2127
        %v2129 = vrcp.pop %v2119
        %v2130 = vrcp.pop %v2122
        %v2131 = vrcp.pop %v2125
        %v2132 = vrcp.pop %v2128
        %v2133 = vmul.f32 %v2110, %v2129
        %v2134 = vmul.f32 %v2112, %v2130
        %v2135 = vmul.f32 %v2114, %v2131
        %v2136 = vmul.f32 %v2116, %v2132
        %v2137 = vpack.c.bf16 %v2134, %v2133
        %v2138 = vpack.c.bf16 %v2136, %v2135
        %2139 = vrot.lane.b32.xlu0 %v724, 80
        %v2140 = vpop.permute.xlu0 %2139
        %2141 = vrot.lane.b32.xlu0 %v726, 80
        %v2142 = vpop.permute.xlu0 %2141
        %v2146 = vsel %vm799, %v2137, 0
        %v2149 = vsel %vm799, %v2138, 0
        %2151 = vmatprep.subr.bf16.mxu0 0
        %2152 = vmatpush1.bf16.msra.mxu0 %v2140
        %2153 = vmatprep.subr.bf16.mxu0 0
        %2154 = vmatpush1.bf16.msra.mxu0 %v2142
        %2155 = vmatprep.subr.bf16.mxu0 0
        %2156 = vmatpush1.bf16.msra.mxu0 0
        %2157 = vmatprep.subr.bf16.mxu0 0
        %2158 = vmatpush1.bf16.msra.mxu0 0
        %2159 = vmatprep.subr.bf16.mxu0 0
        %2160 = vmatpush1.bf16.msra.mxu0 0
        %2161 = vmatprep.subr.bf16.mxu0 0
        %2162 = vmatpush1.bf16.msra.mxu0 0
        %2163 = vmatprep.subr.bf16.mxu0 0
        %2164 = vmatpush1.bf16.msra.mxu0 0
        %2165 = vmatprep.subr.bf16.mxu0 0
        %2166 = vmatpush1.bf16.msra.mxu0 0
        %2167 = vmatprep.subr.bf16.mxu0 0
        %2168 = vmatpush1.bf16.msra.mxu0 0
        %2169 = vmatprep.subr.bf16.mxu0 0
        %2170 = vmatpush1.bf16.msra.mxu0 0
        %2171 = vmatprep.subr.bf16.mxu0 0
        %2172 = vmatpush1.bf16.msra.mxu0 0
        %2173 = vmatprep.subr.bf16.mxu0 0
        %2174 = vmatpush1.bf16.msra.mxu0 0
        %2175 = vmatprep.subr.bf16.mxu0 0
        %2176 = vmatpush1.bf16.msra.mxu0 0
        %2177 = vmatprep.subr.bf16.mxu0 0
        %2178 = vmatpush1.bf16.msra.mxu0 0
        %2179 = vmatprep.subr.bf16.mxu0 0
        %2180 = vmatpush1.bf16.msra.mxu0 0
        %2181 = vmatprep.subr.bf16.mxu0 0
        %2182 = vmatpush1.bf16.msra.mxu0 0
        %2183 = vmatprep.mubr.bf16.mxu0 0
        %2184 = vmatmul.mubr.bf16.gmra.mrb[0].mxu0 %v2146
        %v2185 = vpop.f32.mrb[0].mxu0
        %v2186 = vadd.f32 0.0, %v2185
        %v2187 = vpop.f32.mrb[0].mxu0
        %v2188 = vpop.f32.mrb[0].mxu0
        %v2189 = vadd.f32 0.0, %v2188
        %v2190 = vpop.f32.mrb[0].mxu0
        %2191 = vmatprep.mubr.bf16.mxu0 0
        %2192 = vmatmul.mubr.bf16.gmra.mrb[0].mxu0 %v2149
        %v2193 = vpop.f32.mrb[0].mxu0
        %v2194 = vadd.f32 0.0, %v2193
        %v2195 = vpop.f32.mrb[0].mxu0
        %v2196 = vpop.f32.mrb[0].mxu0
        %v2197 = vadd.f32 0.0, %v2196
        %v2198 = vpop.f32.mrb[0].mxu0
        %2199 = vdwg.mxu0
        %v2200 = vpack.c.bf16 %v2189, %v2186
        %v2201 = vpack.c.bf16 %v2197, %v2194
        %2204 = vrot.lane.b32.xlu0 %v2200, 48
        %v2205 = vpop.permute.xlu0 %2204
        %2206 = vrot.lane.b32.xlu0 %v2201, 48
        %v2207 = vpop.permute.xlu0 %2206
        %2210 = vst.msk [vmem:[#allocation3 + $0x10] sm:$0xff] %vm1471, %v2205
        %2211 = vst.msk [vmem:[#allocation3 + $0x18] sm:$0xff] %vm1471, %v2207
        %v2212 = vld [vmem:[#allocation3] sm:$0xff]
        %v2213 = vld [vmem:[#allocation3 + $0x8] sm:$0xff]
        %v2214 = vld [vmem:[#allocation3 + $0x10] sm:$0xff]
        %v2215 = vld [vmem:[#allocation3 + $0x18] sm:$0xff]
        %v2216 = vld [vmem:[%s394] sm:$0xf]
        %v2217 = vld [vmem:[%s394 + $0x4] sm:$0xf]
        %v2218 = vld [vmem:[%s394 + $0x8] sm:$0xf]
        %v2219 = vld [vmem:[%s394 + $0xc] sm:$0xf]
        %v2220 = vld [vmem:[%s394 + $0x10] sm:$0xf]
        %v2221 = vld [vmem:[%s394 + $0x14] sm:$0xf]
        %v2222 = vld [vmem:[%s394 + $0x18] sm:$0xf]
        %v2223 = vld [vmem:[%s394 + $0x1c] sm:$0xf]
        %v2232 = vunpack.c.l.b16 %v2216
        %v2233 = vunpack.c.l.b16 %v2217
        %v2234 = vunpack.c.l.b16 %v2218
        %v2235 = vunpack.c.l.b16 %v2219
        %v2236 = vunpack.c.l.b16 %v2220
        %v2237 = vunpack.c.l.b16 %v2221
        %v2238 = vunpack.c.l.b16 %v2222
        %v2239 = vunpack.c.l.b16 %v2223
        %v2240 = vpack.c.b16 %v2233, %v2232
        %v2241 = vpack.c.b16 %v2235, %v2234
        %v2242 = vpack.c.b16 %v2237, %v2236
        %v2243 = vpack.c.b16 %v2239, %v2238
        %v2249 = vsel %vm440, %v2212, 0
        %v2252 = vsel %vm440, %v2213, 0
        %v2255 = vsel %vm440, %v2214, 0
        %v2258 = vsel %vm440, %v2215, 0
        %2260 = vmatprep.subr.bf16.mxu0 0
        %2261 = vmatpush1.bf16.msra.mxu0 %v2240
        %2262 = vmatprep.subr.bf16.mxu0 0
        %2263 = vmatpush1.bf16.msra.mxu0 %v2241
        %2264 = vmatprep.subr.bf16.mxu0 0
        %2265 = vmatpush1.bf16.msra.mxu0 %v2242
        %2266 = vmatprep.subr.bf16.mxu0 0
        %2267 = vmatpush1.bf16.msra.mxu0 %v2243
        %2268 = vmatprep.subr.bf16.mxu0 0
        %2269 = vmatpush1.bf16.msra.mxu0 0
        %2270 = vmatprep.subr.bf16.mxu0 0
        %2271 = vmatpush1.bf16.msra.mxu0 0
        %2272 = vmatprep.subr.bf16.mxu0 0
        %2273 = vmatpush1.bf16.msra.mxu0 0
        %2274 = vmatprep.subr.bf16.mxu0 0
        %2275 = vmatpush1.bf16.msra.mxu0 0
        %2276 = vmatprep.subr.bf16.mxu0 0
        %2277 = vmatpush1.bf16.msra.mxu0 0
        %2278 = vmatprep.subr.bf16.mxu0 0
        %2279 = vmatpush1.bf16.msra.mxu0 0
        %2280 = vmatprep.subr.bf16.mxu0 0
        %2281 = vmatpush1.bf16.msra.mxu0 0
        %2282 = vmatprep.subr.bf16.mxu0 0
        %2283 = vmatpush1.bf16.msra.mxu0 0
        %2284 = vmatprep.subr.bf16.mxu0 0
        %2285 = vmatpush1.bf16.msra.mxu0 0
        %2286 = vmatprep.subr.bf16.mxu0 0
        %2287 = vmatpush1.bf16.msra.mxu0 0
        %2288 = vmatprep.subr.bf16.mxu0 0
        %2289 = vmatpush1.bf16.msra.mxu0 0
        %2290 = vmatprep.subr.bf16.mxu0 0
        %2291 = vmatpush1.bf16.msra.mxu0 0
        %2292 = vmatprep.mubr.bf16.mxu0 0
        %2293 = vmatmul.mubr.bf16.gmra.mrb[0].mxu0 %v2249
        %v2294 = vpop.f32.mrb[0].mxu0
        %v2295 = vadd.f32 0.0, %v2294
        %v2296 = vpop.f32.mrb[0].mxu0
        %v2297 = vpop.f32.mrb[0].mxu0
        %v2298 = vadd.f32 0.0, %v2297
        %v2299 = vpop.f32.mrb[0].mxu0
        %2300 = vmatprep.mubr.bf16.mxu0 0
        %2301 = vmatmul.mubr.bf16.gmra.mrb[0].mxu0 %v2252
        %v2302 = vpop.f32.mrb[0].mxu0
        %v2303 = vadd.f32 0.0, %v2302
        %v2304 = vpop.f32.mrb[0].mxu0
        %v2305 = vpop.f32.mrb[0].mxu0
        %v2306 = vadd.f32 0.0, %v2305
        %v2307 = vpop.f32.mrb[0].mxu0
        %2308 = vmatprep.mubr.bf16.mxu0 0
        %2309 = vmatmul.mubr.bf16.gmra.mrb[0].mxu0 %v2255
        %v2310 = vpop.f32.mrb[0].mxu0
        %v2311 = vadd.f32 0.0, %v2310
        %v2312 = vpop.f32.mrb[0].mxu0
        %v2313 = vpop.f32.mrb[0].mxu0
        %v2314 = vadd.f32 0.0, %v2313
        %v2315 = vpop.f32.mrb[0].mxu0
        %2316 = vmatprep.mubr.bf16.mxu0 0
        %2317 = vmatmul.mubr.bf16.gmra.mrb[0].mxu0 %v2258
        %v2318 = vpop.f32.mrb[0].mxu0
        %v2319 = vadd.f32 0.0, %v2318
        %v2320 = vpop.f32.mrb[0].mxu0
        %v2321 = vpop.f32.mrb[0].mxu0
        %v2322 = vadd.f32 0.0, %v2321
        %v2323 = vpop.f32.mrb[0].mxu0
        %2324 = vdwg.mxu0
        %v2325 = vadd.f32 %v427, %v2295
        %v2326 = vadd.f32 %v428, %v2298
        %v2327 = vadd.f32 %v429, %v2303
        %v2328 = vadd.f32 %v430, %v2306
        %v2329 = vadd.f32 %v431, %v2311
        %v2330 = vadd.f32 %v432, %v2314
        %v2331 = vadd.f32 %v433, %v2319
        %v2332 = vadd.f32 %v434, %v2322
        %v2334 = vlaneseq
        %v2335 = vshrl.u32 %v2334, 7
        %v2336 = vsub.s32 0, %v2335
        %v2337 = vrot.slane %v437, %v2336
        %v2339 = vadd.f32 %v2325, %v2337
        %v2340 = vadd.f32 %v2326, %v2337
        %v2341 = vadd.f32 %v2327, %v2337
        %v2342 = vadd.f32 %v2328, %v2337
        %v2343 = vadd.f32 %v2329, %v2337
        %v2344 = vadd.f32 %v2330, %v2337
        %v2345 = vadd.f32 %v2331, %v2337
        %v2346 = vadd.f32 %v2332, %v2337
        %v2347 = vsel %vm440, %v2339, 0.0
        %2348 = vadd.xlane.f32.xlu0 %v2347
        %v2349 = vpop.xlane.xlu0 %2348
        %v2350 = vsel %vm440, %v2340, 0.0
        %2351 = vadd.xlane.f32.xlu0 %v2350
        %v2352 = vpop.xlane.xlu0 %2351
        %v2353 = vsel %vm440, %v2341, 0.0
        %2354 = vadd.xlane.f32.xlu0 %v2353
        %v2355 = vpop.xlane.xlu0 %2354
        %v2356 = vsel %vm440, %v2342, 0.0
        %2357 = vadd.xlane.f32.xlu0 %v2356
        %v2358 = vpop.xlane.xlu0 %2357
        %v2359 = vsel %vm440, %v2343, 0.0
        %2360 = vadd.xlane.f32.xlu0 %v2359
        %v2361 = vpop.xlane.xlu0 %2360
        %v2362 = vsel %vm440, %v2344, 0.0
        %2363 = vadd.xlane.f32.xlu0 %v2362
        %v2364 = vpop.xlane.xlu0 %2363
        %v2365 = vsel %vm440, %v2345, 0.0
        %2366 = vadd.xlane.f32.xlu0 %v2365
        %v2367 = vpop.xlane.xlu0 %2366
        %v2368 = vsel %vm440, %v2346, 0.0
        %2369 = vadd.xlane.f32.xlu0 %v2368
        %v2370 = vpop.xlane.xlu0 %2369
        %v2371 = vmul.f32 %v2349, %v465
        %v2372 = vmul.f32 %v2352, %v465
        %v2373 = vmul.f32 %v2355, %v465
        %v2374 = vmul.f32 %v2358, %v465
        %v2375 = vmul.f32 %v2361, %v465
        %v2376 = vmul.f32 %v2364, %v465
        %v2377 = vmul.f32 %v2367, %v465
        %v2378 = vmul.f32 %v2370, %v465
        %v2379 = vsub.f32 %v2339, %v2371
        %v2380 = vsub.f32 %v2340, %v2372
        %v2381 = vsub.f32 %v2341, %v2373
        %v2382 = vsub.f32 %v2342, %v2374
        %v2383 = vsub.f32 %v2343, %v2375
        %v2384 = vsub.f32 %v2344, %v2376
        %v2385 = vsub.f32 %v2345, %v2377
        %v2386 = vsub.f32 %v2346, %v2378
        %v2387 = vmul.f32 %v2379, %v2379
        %v2388 = vmul.f32 %v2380, %v2380
        %v2389 = vmul.f32 %v2381, %v2381
        %v2390 = vmul.f32 %v2382, %v2382
        %v2391 = vmul.f32 %v2383, %v2383
        %v2392 = vmul.f32 %v2384, %v2384
        %v2393 = vmul.f32 %v2385, %v2385
        %v2394 = vmul.f32 %v2386, %v2386
        %v2395 = vsel %vm440, %v2387, 0.0
        %2396 = vadd.xlane.f32.xlu0 %v2395
        %v2397 = vpop.xlane.xlu0 %2396
        %v2398 = vsel %vm440, %v2388, 0.0
        %2399 = vadd.xlane.f32.xlu0 %v2398
        %v2400 = vpop.xlane.xlu0 %2399
        %v2401 = vsel %vm440, %v2389, 0.0
        %2402 = vadd.xlane.f32.xlu0 %v2401
        %v2403 = vpop.xlane.xlu0 %2402
        %v2404 = vsel %vm440, %v2390, 0.0
        %2405 = vadd.xlane.f32.xlu0 %v2404
        %v2406 = vpop.xlane.xlu0 %2405
        %v2407 = vsel %vm440, %v2391, 0.0
        %2408 = vadd.xlane.f32.xlu0 %v2407
        %v2409 = vpop.xlane.xlu0 %2408
        %v2410 = vsel %vm440, %v2392, 0.0
        %2411 = vadd.xlane.f32.xlu0 %v2410
        %v2412 = vpop.xlane.xlu0 %2411
        %v2413 = vsel %vm440, %v2393, 0.0
        %2414 = vadd.xlane.f32.xlu0 %v2413
        %v2415 = vpop.xlane.xlu0 %2414
        %v2416 = vsel %vm440, %v2394, 0.0
        %2417 = vadd.xlane.f32.xlu0 %v2416
        %v2418 = vpop.xlane.xlu0 %2417
        %v2419 = vmul.f32 %v2397, %v465
        %v2420 = vmul.f32 %v2400, %v465
        %v2421 = vmul.f32 %v2403, %v465
        %v2422 = vmul.f32 %v2406, %v465
        %v2423 = vmul.f32 %v2409, %v465
        %v2424 = vmul.f32 %v2412, %v465
        %v2425 = vmul.f32 %v2415, %v465
        %v2426 = vmul.f32 %v2418, %v465
        %v2427 = vadd.f32 %v2419, 1e-05
        %v2428 = vadd.f32 %v2420, 1e-05
        %v2429 = vadd.f32 %v2421, 1e-05
        %v2430 = vadd.f32 %v2422, 1e-05
        %v2431 = vadd.f32 %v2423, 1e-05
        %v2432 = vadd.f32 %v2424, 1e-05
        %v2433 = vadd.f32 %v2425, 1e-05
        %v2434 = vadd.f32 %v2426, 1e-05
        %v2435 = vrsqrt.pop %v2427
        %v2436 = vrsqrt.pop %v2428
        %v2437 = vrsqrt.pop %v2429
        %v2438 = vrsqrt.pop %v2430
        %v2439 = vrsqrt.pop %v2431
        %v2440 = vrsqrt.pop %v2432
        %v2441 = vrsqrt.pop %v2433
        %v2442 = vrsqrt.pop %v2434
        %v2443 = vmul.f32 %v2379, %v2435
        %v2444 = vmul.f32 %v2380, %v2436
        %v2445 = vmul.f32 %v2381, %v2437
        %v2446 = vmul.f32 %v2382, %v2438
        %v2447 = vmul.f32 %v2383, %v2439
        %v2448 = vmul.f32 %v2384, %v2440
        %v2449 = vmul.f32 %v2385, %v2441
        %v2450 = vmul.f32 %v2386, %v2442
        %v2452 = vlaneseq
        %v2453 = vshrl.u32 %v2452, 7
        %v2454 = vsub.s32 0, %v2453
        %v2455 = vrot.slane %v436, %v2454
        %v2457 = vmul.f32 %v2443, %v2455
        %v2458 = vmul.f32 %v2444, %v2455
        %v2459 = vmul.f32 %v2445, %v2455
        %v2460 = vmul.f32 %v2446, %v2455
        %v2461 = vmul.f32 %v2447, %v2455
        %v2462 = vmul.f32 %v2448, %v2455
        %v2463 = vmul.f32 %v2449, %v2455
        %v2464 = vmul.f32 %v2450, %v2455
        %2465 = vrot.lane.b32.xlu0 %v2455, 64
        %v2466 = vpop.permute.xlu0 %2465
        %v2468 = vadd.f32 %v2457, %v2466
        %v2469 = vadd.f32 %v2458, %v2466
        %v2470 = vadd.f32 %v2459, %v2466
        %v2471 = vadd.f32 %v2460, %v2466
        %v2472 = vadd.f32 %v2461, %v2466
        %v2473 = vadd.f32 %v2462, %v2466
        %v2474 = vadd.f32 %v2463, %v2466
        %v2475 = vadd.f32 %v2464, %v2466
        %v2476 = vpack.c.bf16 %v2469, %v2468
        %v2477 = vpack.c.bf16 %v2471, %v2470
        %v2478 = vpack.c.bf16 %v2473, %v2472
        %v2479 = vpack.c.bf16 %v2475, %v2474
        %v2480 = vld [vmem:[%s399] sm:$0xff]
        %v2481 = vld [vmem:[%s399 + $0x8] sm:$0xff]
        %v2482 = vld [vmem:[%s399 + $0x10] sm:$0xff]
        %v2483 = vld [vmem:[%s399 + $0x18] sm:$0xff]
        %v2484 = vld [vmem:[%s399 + $0x20] sm:$0xff]
        %v2485 = vld [vmem:[%s399 + $0x28] sm:$0xff]
        %v2486 = vld [vmem:[%s399 + $0x30] sm:$0xff]
        %v2487 = vld [vmem:[%s399 + $0x38] sm:$0xff]
        %v2489 = vlaneseq
        %v2490 = vshrl.u32 %v2489, 7
        %v2491 = vsub.s32 0, %v2490
        %v2492 = vrot.slane %v439, %v2491
        %v2493 = vlaneseq
        %v2494 = vshrl.u32 %v2493, 7
        %v2495 = vsub.s32 1, %v2494
        %v2496 = vrot.slane %v439, %v2495
        %v2497 = vlaneseq
        %v2498 = vshrl.u32 %v2497, 7
        %v2499 = vsub.s32 2, %v2498
        %v2500 = vrot.slane %v439, %v2499
        %v2509 = vunpack.c.l.b16 %v2480
        %v2510 = vunpack.c.h.b16 %v2480
        %v2511 = vunpack.c.l.b16 %v2481
        %v2512 = vunpack.c.h.b16 %v2481
        %v2513 = vunpack.c.l.b16 %v2482
        %v2514 = vunpack.c.h.b16 %v2482
        %v2515 = vunpack.c.l.b16 %v2483
        %v2516 = vunpack.c.h.b16 %v2483
        %v2517 = vunpack.c.l.b16 %v2484
        %v2518 = vunpack.c.h.b16 %v2484
        %v2519 = vunpack.c.l.b16 %v2485
        %v2520 = vunpack.c.h.b16 %v2485
        %v2521 = vunpack.c.l.b16 %v2486
        %v2522 = vunpack.c.h.b16 %v2486
        %v2523 = vunpack.c.l.b16 %v2487
        %v2524 = vunpack.c.h.b16 %v2487
        %v2525 = vpack.c.b16 %v2511, %v2509
        %v2526 = vpack.c.b16 %v2512, %v2510
        %v2527 = vpack.c.b16 %v2515, %v2513
        %v2528 = vpack.c.b16 %v2516, %v2514
        %v2529 = vpack.c.b16 %v2519, %v2517
        %v2530 = vpack.c.b16 %v2520, %v2518
        %v2531 = vpack.c.b16 %v2523, %v2521
        %v2532 = vpack.c.b16 %v2524, %v2522
        %2541 = vrot.lane.b32.xlu0 %v2492, 64
        %v2542 = vpop.permute.xlu0 %2541
        %2543 = vrot.lane.b32.xlu0 %v2496, 64
        %v2544 = vpop.permute.xlu0 %2543
        %2545 = vrot.lane.b32.xlu0 %v2500, 64
        %v2546 = vpop.permute.xlu0 %2545
        %v2547 = vsel %vm440, %v2542, %v2544
        %v2548 = vsel %vm440, %v2544, %v2546
        %v2552 = vsel %vm440, %v2476, 0
        %v2555 = vsel %vm440, %v2477, 0
        %v2558 = vsel %vm440, %v2478, 0
        %v2561 = vsel %vm440, %v2479, 0
        %2563 = vmatprep.subr.bf16.mxu0 %v2526
        %2564 = vmatpush1.bf16.msra.mxu0 %v2525
        %2565 = vmatprep.subr.bf16.mxu0 %v2528
        %2566 = vmatpush1.bf16.msra.mxu0 %v2527
        %2567 = vmatprep.subr.bf16.mxu0 %v2530
        %2568 = vmatpush1.bf16.msra.mxu0 %v2529
        %2569 = vmatprep.subr.bf16.mxu0 %v2532
        %2570 = vmatpush1.bf16.msra.mxu0 %v2531
        %2571 = vmatprep.subr.bf16.mxu0 0
        %2572 = vmatpush1.bf16.msra.mxu0 0
        %2573 = vmatprep.subr.bf16.mxu0 0
        %2574 = vmatpush1.bf16.msra.mxu0 0
        %2575 = vmatprep.subr.bf16.mxu0 0
        %2576 = vmatpush1.bf16.msra.mxu0 0
        %2577 = vmatprep.subr.bf16.mxu0 0
        %2578 = vmatpush1.bf16.msra.mxu0 0
        %2579 = vmatprep.subr.bf16.mxu0 0
        %2580 = vmatpush1.bf16.msra.mxu0 0
        %2581 = vmatprep.subr.bf16.mxu0 0
        %2582 = vmatpush1.bf16.msra.mxu0 0
        %2583 = vmatprep.subr.bf16.mxu0 0
        %2584 = vmatpush1.bf16.msra.mxu0 0
        %2585 = vmatprep.subr.bf16.mxu0 0
        %2586 = vmatpush1.bf16.msra.mxu0 0
        %2587 = vmatprep.subr.bf16.mxu0 0
        %2588 = vmatpush1.bf16.msra.mxu0 0
        %2589 = vmatprep.subr.bf16.mxu0 0
        %2590 = vmatpush1.bf16.msra.mxu0 0
        %2591 = vmatprep.subr.bf16.mxu0 0
        %2592 = vmatpush1.bf16.msra.mxu0 0
        %2593 = vmatprep.subr.bf16.mxu0 0
        %2594 = vmatpush1.bf16.msra.mxu0 0
        %2595 = vmatprep.mubr.bf16.mxu0 0
        %2596 = vmatmul.mubr.bf16.gmra.mrb[0].mxu0 %v2552
        %v2597 = vpop.f32.mrb[0].mxu0
        %v2598 = vadd.f32 %v2547, %v2597
        %v2599 = vpop.f32.mrb[0].mxu0
        %v2600 = vadd.f32 %v2548, %v2599
        %v2601 = vpop.f32.mrb[0].mxu0
        %v2602 = vadd.f32 %v2547, %v2601
        %v2603 = vpop.f32.mrb[0].mxu0
        %v2604 = vadd.f32 %v2548, %v2603
        %2605 = vmatprep.mubr.bf16.mxu0 0
        %2606 = vmatmul.mubr.bf16.gmra.mrb[0].mxu0 %v2555
        %v2607 = vpop.f32.mrb[0].mxu0
        %v2608 = vadd.f32 %v2547, %v2607
        %v2609 = vpop.f32.mrb[0].mxu0
        %v2610 = vadd.f32 %v2548, %v2609
        %v2611 = vpop.f32.mrb[0].mxu0
        %v2612 = vadd.f32 %v2547, %v2611
        %v2613 = vpop.f32.mrb[0].mxu0
        %v2614 = vadd.f32 %v2548, %v2613
        %2615 = vmatprep.mubr.bf16.mxu0 0
        %2616 = vmatmul.mubr.bf16.gmra.mrb[0].mxu0 %v2558
        %v2617 = vpop.f32.mrb[0].mxu0
        %v2618 = vadd.f32 %v2547, %v2617
        %v2619 = vpop.f32.mrb[0].mxu0
        %v2620 = vadd.f32 %v2548, %v2619
        %v2621 = vpop.f32.mrb[0].mxu0
        %v2622 = vadd.f32 %v2547, %v2621
        %v2623 = vpop.f32.mrb[0].mxu0
        %v2624 = vadd.f32 %v2548, %v2623
        %2625 = vmatprep.mubr.bf16.mxu0 0
        %2626 = vmatmul.mubr.bf16.gmra.mrb[0].mxu0 %v2561
        %v2627 = vpop.f32.mrb[0].mxu0
        %v2628 = vadd.f32 %v2547, %v2627
        %v2629 = vpop.f32.mrb[0].mxu0
        %v2630 = vadd.f32 %v2548, %v2629
        %v2631 = vpop.f32.mrb[0].mxu0
        %v2632 = vadd.f32 %v2547, %v2631
        %v2633 = vpop.f32.mrb[0].mxu0
        %v2634 = vadd.f32 %v2548, %v2633
        %2635 = vdwg.mxu0
        %v2636 = vmul.f32 %v2598, 0.5
        %v2637 = vmul.f32 %v2600, 0.5
        %v2638 = vmul.f32 %v2602, 0.5
        %v2639 = vmul.f32 %v2604, 0.5
        %v2640 = vmul.f32 %v2608, 0.5
        %v2641 = vmul.f32 %v2610, 0.5
        %v2642 = vmul.f32 %v2612, 0.5
        %v2643 = vmul.f32 %v2614, 0.5
        %v2644 = vmul.f32 %v2618, 0.5
        %v2645 = vmul.f32 %v2620, 0.5
        %v2646 = vmul.f32 %v2622, 0.5
        %v2647 = vmul.f32 %v2624, 0.5
        %v2648 = vmul.f32 %v2628, 0.5
        %v2649 = vmul.f32 %v2630, 0.5
        %v2650 = vmul.f32 %v2632, 0.5
        %v2651 = vmul.f32 %v2634, 0.5
        %v2652 = vmul.f32 %v2598, 0.044715
        %v2653 = vmul.f32 %v2600, 0.044715
        %v2654 = vmul.f32 %v2602, 0.044715
        %v2655 = vmul.f32 %v2604, 0.044715
        %v2656 = vmul.f32 %v2608, 0.044715
        %v2657 = vmul.f32 %v2610, 0.044715
        %v2658 = vmul.f32 %v2612, 0.044715
        %v2659 = vmul.f32 %v2614, 0.044715
        %v2660 = vmul.f32 %v2618, 0.044715
        %v2661 = vmul.f32 %v2620, 0.044715
        %v2662 = vmul.f32 %v2622, 0.044715
        %v2663 = vmul.f32 %v2624, 0.044715
        %v2664 = vmul.f32 %v2628, 0.044715
        %v2665 = vmul.f32 %v2630, 0.044715
        %v2666 = vmul.f32 %v2632, 0.044715
        %v2667 = vmul.f32 %v2634, 0.044715
        %v2668 = vmul.f32 %v2652, %v2598
        %v2669 = vmul.f32 %v2653, %v2600
        %v2670 = vmul.f32 %v2654, %v2602
        %v2671 = vmul.f32 %v2655, %v2604
        %v2672 = vmul.f32 %v2656, %v2608
        %v2673 = vmul.f32 %v2657, %v2610
        %v2674 = vmul.f32 %v2658, %v2612
        %v2675 = vmul.f32 %v2659, %v2614
        %v2676 = vmul.f32 %v2660, %v2618
        %v2677 = vmul.f32 %v2661, %v2620
        %v2678 = vmul.f32 %v2662, %v2622
        %v2679 = vmul.f32 %v2663, %v2624
        %v2680 = vmul.f32 %v2664, %v2628
        %v2681 = vmul.f32 %v2665, %v2630
        %v2682 = vmul.f32 %v2666, %v2632
        %v2683 = vmul.f32 %v2667, %v2634
        %v2684 = vmul.f32 %v2668, %v2598
        %v2685 = vmul.f32 %v2669, %v2600
        %v2686 = vmul.f32 %v2670, %v2602
        %v2687 = vmul.f32 %v2671, %v2604
        %v2688 = vmul.f32 %v2672, %v2608
        %v2689 = vmul.f32 %v2673, %v2610
        %v2690 = vmul.f32 %v2674, %v2612
        %v2691 = vmul.f32 %v2675, %v2614
        %v2692 = vmul.f32 %v2676, %v2618
        %v2693 = vmul.f32 %v2677, %v2620
        %v2694 = vmul.f32 %v2678, %v2622
        %v2695 = vmul.f32 %v2679, %v2624
        %v2696 = vmul.f32 %v2680, %v2628
        %v2697 = vmul.f32 %v2681, %v2630
        %v2698 = vmul.f32 %v2682, %v2632
        %v2699 = vmul.f32 %v2683, %v2634
        %v2700 = vadd.f32 %v2598, %v2684
        %v2701 = vadd.f32 %v2600, %v2685
        %v2702 = vadd.f32 %v2602, %v2686
        %v2703 = vadd.f32 %v2604, %v2687
        %v2704 = vadd.f32 %v2608, %v2688
        %v2705 = vadd.f32 %v2610, %v2689
        %v2706 = vadd.f32 %v2612, %v2690
        %v2707 = vadd.f32 %v2614, %v2691
        %v2708 = vadd.f32 %v2618, %v2692
        %v2709 = vadd.f32 %v2620, %v2693
        %v2710 = vadd.f32 %v2622, %v2694
        %v2711 = vadd.f32 %v2624, %v2695
        %v2712 = vadd.f32 %v2628, %v2696
        %v2713 = vadd.f32 %v2630, %v2697
        %v2714 = vadd.f32 %v2632, %v2698
        %v2715 = vadd.f32 %v2634, %v2699
        %v2716 = vmul.f32 %v2700, 0.7978846
        %v2717 = vmul.f32 %v2701, 0.7978846
        %v2718 = vmul.f32 %v2702, 0.7978846
        %v2719 = vmul.f32 %v2703, 0.7978846
        %v2720 = vmul.f32 %v2704, 0.7978846
        %v2721 = vmul.f32 %v2705, 0.7978846
        %v2722 = vmul.f32 %v2706, 0.7978846
        %v2723 = vmul.f32 %v2707, 0.7978846
        %v2724 = vmul.f32 %v2708, 0.7978846
        %v2725 = vmul.f32 %v2709, 0.7978846
        %v2726 = vmul.f32 %v2710, 0.7978846
        %v2727 = vmul.f32 %v2711, 0.7978846
        %v2728 = vmul.f32 %v2712, 0.7978846
        %v2729 = vmul.f32 %v2713, 0.7978846
        %v2730 = vmul.f32 %v2714, 0.7978846
        %v2731 = vmul.f32 %v2715, 0.7978846
        %v2732 = vtanh.pop %v2716
        %v2733 = vtanh.pop %v2717
        %v2734 = vtanh.pop %v2718
        %v2735 = vtanh.pop %v2719
        %v2736 = vtanh.pop %v2720
        %v2737 = vtanh.pop %v2721
        %v2738 = vtanh.pop %v2722
        %v2739 = vtanh.pop %v2723
        %v2740 = vtanh.pop %v2724
        %v2741 = vtanh.pop %v2725
        %v2742 = vtanh.pop %v2726
        %v2743 = vtanh.pop %v2727
        %v2744 = vtanh.pop %v2728
        %v2745 = vtanh.pop %v2729
        %v2746 = vtanh.pop %v2730
        %v2747 = vtanh.pop %v2731
        %v2748 = vadd.f32 %v2732, 1.0
        %v2749 = vadd.f32 %v2733, 1.0
        %v2750 = vadd.f32 %v2734, 1.0
        %v2751 = vadd.f32 %v2735, 1.0
        %v2752 = vadd.f32 %v2736, 1.0
        %v2753 = vadd.f32 %v2737, 1.0
        %v2754 = vadd.f32 %v2738, 1.0
        %v2755 = vadd.f32 %v2739, 1.0
        %v2756 = vadd.f32 %v2740, 1.0
        %v2757 = vadd.f32 %v2741, 1.0
        %v2758 = vadd.f32 %v2742, 1.0
        %v2759 = vadd.f32 %v2743, 1.0
        %v2760 = vadd.f32 %v2744, 1.0
        %v2761 = vadd.f32 %v2745, 1.0
        %v2762 = vadd.f32 %v2746, 1.0
        %v2763 = vadd.f32 %v2747, 1.0
        %v2764 = vmul.f32 %v2636, %v2748
        %v2765 = vmul.f32 %v2637, %v2749
        %v2766 = vmul.f32 %v2638, %v2750
        %v2767 = vmul.f32 %v2639, %v2751
        %v2768 = vmul.f32 %v2640, %v2752
        %v2769 = vmul.f32 %v2641, %v2753
        %v2770 = vmul.f32 %v2642, %v2754
        %v2771 = vmul.f32 %v2643, %v2755
        %v2772 = vmul.f32 %v2644, %v2756
        %v2773 = vmul.f32 %v2645, %v2757
        %v2774 = vmul.f32 %v2646, %v2758
        %v2775 = vmul.f32 %v2647, %v2759
        %v2776 = vmul.f32 %v2648, %v2760
        %v2777 = vmul.f32 %v2649, %v2761
        %v2778 = vmul.f32 %v2650, %v2762
        %v2779 = vmul.f32 %v2651, %v2763
        %v2780 = vpack.c.bf16 %v2766, %v2764
        %v2781 = vpack.c.bf16 %v2767, %v2765
        %v2782 = vpack.c.bf16 %v2770, %v2768
        %v2783 = vpack.c.bf16 %v2771, %v2769
        %v2784 = vpack.c.bf16 %v2774, %v2772
        %v2785 = vpack.c.bf16 %v2775, %v2773
        %v2786 = vpack.c.bf16 %v2778, %v2776
        %v2787 = vpack.c.bf16 %v2779, %v2777
        %v2788 = vld [vmem:[%s404] sm:$0xf]
        %v2789 = vld [vmem:[%s404 + $0x4] sm:$0xf]
        %v2790 = vld [vmem:[%s404 + $0x8] sm:$0xf]
        %v2791 = vld [vmem:[%s404 + $0xc] sm:$0xf]
        %v2792 = vld [vmem:[%s404 + $0x10] sm:$0xf]
        %v2793 = vld [vmem:[%s404 + $0x14] sm:$0xf]
        %v2794 = vld [vmem:[%s404 + $0x18] sm:$0xf]
        %v2795 = vld [vmem:[%s404 + $0x1c] sm:$0xf]
        %v2796 = vld [vmem:[%s404 + $0x20] sm:$0xf]
        %v2797 = vld [vmem:[%s404 + $0x24] sm:$0xf]
        %v2798 = vld [vmem:[%s404 + $0x28] sm:$0xf]
        %v2799 = vld [vmem:[%s404 + $0x2c] sm:$0xf]
        %v2800 = vld [vmem:[%s404 + $0x30] sm:$0xf]
        %v2801 = vld [vmem:[%s404 + $0x34] sm:$0xf]
        %v2802 = vld [vmem:[%s404 + $0x38] sm:$0xf]
        %v2803 = vld [vmem:[%s404 + $0x3c] sm:$0xf]
        %v2804 = vld [vmem:[%s404 + $0x40] sm:$0xf]
        %v2805 = vld [vmem:[%s404 + $0x44] sm:$0xf]
        %v2806 = vld [vmem:[%s404 + $0x48] sm:$0xf]
        %v2807 = vld [vmem:[%s404 + $0x4c] sm:$0xf]
        %v2808 = vld [vmem:[%s404 + $0x50] sm:$0xf]
        %v2809 = vld [vmem:[%s404 + $0x54] sm:$0xf]
        %v2810 = vld [vmem:[%s404 + $0x58] sm:$0xf]
        %v2811 = vld [vmem:[%s404 + $0x5c] sm:$0xf]
        %v2812 = vld [vmem:[%s404 + $0x60] sm:$0xf]
        %v2813 = vld [vmem:[%s404 + $0x64] sm:$0xf]
        %v2814 = vld [vmem:[%s404 + $0x68] sm:$0xf]
        %v2815 = vld [vmem:[%s404 + $0x6c] sm:$0xf]
        %v2816 = vld [vmem:[%s404 + $0x70] sm:$0xf]
        %v2817 = vld [vmem:[%s404 + $0x74] sm:$0xf]
        %v2818 = vld [vmem:[%s404 + $0x78] sm:$0xf]
        %v2819 = vld [vmem:[%s404 + $0x7c] sm:$0xf]
        %v2852 = vunpack.c.l.b16 %v2788
        %v2853 = vunpack.c.l.b16 %v2789
        %v2854 = vunpack.c.l.b16 %v2790
        %v2855 = vunpack.c.l.b16 %v2791
        %v2856 = vunpack.c.l.b16 %v2792
        %v2857 = vunpack.c.l.b16 %v2793
        %v2858 = vunpack.c.l.b16 %v2794
        %v2859 = vunpack.c.l.b16 %v2795
        %v2860 = vunpack.c.l.b16 %v2796
        %v2861 = vunpack.c.l.b16 %v2797
        %v2862 = vunpack.c.l.b16 %v2798
        %v2863 = vunpack.c.l.b16 %v2799
        %v2864 = vunpack.c.l.b16 %v2800
        %v2865 = vunpack.c.l.b16 %v2801
        %v2866 = vunpack.c.l.b16 %v2802
        %v2867 = vunpack.c.l.b16 %v2803
        %v2868 = vunpack.c.l.b16 %v2804
        %v2869 = vunpack.c.l.b16 %v2805
        %v2870 = vunpack.c.l.b16 %v2806
        %v2871 = vunpack.c.l.b16 %v2807
        %v2872 = vunpack.c.l.b16 %v2808
        %v2873 = vunpack.c.l.b16 %v2809
        %v2874 = vunpack.c.l.b16 %v2810
        %v2875 = vunpack.c.l.b16 %v2811
        %v2876 = vunpack.c.l.b16 %v2812
        %v2877 = vunpack.c.l.b16 %v2813
        %v2878 = vunpack.c.l.b16 %v2814
        %v2879 = vunpack.c.l.b16 %v2815
        %v2880 = vunpack.c.l.b16 %v2816
        %v2881 = vunpack.c.l.b16 %v2817
        %v2882 = vunpack.c.l.b16 %v2818
        %v2883 = vunpack.c.l.b16 %v2819
        %v2884 = vpack.c.b16 %v2853, %v2852
        %v2885 = vpack.c.b16 %v2855, %v2854
        %v2886 = vpack.c.b16 %v2857, %v2856
        %v2887 = vpack.c.b16 %v2859, %v2858
        %v2888 = vpack.c.b16 %v2861, %v2860
        %v2889 = vpack.c.b16 %v2863, %v2862
        %v2890 = vpack.c.b16 %v2865, %v2864
        %v2891 = vpack.c.b16 %v2867, %v2866
        %v2892 = vpack.c.b16 %v2869, %v2868
        %v2893 = vpack.c.b16 %v2871, %v2870
        %v2894 = vpack.c.b16 %v2873, %v2872
        %v2895 = vpack.c.b16 %v2875, %v2874
        %v2896 = vpack.c.b16 %v2877, %v2876
        %v2897 = vpack.c.b16 %v2879, %v2878
        %v2898 = vpack.c.b16 %v2881, %v2880
        %v2899 = vpack.c.b16 %v2883, %v2882
        %2916 = vmatprep.subr.bf16.mxu0 0
        %2917 = vmatpush1.bf16.msra.mxu0 %v2884
        %2918 = vmatprep.subr.bf16.mxu0 0
        %2919 = vmatpush1.bf16.msra.mxu0 %v2885
        %2920 = vmatprep.subr.bf16.mxu0 0
        %2921 = vmatpush1.bf16.msra.mxu0 %v2886
        %2922 = vmatprep.subr.bf16.mxu0 0
        %2923 = vmatpush1.bf16.msra.mxu0 %v2887
        %2924 = vmatprep.subr.bf16.mxu0 0
        %2925 = vmatpush1.bf16.msra.mxu0 %v2888
        %2926 = vmatprep.subr.bf16.mxu0 0
        %2927 = vmatpush1.bf16.msra.mxu0 %v2889
        %2928 = vmatprep.subr.bf16.mxu0 0
        %2929 = vmatpush1.bf16.msra.mxu0 %v2890
        %2930 = vmatprep.subr.bf16.mxu0 0
        %2931 = vmatpush1.bf16.msra.mxu0 %v2891
        %2932 = vmatprep.subr.bf16.mxu0 0
        %2933 = vmatpush1.bf16.msra.mxu0 %v2892
        %2934 = vmatprep.subr.bf16.mxu0 0
        %2935 = vmatpush1.bf16.msra.mxu0 %v2893
        %2936 = vmatprep.subr.bf16.mxu0 0
        %2937 = vmatpush1.bf16.msra.mxu0 %v2894
        %2938 = vmatprep.subr.bf16.mxu0 0
        %2939 = vmatpush1.bf16.msra.mxu0 %v2895
        %2940 = vmatprep.subr.bf16.mxu0 0
        %2941 = vmatpush1.bf16.msra.mxu0 %v2896
        %2942 = vmatprep.subr.bf16.mxu0 0
        %2943 = vmatpush1.bf16.msra.mxu0 %v2897
        %2944 = vmatprep.subr.bf16.mxu0 0
        %2945 = vmatpush1.bf16.msra.mxu0 %v2898
        %2946 = vmatprep.subr.bf16.mxu0 0
        %2947 = vmatpush1.bf16.msra.mxu0 %v2899
        %2948 = vmatprep.mubr.bf16.mxu0 %v2781
        %2949 = vmatmul.mubr.bf16.gmra.mrb[0].mxu0 %v2780
        %v2950 = vpop.f32.mrb[0].mxu0
        %v2951 = vadd.f32 0.0, %v2950
        %v2952 = vpop.f32.mrb[0].mxu0
        %v2953 = vpop.f32.mrb[0].mxu0
        %v2954 = vadd.f32 0.0, %v2953
        %v2955 = vpop.f32.mrb[0].mxu0
        %2956 = vmatprep.mubr.bf16.mxu0 %v2783
        %2957 = vmatmul.mubr.bf16.gmra.mrb[0].mxu0 %v2782
        %v2958 = vpop.f32.mrb[0].mxu0
        %v2959 = vadd.f32 0.0, %v2958
        %v2960 = vpop.f32.mrb[0].mxu0
        %v2961 = vpop.f32.mrb[0].mxu0
        %v2962 = vadd.f32 0.0, %v2961
        %v2963 = vpop.f32.mrb[0].mxu0
        %2964 = vmatprep.mubr.bf16.mxu0 %v2785
        %2965 = vmatmul.mubr.bf16.gmra.mrb[0].mxu0 %v2784
        %v2966 = vpop.f32.mrb[0].mxu0
        %v2967 = vadd.f32 0.0, %v2966
        %v2968 = vpop.f32.mrb[0].mxu0
        %v2969 = vpop.f32.mrb[0].mxu0
        %v2970 = vadd.f32 0.0, %v2969
        %v2971 = vpop.f32.mrb[0].mxu0
        %2972 = vmatprep.mubr.bf16.mxu0 %v2787
        %2973 = vmatmul.mubr.bf16.gmra.mrb[0].mxu0 %v2786
        %v2974 = vpop.f32.mrb[0].mxu0
        %v2975 = vadd.f32 0.0, %v2974
        %v2976 = vpop.f32.mrb[0].mxu0
        %v2977 = vpop.f32.mrb[0].mxu0
        %v2978 = vadd.f32 0.0, %v2977
        %v2979 = vpop.f32.mrb[0].mxu0
        %2980 = vdwg.mxu0
        %v2981 = vadd.f32 %v2339, %v2951
        %v2982 = vadd.f32 %v2340, %v2954
        %v2983 = vadd.f32 %v2341, %v2959
        %v2984 = vadd.f32 %v2342, %v2962
        %v2985 = vadd.f32 %v2343, %v2967
        %v2986 = vadd.f32 %v2344, %v2970
        %v2987 = vadd.f32 %v2345, %v2975
        %v2988 = vadd.f32 %v2346, %v2978
        %2989 = vrot.lane.b32.xlu0 %v2337, 64
        %v2990 = vpop.permute.xlu0 %2989
        %v2992 = vadd.f32 %v2981, %v2990
        %v2993 = vadd.f32 %v2982, %v2990
        %v2994 = vadd.f32 %v2983, %v2990
        %v2995 = vadd.f32 %v2984, %v2990
        %v2996 = vadd.f32 %v2985, %v2990
        %v2997 = vadd.f32 %v2986, %v2990
        %v2998 = vadd.f32 %v2987, %v2990
        %v2999 = vadd.f32 %v2988, %v2990
        %3000 = vst.msk [vmem:[#allocation2] sm:$0xff] %vm440, %v2992
        %3001 = vst.msk [vmem:[#allocation2 + $0x8] sm:$0xff] %vm440, %v2993
        %3002 = vst.msk [vmem:[#allocation2 + $0x10] sm:$0xff] %vm440, %v2994
        %3003 = vst.msk [vmem:[#allocation2 + $0x18] sm:$0xff] %vm440, %v2995
        %3004 = vst.msk [vmem:[#allocation2 + $0x20] sm:$0xff] %vm440, %v2996
        %3005 = vst.msk [vmem:[#allocation2 + $0x28] sm:$0xff] %vm440, %v2997
        %3006 = vst.msk [vmem:[#allocation2 + $0x30] sm:$0xff] %vm440, %v2998
        %3007 = vst.msk [vmem:[#allocation2 + $0x38] sm:$0xff] %vm440, %v2999
        %p3008 = scmp.eq.s32.totalorder %s24, 1
        // Predicated region
        $region65: #{tpu_custom_call.1} parent=51 // pred_check
          %p3009 = pneg %p3008
        $region66: #{tpu_custom_call.1} parent=51 // pred_check_branch
          %3011 = sbr.rel (%p3009) target = $region68
        $region67: #{tpu_custom_call.1} parent=51 // pred_region
          %v3012 = vld [vmem:[%s7] sm:$0x1]
          %v3013 = vld [vmem:[%s7 + $0x1] sm:$0x1]
          %v3014 = vsel %vm440, %v2992, 0.0
          %3015 = vadd.xlane.f32.xlu0 %v3014
          %v3016 = vpop.xlane.xlu0 %3015
          %v3017 = vsel %vm440, %v2993, 0.0
          %3018 = vadd.xlane.f32.xlu0 %v3017
          %v3019 = vpop.xlane.xlu0 %3018
          %v3020 = vsel %vm440, %v2994, 0.0
          %3021 = vadd.xlane.f32.xlu0 %v3020
          %v3022 = vpop.xlane.xlu0 %3021
          %v3023 = vsel %vm440, %v2995, 0.0
          %3024 = vadd.xlane.f32.xlu0 %v3023
          %v3025 = vpop.xlane.xlu0 %3024
          %v3026 = vsel %vm440, %v2996, 0.0
          %3027 = vadd.xlane.f32.xlu0 %v3026
          %v3028 = vpop.xlane.xlu0 %3027
          %v3029 = vsel %vm440, %v2997, 0.0
          %3030 = vadd.xlane.f32.xlu0 %v3029
          %v3031 = vpop.xlane.xlu0 %3030
          %v3032 = vsel %vm440, %v2998, 0.0
          %3033 = vadd.xlane.f32.xlu0 %v3032
          %v3034 = vpop.xlane.xlu0 %3033
          %v3035 = vsel %vm440, %v2999, 0.0
          %3036 = vadd.xlane.f32.xlu0 %v3035
          %v3037 = vpop.xlane.xlu0 %3036
          %v3038 = vmul.f32 %v3016, %v465
          %v3039 = vmul.f32 %v3019, %v465
          %v3040 = vmul.f32 %v3022, %v465
          %v3041 = vmul.f32 %v3025, %v465
          %v3042 = vmul.f32 %v3028, %v465
          %v3043 = vmul.f32 %v3031, %v465
          %v3044 = vmul.f32 %v3034, %v465
          %v3045 = vmul.f32 %v3037, %v465
          %v3046 = vsub.f32 %v2992, %v3038
          %v3047 = vsub.f32 %v2993, %v3039
          %v3048 = vsub.f32 %v2994, %v3040
          %v3049 = vsub.f32 %v2995, %v3041
          %v3050 = vsub.f32 %v2996, %v3042
          %v3051 = vsub.f32 %v2997, %v3043
          %v3052 = vsub.f32 %v2998, %v3044
          %v3053 = vsub.f32 %v2999, %v3045
          %v3054 = vmul.f32 %v3046, %v3046
          %v3055 = vmul.f32 %v3047, %v3047
          %v3056 = vmul.f32 %v3048, %v3048
          %v3057 = vmul.f32 %v3049, %v3049
          %v3058 = vmul.f32 %v3050, %v3050
          %v3059 = vmul.f32 %v3051, %v3051
          %v3060 = vmul.f32 %v3052, %v3052
          %v3061 = vmul.f32 %v3053, %v3053
          %v3062 = vsel %vm440, %v3054, 0.0
          %3063 = vadd.xlane.f32.xlu0 %v3062
          %v3064 = vpop.xlane.xlu0 %3063
          %v3065 = vsel %vm440, %v3055, 0.0
          %3066 = vadd.xlane.f32.xlu0 %v3065
          %v3067 = vpop.xlane.xlu0 %3066
          %v3068 = vsel %vm440, %v3056, 0.0
          %3069 = vadd.xlane.f32.xlu0 %v3068
          %v3070 = vpop.xlane.xlu0 %3069
          %v3071 = vsel %vm440, %v3057, 0.0
          %3072 = vadd.xlane.f32.xlu0 %v3071
          %v3073 = vpop.xlane.xlu0 %3072
          %v3074 = vsel %vm440, %v3058, 0.0
          %3075 = vadd.xlane.f32.xlu0 %v3074
          %v3076 = vpop.xlane.xlu0 %3075
          %v3077 = vsel %vm440, %v3059, 0.0
          %3078 = vadd.xlane.f32.xlu0 %v3077
          %v3079 = vpop.xlane.xlu0 %3078
          %v3080 = vsel %vm440, %v3060, 0.0
          %3081 = vadd.xlane.f32.xlu0 %v3080
          %v3082 = vpop.xlane.xlu0 %3081
          %v3083 = vsel %vm440, %v3061, 0.0
          %3084 = vadd.xlane.f32.xlu0 %v3083
          %v3085 = vpop.xlane.xlu0 %3084
          %v3086 = vmul.f32 %v3064, %v465
          %v3087 = vmul.f32 %v3067, %v465
          %v3088 = vmul.f32 %v3070, %v465
          %v3089 = vmul.f32 %v3073, %v465
          %v3090 = vmul.f32 %v3076, %v465
          %v3091 = vmul.f32 %v3079, %v465
          %v3092 = vmul.f32 %v3082, %v465
          %v3093 = vmul.f32 %v3085, %v465
          %v3094 = vadd.f32 %v3086, 1e-05
          %v3095 = vadd.f32 %v3087, 1e-05
          %v3096 = vadd.f32 %v3088, 1e-05
          %v3097 = vadd.f32 %v3089, 1e-05
          %v3098 = vadd.f32 %v3090, 1e-05
          %v3099 = vadd.f32 %v3091, 1e-05
          %v3100 = vadd.f32 %v3092, 1e-05
          %v3101 = vadd.f32 %v3093, 1e-05
          %v3102 = vrsqrt.pop %v3094
          %v3103 = vrsqrt.pop %v3095
          %v3104 = vrsqrt.pop %v3096
          %v3105 = vrsqrt.pop %v3097
          %v3106 = vrsqrt.pop %v3098
          %v3107 = vrsqrt.pop %v3099
          %v3108 = vrsqrt.pop %v3100
          %v3109 = vrsqrt.pop %v3101
          %v3110 = vmul.f32 %v3046, %v3102
          %v3111 = vmul.f32 %v3047, %v3103
          %v3112 = vmul.f32 %v3048, %v3104
          %v3113 = vmul.f32 %v3049, %v3105
          %v3114 = vmul.f32 %v3050, %v3106
          %v3115 = vmul.f32 %v3051, %v3107
          %v3116 = vmul.f32 %v3052, %v3108
          %v3117 = vmul.f32 %v3053, %v3109
          %v3118 = vlaneseq
          %v3119 = vshrl.u32 %v3118, 7
          %v3120 = vsub.s32 0, %v3119
          %v3121 = vrot.slane %v3012, %v3120
          %v3122 = vmul.f32 %v3110, %v3121
          %v3123 = vmul.f32 %v3111, %v3121
          %v3124 = vmul.f32 %v3112, %v3121
          %v3125 = vmul.f32 %v3113, %v3121
          %v3126 = vmul.f32 %v3114, %v3121
          %v3127 = vmul.f32 %v3115, %v3121
          %v3128 = vmul.f32 %v3116, %v3121
          %v3129 = vmul.f32 %v3117, %v3121
          %v3130 = vlaneseq
          %v3131 = vshrl.u32 %v3130, 7
          %v3132 = vsub.s32 0, %v3131
          %v3133 = vrot.slane %v3013, %v3132
          %v3134 = vadd.f32 %v3122, %v3133
          %v3135 = vadd.f32 %v3123, %v3133
          %v3136 = vadd.f32 %v3124, %v3133
          %v3137 = vadd.f32 %v3125, %v3133
          %v3138 = vadd.f32 %v3126, %v3133
          %v3139 = vadd.f32 %v3127, %v3133
          %v3140 = vadd.f32 %v3128, %v3133
          %v3141 = vadd.f32 %v3129, %v3133
          %v3142 = vld [vmem:[%s7 + $0x2] sm:$0x1]
          %v3143 = vld [vmem:[%s7 + $0x3] sm:$0x1]
          %v3144 = vsel %vm440, %v3134, 0.0
          %3145 = vadd.xlane.f32.xlu0 %v3144
          %v3146 = vpop.xlane.xlu0 %3145
          %v3147 = vsel %vm440, %v3135, 0.0
          %3148 = vadd.xlane.f32.xlu0 %v3147
          %v3149 = vpop.xlane.xlu0 %3148
          %v3150 = vsel %vm440, %v3136, 0.0
          %3151 = vadd.xlane.f32.xlu0 %v3150
          %v3152 = vpop.xlane.xlu0 %3151
          %v3153 = vsel %vm440, %v3137, 0.0
          %3154 = vadd.xlane.f32.xlu0 %v3153
          %v3155 = vpop.xlane.xlu0 %3154
          %v3156 = vsel %vm440, %v3138, 0.0
          %3157 = vadd.xlane.f32.xlu0 %v3156
          %v3158 = vpop.xlane.xlu0 %3157
          %v3159 = vsel %vm440, %v3139, 0.0
          %3160 = vadd.xlane.f32.xlu0 %v3159
          %v3161 = vpop.xlane.xlu0 %3160
          %v3162 = vsel %vm440, %v3140, 0.0
          %3163 = vadd.xlane.f32.xlu0 %v3162
          %v3164 = vpop.xlane.xlu0 %3163
          %v3165 = vsel %vm440, %v3141, 0.0
          %3166 = vadd.xlane.f32.xlu0 %v3165
          %v3167 = vpop.xlane.xlu0 %3166
          %v3168 = vmul.f32 %v3146, %v465
          %v3169 = vmul.f32 %v3149, %v465
          %v3170 = vmul.f32 %v3152, %v465
          %v3171 = vmul.f32 %v3155, %v465
          %v3172 = vmul.f32 %v3158, %v465
          %v3173 = vmul.f32 %v3161, %v465
          %v3174 = vmul.f32 %v3164, %v465
          %v3175 = vmul.f32 %v3167, %v465
          %v3176 = vsub.f32 %v3134, %v3168
          %v3177 = vsub.f32 %v3135, %v3169
          %v3178 = vsub.f32 %v3136, %v3170
          %v3179 = vsub.f32 %v3137, %v3171
          %v3180 = vsub.f32 %v3138, %v3172
          %v3181 = vsub.f32 %v3139, %v3173
          %v3182 = vsub.f32 %v3140, %v3174
          %v3183 = vsub.f32 %v3141, %v3175
          %v3184 = vmul.f32 %v3176, %v3176
          %v3185 = vmul.f32 %v3177, %v3177
          %v3186 = vmul.f32 %v3178, %v3178
          %v3187 = vmul.f32 %v3179, %v3179
          %v3188 = vmul.f32 %v3180, %v3180
          %v3189 = vmul.f32 %v3181, %v3181
          %v3190 = vmul.f32 %v3182, %v3182
          %v3191 = vmul.f32 %v3183, %v3183
          %v3192 = vsel %vm440, %v3184, 0.0
          %3193 = vadd.xlane.f32.xlu0 %v3192
          %v3194 = vpop.xlane.xlu0 %3193
          %v3195 = vsel %vm440, %v3185, 0.0
          %3196 = vadd.xlane.f32.xlu0 %v3195
          %v3197 = vpop.xlane.xlu0 %3196
          %v3198 = vsel %vm440, %v3186, 0.0
          %3199 = vadd.xlane.f32.xlu0 %v3198
          %v3200 = vpop.xlane.xlu0 %3199
          %v3201 = vsel %vm440, %v3187, 0.0
          %3202 = vadd.xlane.f32.xlu0 %v3201
          %v3203 = vpop.xlane.xlu0 %3202
          %v3204 = vsel %vm440, %v3188, 0.0
          %3205 = vadd.xlane.f32.xlu0 %v3204
          %v3206 = vpop.xlane.xlu0 %3205
          %v3207 = vsel %vm440, %v3189, 0.0
          %3208 = vadd.xlane.f32.xlu0 %v3207
          %v3209 = vpop.xlane.xlu0 %3208
          %v3210 = vsel %vm440, %v3190, 0.0
          %3211 = vadd.xlane.f32.xlu0 %v3210
          %v3212 = vpop.xlane.xlu0 %3211
          %v3213 = vsel %vm440, %v3191, 0.0
          %3214 = vadd.xlane.f32.xlu0 %v3213
          %v3215 = vpop.xlane.xlu0 %3214
          %v3216 = vmul.f32 %v3194, %v465
          %v3217 = vmul.f32 %v3197, %v465
          %v3218 = vmul.f32 %v3200, %v465
          %v3219 = vmul.f32 %v3203, %v465
          %v3220 = vmul.f32 %v3206, %v465
          %v3221 = vmul.f32 %v3209, %v465
          %v3222 = vmul.f32 %v3212, %v465
          %v3223 = vmul.f32 %v3215, %v465
          %v3224 = vadd.f32 %v3216, 1e-05
          %v3225 = vadd.f32 %v3217, 1e-05
          %v3226 = vadd.f32 %v3218, 1e-05
          %v3227 = vadd.f32 %v3219, 1e-05
          %v3228 = vadd.f32 %v3220, 1e-05
          %v3229 = vadd.f32 %v3221, 1e-05
          %v3230 = vadd.f32 %v3222, 1e-05
          %v3231 = vadd.f32 %v3223, 1e-05
          %v3232 = vrsqrt.pop %v3224
          %v3233 = vrsqrt.pop %v3225
          %v3234 = vrsqrt.pop %v3226
          %v3235 = vrsqrt.pop %v3227
          %v3236 = vrsqrt.pop %v3228
          %v3237 = vrsqrt.pop %v3229
          %v3238 = vrsqrt.pop %v3230
          %v3239 = vrsqrt.pop %v3231
          %v3240 = vmul.f32 %v3176, %v3232
          %v3241 = vmul.f32 %v3177, %v3233
          %v3242 = vmul.f32 %v3178, %v3234
          %v3243 = vmul.f32 %v3179, %v3235
          %v3244 = vmul.f32 %v3180, %v3236
          %v3245 = vmul.f32 %v3181, %v3237
          %v3246 = vmul.f32 %v3182, %v3238
          %v3247 = vmul.f32 %v3183, %v3239
          %v3248 = vlaneseq
          %v3249 = vshrl.u32 %v3248, 7
          %v3250 = vsub.s32 0, %v3249
          %v3251 = vrot.slane %v3142, %v3250
          %v3252 = vmul.f32 %v3240, %v3251
          %v3253 = vmul.f32 %v3241, %v3251
          %v3254 = vmul.f32 %v3242, %v3251
          %v3255 = vmul.f32 %v3243, %v3251
          %v3256 = vmul.f32 %v3244, %v3251
          %v3257 = vmul.f32 %v3245, %v3251
          %v3258 = vmul.f32 %v3246, %v3251
          %v3259 = vmul.f32 %v3247, %v3251
          %v3260 = vlaneseq
          %v3261 = vshrl.u32 %v3260, 7
          %v3262 = vsub.s32 0, %v3261
          %v3263 = vrot.slane %v3143, %v3262
          %v3264 = vadd.f32 %v3252, %v3263
          %v3265 = vadd.f32 %v3253, %v3263
          %v3266 = vadd.f32 %v3254, %v3263
          %v3267 = vadd.f32 %v3255, %v3263
          %v3268 = vadd.f32 %v3256, %v3263
          %v3269 = vadd.f32 %v3257, %v3263
          %v3270 = vadd.f32 %v3258, %v3263
          %v3271 = vadd.f32 %v3259, %v3263
          %3272 = vst.msk [vmem:[#allocation9] sm:$0xff] %vm440, %v3264
          %3273 = vst.msk [vmem:[#allocation9 + $0x8] sm:$0xff] %vm440, %v3265
          %3274 = vst.msk [vmem:[#allocation9 + $0x10] sm:$0xff] %vm440, %v3266
          %3275 = vst.msk [vmem:[#allocation9 + $0x18] sm:$0xff] %vm440, %v3267
          %3276 = vst.msk [vmem:[#allocation9 + $0x20] sm:$0xff] %vm440, %v3268
          %3277 = vst.msk [vmem:[#allocation9 + $0x28] sm:$0xff] %vm440, %v3269
          %3278 = vst.msk [vmem:[#allocation9 + $0x30] sm:$0xff] %vm440, %v3270
          %3279 = vst.msk [vmem:[#allocation9 + $0x38] sm:$0xff] %vm440, %v3271
        $region68: #{tpu_custom_call.1} parent=51 // pred_fallthru
          _
        // Predicated region
        $region69: #{tpu_custom_call.1} parent=51 // pred_check
          %p3280 = pneg %p230
        $region70: #{tpu_custom_call.1} parent=51 // pred_check_branch
          %3282 = sbr.rel (%p3280) target = $region72
        $region71: #{tpu_custom_call.1} parent=51 // pred_region
          %s3284 = ssub.s32 1024, 1024
          %3285 = vsyncadd [#allocation6], %s3284
          %s3286 = sshll.u32 [#allocation9], 4
          %s3287 = int_to_ptr.vmem [resolvable:$true] %s3286
          %3292 = dma.vmem_to_hbm [thread:$0]  %s3287, 1024, %s8, [#allocation6], 128, 128, 8
        $region72: #{tpu_custom_call.1} parent=51 // pred_fallthru
          _
        // Predicated region
        $region73: #{tpu_custom_call.1} parent=51 // pred_check
          %p3293 = pneg %p230
        $region74: #{tpu_custom_call.1} parent=51 // pred_check_branch
          %3295 = sbr.rel (%p3293) target = $region76
        $region75: #{tpu_custom_call.1} parent=51 // pred_region
          %3296 = dma.done [#allocation6], 1024
        $region76: #{tpu_custom_call.1} parent=51 // pred_fallthru
          _
      $region52: #{tpu_custom_call.1} parent=5 // pred_fallthru
        _
      %p3297 = scmp.le.s32.totalorder 2, %s19
      // Predicated region
      $region77: #{tpu_custom_call.1} parent=5 // pred_check
        %p3298 = pneg %p3297
      $region78: #{tpu_custom_call.1} parent=5 // pred_check_branch
        %3300 = sbr.rel (%p3298) target = $region80
      $region79: #{tpu_custom_call.1} parent=5 // pred_region
        %s3301 = ssub.s32 %s19, 2
      $region80: #{tpu_custom_call.1} parent=5 // pred_fallthru
        _
    $region6: #{tpu_custom_call.1} parent=1 // loop_footer
      %s23 = sadd.s32 1, %s19
    $region7: #{tpu_custom_call.1} parent=1 // loop_footer_branch
      %18 = sbr.rel target = $region3
    $region8: #{tpu_custom_call.1} parent=1 // loop_exit
      _
    %3302 = vsyncpa [#allocation5], 1
    %s3303 = scalar_lea.sflag [#allocation5], 1
    %3304 = vsyncpa %s3303, 1
    %3305 = vsyncpa [#allocation8], 1
    %s3306 = scalar_lea.sflag [#allocation8], 1
    %3307 = vsyncpa %s3306, 1
    %3308 = vsyncpa [#allocation6], 1
    %s3309 = scalar_lea.sflag [#allocation6], 1
    %3310 = vsyncpa %s3309, 1

</llo_original>
